<compile_context>
chip_gen: v5e
topology: v5e:2x2
jax: 0.10.0
libtpu: 0.0.40
codegen_flags: <defaults>
</compile_context>

<pallas_src>
import functools

import jax
import jax.numpy as jnp
from jax.experimental import pallas as pl
from jax.experimental.pallas import tpu as pltpu

_LANES = 128


def _mlp_kernel(x_ref,
                w1_ref, b1_ref,
                w2_ref, b2_ref,
                w3_ref, b3_ref,
                w4_ref, b4_ref,
                o_ref, *, mxu_bf16):
    def mm(w, h):
        if mxu_bf16:
            # bf16 operands, f32 accumulation (v6e/v7x MXU native path).
            return jnp.dot(w.astype(jnp.bfloat16), h.astype(jnp.bfloat16),
                           preferred_element_type=jnp.float32)
        return jnp.dot(w, h, preferred_element_type=jnp.float32,
                       precision=jax.lax.Precision.HIGHEST)

    x = x_ref[...]                        # (2, blk)  batch on lanes
    x0 = x[0:1, :]                        # hoisted once per tile
    x1 = x[1:2, :]
    w1 = w1_ref[...]                      # (16, 2)

    # Layer 1 (in_features=2): VPU broadcast-FMA, skip the MXU entirely.
    h = w1[:, 0:1] * x0 + w1[:, 1:2] * x1 + b1_ref[...]
    h = jnp.maximum(h, 0.0)               # (16, blk)

    # Layers 2-3 on the MXU: y = W @ h with W in native (out, in) layout.
    h = jnp.maximum(mm(w2_ref[...], h) + b2_ref[...], 0.0)    # (32, blk)
    h = jnp.maximum(mm(w3_ref[...], h) + b3_ref[...], 0.0)    # (128, blk)

    # Layer 4: (1,128) @ (128, blk) -> (1, blk); scalar bias read from SMEM.
    o_ref[...] = (mm(w4_ref[...], h) + b4_ref[0, 0]).astype(o_ref.dtype)


def _hw_info():
    """(vmem_capacity_bytes, has_two_tensorcores) with safe fallbacks."""
    vmem_cap = 32 << 20                    # conservative fallback
    try:
        vmem_cap = int(pltpu.get_tpu_info().vmem_capacity_bytes)
    except Exception:
        pass
    two_tc = False
    try:
        kind = str(getattr(jax.devices()[0], "device_kind", "")).lower()
        # v7x has 2 TensorCores per chip; v5e/v6e have 1.
        two_tc = ("v7" in kind) or ("7x" in kind)
    except Exception:
        pass
    return vmem_cap, two_tc


def _pick_tile(batch, block_b, vmem_cap, two_tc):
    """Lane-aligned batch tile, grid size, and an explicit VMEM limit."""
    b_lane = pl.cdiv(batch, _LANES) * _LANES
    # f32 bytes per batch column: x(2) + out(1) double-buffered, plus
    # h1/h2/h3 activations (16+32+128), plus ~25% compiler-scratch headroom.
    bytes_per_col = int((2 * (2 + 1) + 16 + 32 + 128) * 4 * 1.25)     # ~910 B
    blk_cap = max(_LANES,
                  ((int(vmem_cap * 0.5) // bytes_per_col) // _LANES) * _LANES)
    blk = max(_LANES, (min(block_b, b_lane, blk_cap) // _LANES) * _LANES)
    grid = pl.cdiv(batch, blk)

    if two_tc and grid == 1 and b_lane >= 2 * _LANES:
        # v7x only: exactly two ~equal lane-aligned blocks, one per TensorCore.
        blk = max(_LANES, pl.cdiv(b_lane // 2, _LANES) * _LANES)
        grid = pl.cdiv(batch, blk)

    vmem_limit = int(min(vmem_cap, max(32 << 20, 2 * bytes_per_col * blk)))
    return blk, grid, vmem_limit


@functools.partial(jax.jit, static_argnames=("block_b", "mxu_bf16"))
def mynetwork_forward(x, params, *, block_b=16384, mxu_bf16=False):
    """Pallas forward pass of MyNetwork.

    x: (B, 2) float32. params: dict with w{n}: (out, in), b{n}: (out, 1).
    Returns (B, 1) float32, matching the PyTorch module.
    """
    B = x.shape[0]
    vmem_cap, two_tc = _hw_info()
    blk, grid, vmem_limit = _pick_tile(B, block_b, vmem_cap, two_tc)
    n_cols = grid * blk                               # >= B; tail is discarded

    # Batch-on-lanes layout; no jnp.pad — the last input block reads past B,
    # those columns are independent garbage and are sliced off below.
    xt = x.T                                          # (2, B)

    w1, b1 = params["w1"], params["b1"]               # (16, 2),   (16, 1)
    w2, b2 = params["w2"], params["b2"]               # (32, 16),  (32, 1)
    w3, b3 = params["w3"], params["b3"]               # (128, 32), (128, 1)
    w4, b4 = params["w4"], params["b4"]               # (1, 128),  (1, 1)

    def full_spec(shape):                             # whole tensor every step;
        return pl.BlockSpec(shape, lambda i: (0, 0))  # constant index => no re-DMA

    out_t = pl.pallas_call(
        functools.partial(_mlp_kernel, mxu_bf16=mxu_bf16),
        out_shape=jax.ShapeDtypeStruct((1, n_cols), jnp.float32),
        grid_spec=pltpu.PrefetchScalarGridSpec(
            num_scalar_prefetch=0,
            grid=(grid,),
            in_specs=[
                pl.BlockSpec((2, blk), lambda i: (0, i)),           # x tile
                full_spec(w1.shape), full_spec(b1.shape),
                full_spec(w2.shape), full_spec(b2.shape),
                full_spec(w3.shape), full_spec(b3.shape),
                full_spec(w4.shape),
                pl.BlockSpec(memory_space=pltpu.MemorySpace.SMEM),  # b4 scalar
            ],
            out_specs=pl.BlockSpec((1, blk), lambda i: (0, i)),     # lane-dense out
        ),
        compiler_params=pltpu.CompilerParams(
            dimension_semantics=("parallel",),
            vmem_limit_bytes=vmem_limit),
    )(xt, w1, b1, w2, b2, w3, b3, w4, b4)

    return out_t.T[:B]                                # (B, 1)


def init_params(key):
    """PyTorch-style Linear init; weights kept in native (out, in) layout."""
    sizes = [(2, 16), (16, 32), (32, 128), (128, 1)]
    params = {}
    for n, (fan_in, fan_out) in enumerate(sizes, start=1):
        key, kw, kb = jax.random.split(key, 3)
        bound = fan_in ** -0.5
        params[f"w{n}"] = jax.random.uniform(
            kw, (fan_out, fan_in), jnp.float32, -bound, bound)
        params[f"b{n}"] = jax.random.uniform(
            kb, (fan_out, 1), jnp.float32, -bound, bound)
    return params


def reference_forward(x, params):
    hp = jax.lax.Precision.HIGHEST
    h = jnp.maximum(jnp.dot(x, params["w1"].T, precision=hp) + params["b1"].T, 0.0)
    h = jnp.maximum(jnp.dot(h, params["w2"].T, precision=hp) + params["b2"].T, 0.0)
    h = jnp.maximum(jnp.dot(h, params["w3"].T, precision=hp) + params["b3"].T, 0.0)
    return jnp.dot(h, params["w4"].T, precision=hp) + params["b4"].T


if __name__ == "__main__":
    key = jax.random.PRNGKey(0)
    kx, kp = jax.random.split(key)

    B = 300                     # ragged batch: exercises partial-block handling
    x = jax.random.normal(kx, (B, 2), jnp.float32)
    params = init_params(kp)

    out = mynetwork_forward(x, params)
    out = jax.block_until_ready(out)

    ref = reference_forward(x, params)
    assert out.shape == (B, 1), out.shape
    assert jnp.allclose(out, ref, atol=1e-5, rtol=1e-5), "mismatch vs reference"

    print("KERNEL_OK")
</pallas_src>

<mosaic_0001>
module attributes {stable_mosaic.version = 11 : i64} {
  func.func @_mlp_kernel(%arg0: i32, %arg1: memref<2x384xf32, #tpu.memory_space<vmem>>, %arg2: memref<16x2xf32, #tpu.memory_space<vmem>>, %arg3: memref<16x1xf32, #tpu.memory_space<vmem>>, %arg4: memref<32x16xf32, #tpu.memory_space<vmem>>, %arg5: memref<32x1xf32, #tpu.memory_space<vmem>>, %arg6: memref<128x32xf32, #tpu.memory_space<vmem>>, %arg7: memref<128x1xf32, #tpu.memory_space<vmem>>, %arg8: memref<1x128xf32, #tpu.memory_space<vmem>>, %arg9: memref<1x1xf32, #tpu.memory_space<smem>>, %arg10: memref<1x384xf32, #tpu.memory_space<vmem>>) attributes {dimension_semantics = [#tpu.dimension_semantics<parallel>], iteration_bounds = array<i64: 1>, scalar_prefetch = 0 : i64, scratch_operands = 0 : i64, tpu.core_type = #tpu.core_type<tc>, window_params = [{transform_indices = @transform_0, window_bounds = array<i64: 2, 384>}, {pipeline_mode = #tpu.pipeline_mode<synchronous>, transform_indices = @transform_1, window_bounds = array<i64: 16, 2>}, {pipeline_mode = #tpu.pipeline_mode<synchronous>, transform_indices = @transform_2, window_bounds = array<i64: 16, 1>}, {pipeline_mode = #tpu.pipeline_mode<synchronous>, transform_indices = @transform_3, window_bounds = array<i64: 32, 16>}, {pipeline_mode = #tpu.pipeline_mode<synchronous>, transform_indices = @transform_4, window_bounds = array<i64: 32, 1>}, {pipeline_mode = #tpu.pipeline_mode<synchronous>, transform_indices = @transform_5, window_bounds = array<i64: 128, 32>}, {pipeline_mode = #tpu.pipeline_mode<synchronous>, transform_indices = @transform_6, window_bounds = array<i64: 128, 1>}, {pipeline_mode = #tpu.pipeline_mode<synchronous>, transform_indices = @transform_7, window_bounds = array<i64: 1, 128>}, {transform_indices = @transform_8, window_bounds = array<i64: 1, 1>}, {transform_indices = @transform_9, window_bounds = array<i64: 1, 384>}]} {
    %c0 = arith.constant 0 : index
    %c0_0 = arith.constant 0 : index
    %0 = vector.load %arg1[%c0, %c0_0] : memref<2x384xf32, #tpu.memory_space<vmem>>, vector<2x384xf32>
    %1 = vector.extract_strided_slice %0 {offsets = [0, 0], sizes = [1, 384], strides = [1, 1]} : vector<2x384xf32> to vector<1x384xf32>
    %2 = vector.extract_strided_slice %0 {offsets = [1, 0], sizes = [1, 384], strides = [1, 1]} : vector<2x384xf32> to vector<1x384xf32>
    %c0_1 = arith.constant 0 : index
    %c0_2 = arith.constant 0 : index
    %3 = vector.load %arg2[%c0_1, %c0_2] : memref<16x2xf32, #tpu.memory_space<vmem>>, vector<16x2xf32>
    %4 = vector.extract_strided_slice %3 {offsets = [0, 0], sizes = [16, 1], strides = [1, 1]} : vector<16x2xf32> to vector<16x1xf32>
    %5 = vector.broadcast %4 : vector<16x1xf32> to vector<16x384xf32>
    %6 = vector.broadcast %1 : vector<1x384xf32> to vector<16x384xf32>
    %7 = arith.mulf %5, %6 : vector<16x384xf32>
    %8 = vector.extract_strided_slice %3 {offsets = [0, 1], sizes = [16, 1], strides = [1, 1]} : vector<16x2xf32> to vector<16x1xf32>
    %9 = vector.broadcast %8 : vector<16x1xf32> to vector<16x384xf32>
    %10 = vector.broadcast %2 : vector<1x384xf32> to vector<16x384xf32>
    %11 = arith.mulf %9, %10 : vector<16x384xf32>
    %12 = arith.addf %7, %11 : vector<16x384xf32>
    %c0_3 = arith.constant 0 : index
    %c0_4 = arith.constant 0 : index
    %13 = vector.load %arg3[%c0_3, %c0_4] : memref<16x1xf32, #tpu.memory_space<vmem>>, vector<16x1xf32>
    %14 = vector.broadcast %13 : vector<16x1xf32> to vector<16x384xf32>
    %15 = arith.addf %12, %14 : vector<16x384xf32>
    %cst = arith.constant 0.000000e+00 : f32
    %16 = vector.broadcast %cst : f32 to vector<16x384xf32>
    %17 = arith.maximumf %15, %16 : vector<16x384xf32>
    %c0_5 = arith.constant 0 : index
    %c0_6 = arith.constant 0 : index
    %18 = vector.load %arg4[%c0_5, %c0_6] : memref<32x16xf32, #tpu.memory_space<vmem>>, vector<32x16xf32>
    %cst_7 = arith.constant dense<0.000000e+00> : vector<32x384xf32>
    %19 = tpu.matmul %18, %17, %cst_7 {dimension_numbers = #tpu.dot_dimension_numbers<[1], [0], [0], [1], [0, 0, 1, 1], [], []>, precision = #tpu.contract_precision<fp32>} : vector<32x16xf32>, vector<16x384xf32>, vector<32x384xf32> -> vector<32x384xf32>
    %c0_8 = arith.constant 0 : index
    %c0_9 = arith.constant 0 : index
    %20 = vector.load %arg5[%c0_8, %c0_9] : memref<32x1xf32, #tpu.memory_space<vmem>>, vector<32x1xf32>
    %21 = vector.broadcast %20 : vector<32x1xf32> to vector<32x384xf32>
    %22 = arith.addf %19, %21 : vector<32x384xf32>
    %cst_10 = arith.constant 0.000000e+00 : f32
    %23 = vector.broadcast %cst_10 : f32 to vector<32x384xf32>
    %24 = arith.maximumf %22, %23 : vector<32x384xf32>
    %c0_11 = arith.constant 0 : index
    %c0_12 = arith.constant 0 : index
    %25 = vector.load %arg6[%c0_11, %c0_12] : memref<128x32xf32, #tpu.memory_space<vmem>>, vector<128x32xf32>
    %cst_13 = arith.constant dense<0.000000e+00> : vector<128x384xf32>
    %26 = tpu.matmul %25, %24, %cst_13 {dimension_numbers = #tpu.dot_dimension_numbers<[1], [0], [0], [1], [0, 0, 1, 1], [], []>, precision = #tpu.contract_precision<fp32>} : vector<128x32xf32>, vector<32x384xf32>, vector<128x384xf32> -> vector<128x384xf32>
    %c0_14 = arith.constant 0 : index
    %c0_15 = arith.constant 0 : index
    %27 = vector.load %arg7[%c0_14, %c0_15] : memref<128x1xf32, #tpu.memory_space<vmem>>, vector<128x1xf32>
    %28 = vector.broadcast %27 : vector<128x1xf32> to vector<128x384xf32>
    %29 = arith.addf %26, %28 : vector<128x384xf32>
    %cst_16 = arith.constant 0.000000e+00 : f32
    %30 = vector.broadcast %cst_16 : f32 to vector<128x384xf32>
    %31 = arith.maximumf %29, %30 : vector<128x384xf32>
    %c0_17 = arith.constant 0 : index
    %c0_18 = arith.constant 0 : index
    %32 = vector.load %arg8[%c0_17, %c0_18] : memref<1x128xf32, #tpu.memory_space<vmem>>, vector<1x128xf32>
    %cst_19 = arith.constant dense<0.000000e+00> : vector<1x384xf32>
    %33 = tpu.matmul %32, %31, %cst_19 {dimension_numbers = #tpu.dot_dimension_numbers<[1], [0], [0], [1], [0, 0, 1, 1], [], []>, precision = #tpu.contract_precision<fp32>} : vector<1x128xf32>, vector<128x384xf32>, vector<1x384xf32> -> vector<1x384xf32>
    %c0_20 = arith.constant 0 : index
    %c0_21 = arith.constant 0 : index
    %34 = memref.load %arg9[%c0_20, %c0_21] : memref<1x1xf32, #tpu.memory_space<smem>>
    %35 = vector.broadcast %34 : f32 to vector<1x384xf32>
    %36 = arith.addf %33, %35 : vector<1x384xf32>
    %c0_22 = arith.constant 0 : index
    %c0_23 = arith.constant 0 : index
    %37 = vector.load %arg10[%c0_22, %c0_23] : memref<1x384xf32, #tpu.memory_space<vmem>>, vector<1x384xf32>
    tpu.vector_store %arg10[%c0_22, %c0_23], %36 {strides = array<i32>} : memref<1x384xf32, #tpu.memory_space<vmem>>, vector<1x384xf32>,
    return
  }
  func.func @transform_0(%arg0: i32) -> (i32, i32) {
    %c0_i32 = arith.constant 0 : i32
    %c0_i32_0 = arith.constant 0 : i32
    return %c0_i32, %arg0 : i32, i32
  }
  func.func @transform_1(%arg0: i32) -> (i32, i32) {
    %c0_i32 = arith.constant 0 : i32
    %c0_i32_0 = arith.constant 0 : i32
    %c0_i32_1 = arith.constant 0 : i32
    return %c0_i32, %c0_i32_0 : i32, i32
  }
  func.func @transform_2(%arg0: i32) -> (i32, i32) {
    %c0_i32 = arith.constant 0 : i32
    %c0_i32_0 = arith.constant 0 : i32
    %c0_i32_1 = arith.constant 0 : i32
    return %c0_i32, %c0_i32_0 : i32, i32
  }
  func.func @transform_3(%arg0: i32) -> (i32, i32) {
    %c0_i32 = arith.constant 0 : i32
    %c0_i32_0 = arith.constant 0 : i32
    %c0_i32_1 = arith.constant 0 : i32
    return %c0_i32, %c0_i32_0 : i32, i32
  }
  func.func @transform_4(%arg0: i32) -> (i32, i32) {
    %c0_i32 = arith.constant 0 : i32
    %c0_i32_0 = arith.constant 0 : i32
    %c0_i32_1 = arith.constant 0 : i32
    return %c0_i32, %c0_i32_0 : i32, i32
  }
  func.func @transform_5(%arg0: i32) -> (i32, i32) {
    %c0_i32 = arith.constant 0 : i32
    %c0_i32_0 = arith.constant 0 : i32
    %c0_i32_1 = arith.constant 0 : i32
    return %c0_i32, %c0_i32_0 : i32, i32
  }
  func.func @transform_6(%arg0: i32) -> (i32, i32) {
    %c0_i32 = arith.constant 0 : i32
    %c0_i32_0 = arith.constant 0 : i32
    %c0_i32_1 = arith.constant 0 : i32
    return %c0_i32, %c0_i32_0 : i32, i32
  }
  func.func @transform_7(%arg0: i32) -> (i32, i32) {
    %c0_i32 = arith.constant 0 : i32
    %c0_i32_0 = arith.constant 0 : i32
    %c0_i32_1 = arith.constant 0 : i32
    return %c0_i32, %c0_i32_0 : i32, i32
  }
  func.func @transform_8(%arg0: i32) -> (i32, i32) {
    %c0_i32 = arith.constant 0 : i32
    %c0_i32_0 = arith.constant 0 : i32
    %c0_i32_1 = arith.constant 0 : i32
    return %c0_i32, %c0_i32_0 : i32, i32
  }
  func.func @transform_9(%arg0: i32) -> (i32, i32) {
    %c0_i32 = arith.constant 0 : i32
    %c0_i32_0 = arith.constant 0 : i32
    return %c0_i32, %arg0 : i32, i32
  }
}

</mosaic_0001>

<llo_original>
// kernel: mynetwork_forward.1
$region0: #{mynetwork_forward.1}
  #allocation0 [shape = 'u32[]', space=smem, size = 0x4, offset = 0x4, fixed_abs, tag = 'smem constant byte address 0x4 - core index']
  #allocation1 [shape = 'u32[72,128]{1,0:T(1,128)}', space=vmem, size = 0x9000, scoped, tag = 'internal scratch']
  #allocation2 [shape = 'f32[1,1]{1,0:T(1,128)S(6)}', space=smem, size = 0x200, scoped, tag = 'scoped memory for mynetwork_forward.1']
  %s0 = inlined_call_operand.vmem [shape: f32[2,300], index: 0, kind: input, shape index: {}]
  %s1 = inlined_call_operand.vmem [shape: f32[16,2], index: 1, kind: input, shape index: {}]
  %s2 = inlined_call_operand.vmem [shape: f32[16,1], index: 2, kind: input, shape index: {}]
  %s3 = inlined_call_operand.vmem [shape: f32[32,16], index: 3, kind: input, shape index: {}]
  %s4 = inlined_call_operand.vmem [shape: f32[32,1], index: 4, kind: input, shape index: {}]
  %s5 = inlined_call_operand.vmem [shape: f32[128,32], index: 5, kind: input, shape index: {}]
  %s6 = inlined_call_operand.vmem [shape: f32[128,1], index: 6, kind: input, shape index: {}]
  %s7 = inlined_call_operand.vmem [shape: f32[1,128], index: 7, kind: input, shape index: {}]
  %s8 = inlined_call_operand.<no memory space> [shape: f32[1,1], index: 8, kind: input, shape index: {}]
  %s9 = inlined_call_operand.vmem [shape: f32[1,384], index: 9, kind: output, shape index: {}]
  %s10 = sld [smem:[#allocation0]]
  $region46: #{mynetwork_forward.1} parent=0
    _
  %s12 = ssub.s32 1, %s10
  %s13 = scalar_select 0, %s12, %s10
  %14 = sst [smem:[#allocation2]] %s8
  // Predicated region
  $region2: #{mynetwork_forward.1} parent=0 // pred_check
    _
  $region3: #{mynetwork_forward.1} parent=0 // pred_check_branch
    %16 = sbr.rel (0) target = $region5
  $region4: #{mynetwork_forward.1} parent=0 // pred_region
    _
  $region5: #{mynetwork_forward.1} parent=0 // pred_fallthru
    _
  // Predicated region
  $region6: #{mynetwork_forward.1} parent=0 // pred_check
    _
  $region7: #{mynetwork_forward.1} parent=0 // pred_check_branch
    %18 = sbr.rel (0) target = $region9
  $region8: #{mynetwork_forward.1} parent=0 // pred_region
    _
  $region9: #{mynetwork_forward.1} parent=0 // pred_fallthru
    _
  // Predicated region
  $region10: #{mynetwork_forward.1} parent=0 // pred_check
    _
  $region11: #{mynetwork_forward.1} parent=0 // pred_check_branch
    %20 = sbr.rel (0) target = $region13
  $region12: #{mynetwork_forward.1} parent=0 // pred_region
    _
  $region13: #{mynetwork_forward.1} parent=0 // pred_fallthru
    _
  // Predicated region
  $region14: #{mynetwork_forward.1} parent=0 // pred_check
    _
  $region15: #{mynetwork_forward.1} parent=0 // pred_check_branch
    %22 = sbr.rel (0) target = $region17
  $region16: #{mynetwork_forward.1} parent=0 // pred_region
    _
  $region17: #{mynetwork_forward.1} parent=0 // pred_fallthru
    _
  // Predicated region
  $region18: #{mynetwork_forward.1} parent=0 // pred_check
    _
  $region19: #{mynetwork_forward.1} parent=0 // pred_check_branch
    %24 = sbr.rel (0) target = $region21
  $region20: #{mynetwork_forward.1} parent=0 // pred_region
    _
  $region21: #{mynetwork_forward.1} parent=0 // pred_fallthru
    _
  // Predicated region
  $region22: #{mynetwork_forward.1} parent=0 // pred_check
    _
  $region23: #{mynetwork_forward.1} parent=0 // pred_check_branch
    %26 = sbr.rel (0) target = $region25
  $region24: #{mynetwork_forward.1} parent=0 // pred_region
    _
  $region25: #{mynetwork_forward.1} parent=0 // pred_fallthru
    _
  // Predicated region
  $region26: #{mynetwork_forward.1} parent=0 // pred_check
    _
  $region27: #{mynetwork_forward.1} parent=0 // pred_check_branch
    %28 = sbr.rel (0) target = $region29
  $region28: #{mynetwork_forward.1} parent=0 // pred_region
    _
  $region29: #{mynetwork_forward.1} parent=0 // pred_fallthru
    _
  // Predicated region
  $region30: #{mynetwork_forward.1} parent=0 // pred_check
    _
  $region31: #{mynetwork_forward.1} parent=0 // pred_check_branch
    %30 = sbr.rel (0) target = $region33
  $region32: #{mynetwork_forward.1} parent=0 // pred_region
    _
  $region33: #{mynetwork_forward.1} parent=0 // pred_fallthru
    _
  // Predicated region
  $region34: #{mynetwork_forward.1} parent=0 // pred_check
    _
  $region35: #{mynetwork_forward.1} parent=0 // pred_check_branch
    %32 = sbr.rel (0) target = $region37
  $region36: #{mynetwork_forward.1} parent=0 // pred_region
    _
  $region37: #{mynetwork_forward.1} parent=0 // pred_fallthru
    _
  %v33 = vld [vmem:[%s0] sm:$0x3f]
  %v34 = vld [vmem:[%s1] sm:$0xff]
  %v35 = vld [vmem:[%s1 + $0x8] sm:$0xff]
  %37 = vset.pattern.permute.xlu0 0
  %38 = vperm.xlu0 %37, %v34
  %v39 = vpop.permute.xlu0 %38
  %42 = vset.pattern.permute.xlu0 0
  %43 = vperm.xlu0 %42, %v35
  %v44 = vpop.permute.xlu0 %43
  %v47 = vperm.slane %v33, 0
  %v48 = vperm.slane %v33, 2
  %v49 = vperm.slane %v33, 4
  %v53 = vperm.slane %v47, 0
  %v54 = vperm.slane %v48, 0
  %v55 = vperm.slane %v49, 0
  %v56 = vmul.f32 %v39, %v53
  %v57 = vmul.f32 %v39, %v54
  %v58 = vmul.f32 %v39, %v55
  %v59 = vmul.f32 %v44, %v53
  %v60 = vmul.f32 %v44, %v54
  %v61 = vmul.f32 %v44, %v55
  %62 = vset.pattern.permute.xlu0 1
  %63 = vperm.xlu0 %62, %v34
  %v64 = vpop.permute.xlu0 %63
  %66 = vset.pattern.permute.xlu0 1
  %67 = vperm.xlu0 %66, %v35
  %v68 = vpop.permute.xlu0 %67
  %v70 = vperm.slane %v33, 1
  %v71 = vperm.slane %v33, 3
  %v72 = vperm.slane %v33, 5
  %v76 = vperm.slane %v70, 1
  %v77 = vperm.slane %v71, 1
  %v78 = vperm.slane %v72, 1
  %v79 = vmul.f32 %v64, %v76
  %v80 = vmul.f32 %v64, %v77
  %v81 = vmul.f32 %v64, %v78
  %v82 = vmul.f32 %v68, %v76
  %v83 = vmul.f32 %v68, %v77
  %v84 = vmul.f32 %v68, %v78
  %v85 = vadd.f32 %v56, %v79
  %v86 = vadd.f32 %v57, %v80
  %v87 = vadd.f32 %v58, %v81
  %v88 = vadd.f32 %v59, %v82
  %v89 = vadd.f32 %v60, %v83
  %v90 = vadd.f32 %v61, %v84
  %v91 = vld [vmem:[%s2] sm:$0xff]
  %v92 = vld [vmem:[%s2 + $0x8] sm:$0xff]
  %94 = vset.pattern.permute.xlu0 0
  %95 = vperm.xlu0 %94, %v91
  %v96 = vpop.permute.xlu0 %95
  %99 = vset.pattern.permute.xlu0 0
  %100 = vperm.xlu0 %99, %v92
  %v101 = vpop.permute.xlu0 %100
  %v103 = vadd.f32 %v85, %v96
  %v104 = vadd.f32 %v86, %v96
  %v105 = vadd.f32 %v87, %v96
  %v106 = vadd.f32 %v88, %v101
  %v107 = vadd.f32 %v89, %v101
  %v108 = vadd.f32 %v90, %v101
  %v109 = vmax.f32 %v103, 0.0
  %v110 = vmax.f32 %v104, 0.0
  %v111 = vmax.f32 %v105, 0.0
  %v112 = vmax.f32 %v106, 0.0
  %v113 = vmax.f32 %v107, 0.0
  %v114 = vmax.f32 %v108, 0.0
  %v115 = vld [vmem:[%s3] sm:$0xff]
  %v116 = vld [vmem:[%s3 + $0x8] sm:$0xff]
  %v117 = vld [vmem:[%s3 + $0x10] sm:$0xff]
  %v118 = vld [vmem:[%s3 + $0x18] sm:$0xff]
  %v119 = vld [vmem:[%s4] sm:$0xff]
  %v120 = vld [vmem:[%s4 + $0x8] sm:$0xff]
  %v121 = vld [vmem:[%s4 + $0x10] sm:$0xff]
  %v122 = vld [vmem:[%s4 + $0x18] sm:$0xff]
  %124 = vset.pattern.permute.xlu0 0
  %125 = vperm.xlu0 %124, %v119
  %v126 = vpop.permute.xlu0 %125
  %129 = vset.pattern.permute.xlu0 0
  %130 = vperm.xlu0 %129, %v120
  %v131 = vpop.permute.xlu0 %130
  %134 = vset.pattern.permute.xlu0 0
  %135 = vperm.xlu0 %134, %v121
  %v136 = vpop.permute.xlu0 %135
  %139 = vset.pattern.permute.xlu0 0
  %140 = vperm.xlu0 %139, %v122
  %v141 = vpop.permute.xlu0 %140
  %vm143 = vcmask 130048
  %v145 = vsel %vm143, %v115, 0
  %v148 = vsel %vm143, %v116, 0
  %v151 = vsel %vm143, %v117, 0
  %v154 = vsel %vm143, %v118, 0
  %156 = vmatpush.msra.mxu0 0.0
  %157 = vmatpush.msra.mxu0 0.0
  %158 = vmatpush.msra.mxu0 0.0
  %159 = vmatpush.msra.mxu0 0.0
  %160 = vmatpush.msra.mxu0 0.0
  %161 = vmatpush.msra.mxu0 0.0
  %162 = vmatpush.msra.mxu0 0.0
  %163 = vmatpush.msra.mxu0 0.0
  %164 = vmatpush.msra.mxu0 0.0
  %165 = vmatpush.msra.mxu0 0.0
  %166 = vmatpush.msra.mxu0 0.0
  %167 = vmatpush.msra.mxu0 0.0
  %168 = vmatpush.msra.mxu0 0.0
  %169 = vmatpush.msra.mxu0 0.0
  %v170 = vand.u32 %v112, 4294901760
  %171 = vmatpush.msra.mxu0 %v170
  %v172 = vand.u32 %v109, 4294901760
  %173 = vmatpush.msra.mxu0 %v172
  %v174 = vand.u32 %v145, 4294901760
  %v175 = vsub.f32 %v145, %v174
  %v176 = vand.u32 %v175, 4294901760
  %v177 = vsub.f32 %v175, %v176
  %v178 = vand.u32 %v177, 4294901760
  %179 = vmatmul.f32.gmra.mxu0 %v178
  %v180 = vpop.f32.mrf.mxu0
  %v181 = vadd.f32 %v126, %v180
  %v182 = vand.u32 %v148, 4294901760
  %v183 = vsub.f32 %v148, %v182
  %v184 = vand.u32 %v183, 4294901760
  %v185 = vsub.f32 %v183, %v184
  %v186 = vand.u32 %v185, 4294901760
  %187 = vmatmul.f32.gmra.mxu0 %v186
  %v188 = vpop.f32.mrf.mxu0
  %v189 = vadd.f32 %v131, %v188
  %v190 = vand.u32 %v151, 4294901760
  %v191 = vsub.f32 %v151, %v190
  %v192 = vand.u32 %v191, 4294901760
  %v193 = vsub.f32 %v191, %v192
  %v194 = vand.u32 %v193, 4294901760
  %195 = vmatmul.f32.gmra.mxu0 %v194
  %v196 = vpop.f32.mrf.mxu0
  %v197 = vadd.f32 %v136, %v196
  %v198 = vand.u32 %v154, 4294901760
  %v199 = vsub.f32 %v154, %v198
  %v200 = vand.u32 %v199, 4294901760
  %v201 = vsub.f32 %v199, %v200
  %v202 = vand.u32 %v201, 4294901760
  %203 = vmatmul.f32.gmra.mxu0 %v202
  %v204 = vpop.f32.mrf.mxu0
  %v205 = vadd.f32 %v141, %v204
  %206 = vdwg.mxu0
  %207 = vmatpush.msra.mxu0 0.0
  %208 = vmatpush.msra.mxu0 0.0
  %209 = vmatpush.msra.mxu0 0.0
  %210 = vmatpush.msra.mxu0 0.0
  %211 = vmatpush.msra.mxu0 0.0
  %212 = vmatpush.msra.mxu0 0.0
  %213 = vmatpush.msra.mxu0 0.0
  %214 = vmatpush.msra.mxu0 0.0
  %215 = vmatpush.msra.mxu0 0.0
  %216 = vmatpush.msra.mxu0 0.0
  %217 = vmatpush.msra.mxu0 0.0
  %218 = vmatpush.msra.mxu0 0.0
  %219 = vmatpush.msra.mxu0 0.0
  %220 = vmatpush.msra.mxu0 0.0
  %v221 = vand.u32 %v112, 4294901760
  %v222 = vsub.f32 %v112, %v221
  %v223 = vand.u32 %v222, 4294901760
  %v224 = vsub.f32 %v222, %v223
  %v225 = vand.u32 %v224, 4294901760
  %226 = vmatpush.msra.mxu0 %v225
  %v227 = vand.u32 %v109, 4294901760
  %v228 = vsub.f32 %v109, %v227
  %v229 = vand.u32 %v228, 4294901760
  %v230 = vsub.f32 %v228, %v229
  %v231 = vand.u32 %v230, 4294901760
  %232 = vmatpush.msra.mxu0 %v231
  %v233 = vand.u32 %v145, 4294901760
  %234 = vmatmul.f32.gmra.mxu0 %v233
  %v235 = vpop.f32.mrf.mxu0
  %v236 = vadd.f32 %v181, %v235
  %v237 = vand.u32 %v148, 4294901760
  %238 = vmatmul.f32.gmra.mxu0 %v237
  %v239 = vpop.f32.mrf.mxu0
  %v240 = vadd.f32 %v189, %v239
  %v241 = vand.u32 %v151, 4294901760
  %242 = vmatmul.f32.gmra.mxu0 %v241
  %v243 = vpop.f32.mrf.mxu0
  %v244 = vadd.f32 %v197, %v243
  %v245 = vand.u32 %v154, 4294901760
  %246 = vmatmul.f32.gmra.mxu0 %v245
  %v247 = vpop.f32.mrf.mxu0
  %v248 = vadd.f32 %v205, %v247
  %249 = vdwg.mxu0
  %250 = vmatpush.msra.mxu0 0.0
  %251 = vmatpush.msra.mxu0 0.0
  %252 = vmatpush.msra.mxu0 0.0
  %253 = vmatpush.msra.mxu0 0.0
  %254 = vmatpush.msra.mxu0 0.0
  %255 = vmatpush.msra.mxu0 0.0
  %256 = vmatpush.msra.mxu0 0.0
  %257 = vmatpush.msra.mxu0 0.0
  %258 = vmatpush.msra.mxu0 0.0
  %259 = vmatpush.msra.mxu0 0.0
  %260 = vmatpush.msra.mxu0 0.0
  %261 = vmatpush.msra.mxu0 0.0
  %262 = vmatpush.msra.mxu0 0.0
  %263 = vmatpush.msra.mxu0 0.0
  %v264 = vand.u32 %v112, 4294901760
  %v265 = vsub.f32 %v112, %v264
  %266 = vmatpush.msra.mxu0 %v265
  %v267 = vand.u32 %v109, 4294901760
  %v268 = vsub.f32 %v109, %v267
  %269 = vmatpush.msra.mxu0 %v268
  %v270 = vand.u32 %v145, 4294901760
  %v271 = vsub.f32 %v145, %v270
  %272 = vmatmul.f32.gmra.mxu0 %v271
  %v273 = vpop.f32.mrf.mxu0
  %v274 = vadd.f32 %v236, %v273
  %v275 = vand.u32 %v148, 4294901760
  %v276 = vsub.f32 %v148, %v275
  %277 = vmatmul.f32.gmra.mxu0 %v276
  %v278 = vpop.f32.mrf.mxu0
  %v279 = vadd.f32 %v240, %v278
  %v280 = vand.u32 %v151, 4294901760
  %v281 = vsub.f32 %v151, %v280
  %282 = vmatmul.f32.gmra.mxu0 %v281
  %v283 = vpop.f32.mrf.mxu0
  %v284 = vadd.f32 %v244, %v283
  %v285 = vand.u32 %v154, 4294901760
  %v286 = vsub.f32 %v154, %v285
  %287 = vmatmul.f32.gmra.mxu0 %v286
  %v288 = vpop.f32.mrf.mxu0
  %v289 = vadd.f32 %v248, %v288
  %290 = vdwg.mxu0
  %291 = vmatpush.msra.mxu0 0.0
  %292 = vmatpush.msra.mxu0 0.0
  %293 = vmatpush.msra.mxu0 0.0
  %294 = vmatpush.msra.mxu0 0.0
  %295 = vmatpush.msra.mxu0 0.0
  %296 = vmatpush.msra.mxu0 0.0
  %297 = vmatpush.msra.mxu0 0.0
  %298 = vmatpush.msra.mxu0 0.0
  %299 = vmatpush.msra.mxu0 0.0
  %300 = vmatpush.msra.mxu0 0.0
  %301 = vmatpush.msra.mxu0 0.0
  %302 = vmatpush.msra.mxu0 0.0
  %303 = vmatpush.msra.mxu0 0.0
  %304 = vmatpush.msra.mxu0 0.0
  %v305 = vand.u32 %v112, 4294901760
  %306 = vmatpush.msra.mxu0 %v305
  %v307 = vand.u32 %v109, 4294901760
  %308 = vmatpush.msra.mxu0 %v307
  %v309 = vand.u32 %v145, 4294901760
  %v310 = vsub.f32 %v145, %v309
  %v311 = vand.u32 %v310, 4294901760
  %312 = vmatmul.f32.gmra.mxu0 %v311
  %v313 = vpop.f32.mrf.mxu0
  %v314 = vadd.f32 %v274, %v313
  %v315 = vand.u32 %v148, 4294901760
  %v316 = vsub.f32 %v148, %v315
  %v317 = vand.u32 %v316, 4294901760
  %318 = vmatmul.f32.gmra.mxu0 %v317
  %v319 = vpop.f32.mrf.mxu0
  %v320 = vadd.f32 %v279, %v319
  %v321 = vand.u32 %v151, 4294901760
  %v322 = vsub.f32 %v151, %v321
  %v323 = vand.u32 %v322, 4294901760
  %324 = vmatmul.f32.gmra.mxu0 %v323
  %v325 = vpop.f32.mrf.mxu0
  %v326 = vadd.f32 %v284, %v325
  %v327 = vand.u32 %v154, 4294901760
  %v328 = vsub.f32 %v154, %v327
  %v329 = vand.u32 %v328, 4294901760
  %330 = vmatmul.f32.gmra.mxu0 %v329
  %v331 = vpop.f32.mrf.mxu0
  %v332 = vadd.f32 %v289, %v331
  %333 = vdwg.mxu0
  %334 = vmatpush.msra.mxu0 0.0
  %335 = vmatpush.msra.mxu0 0.0
  %336 = vmatpush.msra.mxu0 0.0
  %337 = vmatpush.msra.mxu0 0.0
  %338 = vmatpush.msra.mxu0 0.0
  %339 = vmatpush.msra.mxu0 0.0
  %340 = vmatpush.msra.mxu0 0.0
  %341 = vmatpush.msra.mxu0 0.0
  %342 = vmatpush.msra.mxu0 0.0
  %343 = vmatpush.msra.mxu0 0.0
  %344 = vmatpush.msra.mxu0 0.0
  %345 = vmatpush.msra.mxu0 0.0
  %346 = vmatpush.msra.mxu0 0.0
  %347 = vmatpush.msra.mxu0 0.0
  %v348 = vand.u32 %v112, 4294901760
  %v349 = vsub.f32 %v112, %v348
  %v350 = vand.u32 %v349, 4294901760
  %351 = vmatpush.msra.mxu0 %v350
  %v352 = vand.u32 %v109, 4294901760
  %v353 = vsub.f32 %v109, %v352
  %v354 = vand.u32 %v353, 4294901760
  %355 = vmatpush.msra.mxu0 %v354
  %v356 = vand.u32 %v145, 4294901760
  %357 = vmatmul.f32.gmra.mxu0 %v356
  %v358 = vpop.f32.mrf.mxu0
  %v359 = vadd.f32 %v314, %v358
  %v360 = vand.u32 %v148, 4294901760
  %361 = vmatmul.f32.gmra.mxu0 %v360
  %v362 = vpop.f32.mrf.mxu0
  %v363 = vadd.f32 %v320, %v362
  %v364 = vand.u32 %v151, 4294901760
  %365 = vmatmul.f32.gmra.mxu0 %v364
  %v366 = vpop.f32.mrf.mxu0
  %v367 = vadd.f32 %v326, %v366
  %v368 = vand.u32 %v154, 4294901760
  %369 = vmatmul.f32.gmra.mxu0 %v368
  %v370 = vpop.f32.mrf.mxu0
  %v371 = vadd.f32 %v332, %v370
  %372 = vdwg.mxu0
  %373 = vmatpush.msra.mxu0 0.0
  %374 = vmatpush.msra.mxu0 0.0
  %375 = vmatpush.msra.mxu0 0.0
  %376 = vmatpush.msra.mxu0 0.0
  %377 = vmatpush.msra.mxu0 0.0
  %378 = vmatpush.msra.mxu0 0.0
  %379 = vmatpush.msra.mxu0 0.0
  %380 = vmatpush.msra.mxu0 0.0
  %381 = vmatpush.msra.mxu0 0.0
  %382 = vmatpush.msra.mxu0 0.0
  %383 = vmatpush.msra.mxu0 0.0
  %384 = vmatpush.msra.mxu0 0.0
  %385 = vmatpush.msra.mxu0 0.0
  %386 = vmatpush.msra.mxu0 0.0
  %v387 = vand.u32 %v112, 4294901760
  %388 = vmatpush.msra.mxu0 %v387
  %v389 = vand.u32 %v109, 4294901760
  %390 = vmatpush.msra.mxu0 %v389
  %v391 = vand.u32 %v145, 4294901760
  %392 = vmatmul.f32.gmra.mxu0 %v391
  %v393 = vpop.f32.mrf.mxu0
  %v394 = vadd.f32 %v359, %v393
  %v395 = vand.u32 %v148, 4294901760
  %396 = vmatmul.f32.gmra.mxu0 %v395
  %v397 = vpop.f32.mrf.mxu0
  %v398 = vadd.f32 %v363, %v397
  %v399 = vand.u32 %v151, 4294901760
  %400 = vmatmul.f32.gmra.mxu0 %v399
  %v401 = vpop.f32.mrf.mxu0
  %v402 = vadd.f32 %v367, %v401
  %v403 = vand.u32 %v154, 4294901760
  %404 = vmatmul.f32.gmra.mxu0 %v403
  %v405 = vpop.f32.mrf.mxu0
  %v406 = vadd.f32 %v371, %v405
  %407 = vdwg.mxu0
  %408 = vmatpush.msra.mxu0 0.0
  %409 = vmatpush.msra.mxu0 0.0
  %410 = vmatpush.msra.mxu0 0.0
  %411 = vmatpush.msra.mxu0 0.0
  %412 = vmatpush.msra.mxu0 0.0
  %413 = vmatpush.msra.mxu0 0.0
  %414 = vmatpush.msra.mxu0 0.0
  %415 = vmatpush.msra.mxu0 0.0
  %416 = vmatpush.msra.mxu0 0.0
  %417 = vmatpush.msra.mxu0 0.0
  %418 = vmatpush.msra.mxu0 0.0
  %419 = vmatpush.msra.mxu0 0.0
  %420 = vmatpush.msra.mxu0 0.0
  %421 = vmatpush.msra.mxu0 0.0
  %v422 = vand.u32 %v113, 4294901760
  %423 = vmatpush.msra.mxu0 %v422
  %v424 = vand.u32 %v110, 4294901760
  %425 = vmatpush.msra.mxu0 %v424
  %v426 = vand.u32 %v145, 4294901760
  %v427 = vsub.f32 %v145, %v426
  %v428 = vand.u32 %v427, 4294901760
  %v429 = vsub.f32 %v427, %v428
  %v430 = vand.u32 %v429, 4294901760
  %431 = vmatmul.f32.gmra.mxu0 %v430
  %v432 = vpop.f32.mrf.mxu0
  %v433 = vadd.f32 %v126, %v432
  %v434 = vand.u32 %v148, 4294901760
  %v435 = vsub.f32 %v148, %v434
  %v436 = vand.u32 %v435, 4294901760
  %v437 = vsub.f32 %v435, %v436
  %v438 = vand.u32 %v437, 4294901760
  %439 = vmatmul.f32.gmra.mxu0 %v438
  %v440 = vpop.f32.mrf.mxu0
  %v441 = vadd.f32 %v131, %v440
  %v442 = vand.u32 %v151, 4294901760
  %v443 = vsub.f32 %v151, %v442
  %v444 = vand.u32 %v443, 4294901760
  %v445 = vsub.f32 %v443, %v444
  %v446 = vand.u32 %v445, 4294901760
  %447 = vmatmul.f32.gmra.mxu0 %v446
  %v448 = vpop.f32.mrf.mxu0
  %v449 = vadd.f32 %v136, %v448
  %v450 = vand.u32 %v154, 4294901760
  %v451 = vsub.f32 %v154, %v450
  %v452 = vand.u32 %v451, 4294901760
  %v453 = vsub.f32 %v451, %v452
  %v454 = vand.u32 %v453, 4294901760
  %455 = vmatmul.f32.gmra.mxu0 %v454
  %v456 = vpop.f32.mrf.mxu0
  %v457 = vadd.f32 %v141, %v456
  %458 = vdwg.mxu0
  %459 = vmatpush.msra.mxu0 0.0
  %460 = vmatpush.msra.mxu0 0.0
  %461 = vmatpush.msra.mxu0 0.0
  %462 = vmatpush.msra.mxu0 0.0
  %463 = vmatpush.msra.mxu0 0.0
  %464 = vmatpush.msra.mxu0 0.0
  %465 = vmatpush.msra.mxu0 0.0
  %466 = vmatpush.msra.mxu0 0.0
  %467 = vmatpush.msra.mxu0 0.0
  %468 = vmatpush.msra.mxu0 0.0
  %469 = vmatpush.msra.mxu0 0.0
  %470 = vmatpush.msra.mxu0 0.0
  %471 = vmatpush.msra.mxu0 0.0
  %472 = vmatpush.msra.mxu0 0.0
  %v473 = vand.u32 %v113, 4294901760
  %v474 = vsub.f32 %v113, %v473
  %v475 = vand.u32 %v474, 4294901760
  %v476 = vsub.f32 %v474, %v475
  %v477 = vand.u32 %v476, 4294901760
  %478 = vmatpush.msra.mxu0 %v477
  %v479 = vand.u32 %v110, 4294901760
  %v480 = vsub.f32 %v110, %v479
  %v481 = vand.u32 %v480, 4294901760
  %v482 = vsub.f32 %v480, %v481
  %v483 = vand.u32 %v482, 4294901760
  %484 = vmatpush.msra.mxu0 %v483
  %v485 = vand.u32 %v145, 4294901760
  %486 = vmatmul.f32.gmra.mxu0 %v485
  %v487 = vpop.f32.mrf.mxu0
  %v488 = vadd.f32 %v433, %v487
  %v489 = vand.u32 %v148, 4294901760
  %490 = vmatmul.f32.gmra.mxu0 %v489
  %v491 = vpop.f32.mrf.mxu0
  %v492 = vadd.f32 %v441, %v491
  %v493 = vand.u32 %v151, 4294901760
  %494 = vmatmul.f32.gmra.mxu0 %v493
  %v495 = vpop.f32.mrf.mxu0
  %v496 = vadd.f32 %v449, %v495
  %v497 = vand.u32 %v154, 4294901760
  %498 = vmatmul.f32.gmra.mxu0 %v497
  %v499 = vpop.f32.mrf.mxu0
  %v500 = vadd.f32 %v457, %v499
  %501 = vdwg.mxu0
  %502 = vmatpush.msra.mxu0 0.0
  %503 = vmatpush.msra.mxu0 0.0
  %504 = vmatpush.msra.mxu0 0.0
  %505 = vmatpush.msra.mxu0 0.0
  %506 = vmatpush.msra.mxu0 0.0
  %507 = vmatpush.msra.mxu0 0.0
  %508 = vmatpush.msra.mxu0 0.0
  %509 = vmatpush.msra.mxu0 0.0
  %510 = vmatpush.msra.mxu0 0.0
  %511 = vmatpush.msra.mxu0 0.0
  %512 = vmatpush.msra.mxu0 0.0
  %513 = vmatpush.msra.mxu0 0.0
  %514 = vmatpush.msra.mxu0 0.0
  %515 = vmatpush.msra.mxu0 0.0
  %v516 = vand.u32 %v113, 4294901760
  %v517 = vsub.f32 %v113, %v516
  %518 = vmatpush.msra.mxu0 %v517
  %v519 = vand.u32 %v110, 4294901760
  %v520 = vsub.f32 %v110, %v519
  %521 = vmatpush.msra.mxu0 %v520
  %v522 = vand.u32 %v145, 4294901760
  %v523 = vsub.f32 %v145, %v522
  %524 = vmatmul.f32.gmra.mxu0 %v523
  %v525 = vpop.f32.mrf.mxu0
  %v526 = vadd.f32 %v488, %v525
  %v527 = vand.u32 %v148, 4294901760
  %v528 = vsub.f32 %v148, %v527
  %529 = vmatmul.f32.gmra.mxu0 %v528
  %v530 = vpop.f32.mrf.mxu0
  %v531 = vadd.f32 %v492, %v530
  %v532 = vand.u32 %v151, 4294901760
  %v533 = vsub.f32 %v151, %v532
  %534 = vmatmul.f32.gmra.mxu0 %v533
  %v535 = vpop.f32.mrf.mxu0
  %v536 = vadd.f32 %v496, %v535
  %v537 = vand.u32 %v154, 4294901760
  %v538 = vsub.f32 %v154, %v537
  %539 = vmatmul.f32.gmra.mxu0 %v538
  %v540 = vpop.f32.mrf.mxu0
  %v541 = vadd.f32 %v500, %v540
  %542 = vdwg.mxu0
  %543 = vmatpush.msra.mxu0 0.0
  %544 = vmatpush.msra.mxu0 0.0
  %545 = vmatpush.msra.mxu0 0.0
  %546 = vmatpush.msra.mxu0 0.0
  %547 = vmatpush.msra.mxu0 0.0
  %548 = vmatpush.msra.mxu0 0.0
  %549 = vmatpush.msra.mxu0 0.0
  %550 = vmatpush.msra.mxu0 0.0
  %551 = vmatpush.msra.mxu0 0.0
  %552 = vmatpush.msra.mxu0 0.0
  %553 = vmatpush.msra.mxu0 0.0
  %554 = vmatpush.msra.mxu0 0.0
  %555 = vmatpush.msra.mxu0 0.0
  %556 = vmatpush.msra.mxu0 0.0
  %v557 = vand.u32 %v113, 4294901760
  %558 = vmatpush.msra.mxu0 %v557
  %v559 = vand.u32 %v110, 4294901760
  %560 = vmatpush.msra.mxu0 %v559
  %v561 = vand.u32 %v145, 4294901760
  %v562 = vsub.f32 %v145, %v561
  %v563 = vand.u32 %v562, 4294901760
  %564 = vmatmul.f32.gmra.mxu0 %v563
  %v565 = vpop.f32.mrf.mxu0
  %v566 = vadd.f32 %v526, %v565
  %v567 = vand.u32 %v148, 4294901760
  %v568 = vsub.f32 %v148, %v567
  %v569 = vand.u32 %v568, 4294901760
  %570 = vmatmul.f32.gmra.mxu0 %v569
  %v571 = vpop.f32.mrf.mxu0
  %v572 = vadd.f32 %v531, %v571
  %v573 = vand.u32 %v151, 4294901760
  %v574 = vsub.f32 %v151, %v573
  %v575 = vand.u32 %v574, 4294901760
  %576 = vmatmul.f32.gmra.mxu0 %v575
  %v577 = vpop.f32.mrf.mxu0
  %v578 = vadd.f32 %v536, %v577
  %v579 = vand.u32 %v154, 4294901760
  %v580 = vsub.f32 %v154, %v579
  %v581 = vand.u32 %v580, 4294901760
  %582 = vmatmul.f32.gmra.mxu0 %v581
  %v583 = vpop.f32.mrf.mxu0
  %v584 = vadd.f32 %v541, %v583
  %585 = vdwg.mxu0
  %586 = vmatpush.msra.mxu0 0.0
  %587 = vmatpush.msra.mxu0 0.0
  %588 = vmatpush.msra.mxu0 0.0
  %589 = vmatpush.msra.mxu0 0.0
  %590 = vmatpush.msra.mxu0 0.0
  %591 = vmatpush.msra.mxu0 0.0
  %592 = vmatpush.msra.mxu0 0.0
  %593 = vmatpush.msra.mxu0 0.0
  %594 = vmatpush.msra.mxu0 0.0
  %595 = vmatpush.msra.mxu0 0.0
  %596 = vmatpush.msra.mxu0 0.0
  %597 = vmatpush.msra.mxu0 0.0
  %598 = vmatpush.msra.mxu0 0.0
  %599 = vmatpush.msra.mxu0 0.0
  %v600 = vand.u32 %v113, 4294901760
  %v601 = vsub.f32 %v113, %v600
  %v602 = vand.u32 %v601, 4294901760
  %603 = vmatpush.msra.mxu0 %v602
  %v604 = vand.u32 %v110, 4294901760
  %v605 = vsub.f32 %v110, %v604
  %v606 = vand.u32 %v605, 4294901760
  %607 = vmatpush.msra.mxu0 %v606
  %v608 = vand.u32 %v145, 4294901760
  %609 = vmatmul.f32.gmra.mxu0 %v608
  %v610 = vpop.f32.mrf.mxu0
  %v611 = vadd.f32 %v566, %v610
  %v612 = vand.u32 %v148, 4294901760
  %613 = vmatmul.f32.gmra.mxu0 %v612
  %v614 = vpop.f32.mrf.mxu0
  %v615 = vadd.f32 %v572, %v614
  %v616 = vand.u32 %v151, 4294901760
  %617 = vmatmul.f32.gmra.mxu0 %v616
  %v618 = vpop.f32.mrf.mxu0
  %v619 = vadd.f32 %v578, %v618
  %v620 = vand.u32 %v154, 4294901760
  %621 = vmatmul.f32.gmra.mxu0 %v620
  %v622 = vpop.f32.mrf.mxu0
  %v623 = vadd.f32 %v584, %v622
  %624 = vdwg.mxu0
  %625 = vmatpush.msra.mxu0 0.0
  %626 = vmatpush.msra.mxu0 0.0
  %627 = vmatpush.msra.mxu0 0.0
  %628 = vmatpush.msra.mxu0 0.0
  %629 = vmatpush.msra.mxu0 0.0
  %630 = vmatpush.msra.mxu0 0.0
  %631 = vmatpush.msra.mxu0 0.0
  %632 = vmatpush.msra.mxu0 0.0
  %633 = vmatpush.msra.mxu0 0.0
  %634 = vmatpush.msra.mxu0 0.0
  %635 = vmatpush.msra.mxu0 0.0
  %636 = vmatpush.msra.mxu0 0.0
  %637 = vmatpush.msra.mxu0 0.0
  %638 = vmatpush.msra.mxu0 0.0
  %v639 = vand.u32 %v113, 4294901760
  %640 = vmatpush.msra.mxu0 %v639
  %v641 = vand.u32 %v110, 4294901760
  %642 = vmatpush.msra.mxu0 %v641
  %v643 = vand.u32 %v145, 4294901760
  %644 = vmatmul.f32.gmra.mxu0 %v643
  %v645 = vpop.f32.mrf.mxu0
  %v646 = vadd.f32 %v611, %v645
  %v647 = vand.u32 %v148, 4294901760
  %648 = vmatmul.f32.gmra.mxu0 %v647
  %v649 = vpop.f32.mrf.mxu0
  %v650 = vadd.f32 %v615, %v649
  %v651 = vand.u32 %v151, 4294901760
  %652 = vmatmul.f32.gmra.mxu0 %v651
  %v653 = vpop.f32.mrf.mxu0
  %v654 = vadd.f32 %v619, %v653
  %v655 = vand.u32 %v154, 4294901760
  %656 = vmatmul.f32.gmra.mxu0 %v655
  %v657 = vpop.f32.mrf.mxu0
  %v658 = vadd.f32 %v623, %v657
  %659 = vdwg.mxu0
  %660 = vmatpush.msra.mxu0 0.0
  %661 = vmatpush.msra.mxu0 0.0
  %662 = vmatpush.msra.mxu0 0.0
  %663 = vmatpush.msra.mxu0 0.0
  %664 = vmatpush.msra.mxu0 0.0
  %665 = vmatpush.msra.mxu0 0.0
  %666 = vmatpush.msra.mxu0 0.0
  %667 = vmatpush.msra.mxu0 0.0
  %668 = vmatpush.msra.mxu0 0.0
  %669 = vmatpush.msra.mxu0 0.0
  %670 = vmatpush.msra.mxu0 0.0
  %671 = vmatpush.msra.mxu0 0.0
  %672 = vmatpush.msra.mxu0 0.0
  %673 = vmatpush.msra.mxu0 0.0
  %v674 = vand.u32 %v114, 4294901760
  %675 = vmatpush.msra.mxu0 %v674
  %v676 = vand.u32 %v111, 4294901760
  %677 = vmatpush.msra.mxu0 %v676
  %v678 = vand.u32 %v145, 4294901760
  %v679 = vsub.f32 %v145, %v678
  %v680 = vand.u32 %v679, 4294901760
  %v681 = vsub.f32 %v679, %v680
  %v682 = vand.u32 %v681, 4294901760
  %683 = vmatmul.f32.gmra.mxu0 %v682
  %v684 = vpop.f32.mrf.mxu0
  %v685 = vadd.f32 %v126, %v684
  %v686 = vand.u32 %v148, 4294901760
  %v687 = vsub.f32 %v148, %v686
  %v688 = vand.u32 %v687, 4294901760
  %v689 = vsub.f32 %v687, %v688
  %v690 = vand.u32 %v689, 4294901760
  %691 = vmatmul.f32.gmra.mxu0 %v690
  %v692 = vpop.f32.mrf.mxu0
  %v693 = vadd.f32 %v131, %v692
  %v694 = vand.u32 %v151, 4294901760
  %v695 = vsub.f32 %v151, %v694
  %v696 = vand.u32 %v695, 4294901760
  %v697 = vsub.f32 %v695, %v696
  %v698 = vand.u32 %v697, 4294901760
  %699 = vmatmul.f32.gmra.mxu0 %v698
  %v700 = vpop.f32.mrf.mxu0
  %v701 = vadd.f32 %v136, %v700
  %v702 = vand.u32 %v154, 4294901760
  %v703 = vsub.f32 %v154, %v702
  %v704 = vand.u32 %v703, 4294901760
  %v705 = vsub.f32 %v703, %v704
  %v706 = vand.u32 %v705, 4294901760
  %707 = vmatmul.f32.gmra.mxu0 %v706
  %v708 = vpop.f32.mrf.mxu0
  %v709 = vadd.f32 %v141, %v708
  %710 = vdwg.mxu0
  %711 = vmatpush.msra.mxu0 0.0
  %712 = vmatpush.msra.mxu0 0.0
  %713 = vmatpush.msra.mxu0 0.0
  %714 = vmatpush.msra.mxu0 0.0
  %715 = vmatpush.msra.mxu0 0.0
  %716 = vmatpush.msra.mxu0 0.0
  %717 = vmatpush.msra.mxu0 0.0
  %718 = vmatpush.msra.mxu0 0.0
  %719 = vmatpush.msra.mxu0 0.0
  %720 = vmatpush.msra.mxu0 0.0
  %721 = vmatpush.msra.mxu0 0.0
  %722 = vmatpush.msra.mxu0 0.0
  %723 = vmatpush.msra.mxu0 0.0
  %724 = vmatpush.msra.mxu0 0.0
  %v725 = vand.u32 %v114, 4294901760
  %v726 = vsub.f32 %v114, %v725
  %v727 = vand.u32 %v726, 4294901760
  %v728 = vsub.f32 %v726, %v727
  %v729 = vand.u32 %v728, 4294901760
  %730 = vmatpush.msra.mxu0 %v729
  %v731 = vand.u32 %v111, 4294901760
  %v732 = vsub.f32 %v111, %v731
  %v733 = vand.u32 %v732, 4294901760
  %v734 = vsub.f32 %v732, %v733
  %v735 = vand.u32 %v734, 4294901760
  %736 = vmatpush.msra.mxu0 %v735
  %v737 = vand.u32 %v145, 4294901760
  %738 = vmatmul.f32.gmra.mxu0 %v737
  %v739 = vpop.f32.mrf.mxu0
  %v740 = vadd.f32 %v685, %v739
  %v741 = vand.u32 %v148, 4294901760
  %742 = vmatmul.f32.gmra.mxu0 %v741
  %v743 = vpop.f32.mrf.mxu0
  %v744 = vadd.f32 %v693, %v743
  %v745 = vand.u32 %v151, 4294901760
  %746 = vmatmul.f32.gmra.mxu0 %v745
  %v747 = vpop.f32.mrf.mxu0
  %v748 = vadd.f32 %v701, %v747
  %v749 = vand.u32 %v154, 4294901760
  %750 = vmatmul.f32.gmra.mxu0 %v749
  %v751 = vpop.f32.mrf.mxu0
  %v752 = vadd.f32 %v709, %v751
  %753 = vdwg.mxu0
  %754 = vmatpush.msra.mxu0 0.0
  %755 = vmatpush.msra.mxu0 0.0
  %756 = vmatpush.msra.mxu0 0.0
  %757 = vmatpush.msra.mxu0 0.0
  %758 = vmatpush.msra.mxu0 0.0
  %759 = vmatpush.msra.mxu0 0.0
  %760 = vmatpush.msra.mxu0 0.0
  %761 = vmatpush.msra.mxu0 0.0
  %762 = vmatpush.msra.mxu0 0.0
  %763 = vmatpush.msra.mxu0 0.0
  %764 = vmatpush.msra.mxu0 0.0
  %765 = vmatpush.msra.mxu0 0.0
  %766 = vmatpush.msra.mxu0 0.0
  %767 = vmatpush.msra.mxu0 0.0
  %v768 = vand.u32 %v114, 4294901760
  %v769 = vsub.f32 %v114, %v768
  %770 = vmatpush.msra.mxu0 %v769
  %v771 = vand.u32 %v111, 4294901760
  %v772 = vsub.f32 %v111, %v771
  %773 = vmatpush.msra.mxu0 %v772
  %v774 = vand.u32 %v145, 4294901760
  %v775 = vsub.f32 %v145, %v774
  %776 = vmatmul.f32.gmra.mxu0 %v775
  %v777 = vpop.f32.mrf.mxu0
  %v778 = vadd.f32 %v740, %v777
  %v779 = vand.u32 %v148, 4294901760
  %v780 = vsub.f32 %v148, %v779
  %781 = vmatmul.f32.gmra.mxu0 %v780
  %v782 = vpop.f32.mrf.mxu0
  %v783 = vadd.f32 %v744, %v782
  %v784 = vand.u32 %v151, 4294901760
  %v785 = vsub.f32 %v151, %v784
  %786 = vmatmul.f32.gmra.mxu0 %v785
  %v787 = vpop.f32.mrf.mxu0
  %v788 = vadd.f32 %v748, %v787
  %v789 = vand.u32 %v154, 4294901760
  %v790 = vsub.f32 %v154, %v789
  %791 = vmatmul.f32.gmra.mxu0 %v790
  %v792 = vpop.f32.mrf.mxu0
  %v793 = vadd.f32 %v752, %v792
  %794 = vdwg.mxu0
  %795 = vmatpush.msra.mxu0 0.0
  %796 = vmatpush.msra.mxu0 0.0
  %797 = vmatpush.msra.mxu0 0.0
  %798 = vmatpush.msra.mxu0 0.0
  %799 = vmatpush.msra.mxu0 0.0
  %800 = vmatpush.msra.mxu0 0.0
  %801 = vmatpush.msra.mxu0 0.0
  %802 = vmatpush.msra.mxu0 0.0
  %803 = vmatpush.msra.mxu0 0.0
  %804 = vmatpush.msra.mxu0 0.0
  %805 = vmatpush.msra.mxu0 0.0
  %806 = vmatpush.msra.mxu0 0.0
  %807 = vmatpush.msra.mxu0 0.0
  %808 = vmatpush.msra.mxu0 0.0
  %v809 = vand.u32 %v114, 4294901760
  %810 = vmatpush.msra.mxu0 %v809
  %v811 = vand.u32 %v111, 4294901760
  %812 = vmatpush.msra.mxu0 %v811
  %v813 = vand.u32 %v145, 4294901760
  %v814 = vsub.f32 %v145, %v813
  %v815 = vand.u32 %v814, 4294901760
  %816 = vmatmul.f32.gmra.mxu0 %v815
  %v817 = vpop.f32.mrf.mxu0
  %v818 = vadd.f32 %v778, %v817
  %v819 = vand.u32 %v148, 4294901760
  %v820 = vsub.f32 %v148, %v819
  %v821 = vand.u32 %v820, 4294901760
  %822 = vmatmul.f32.gmra.mxu0 %v821
  %v823 = vpop.f32.mrf.mxu0
  %v824 = vadd.f32 %v783, %v823
  %v825 = vand.u32 %v151, 4294901760
  %v826 = vsub.f32 %v151, %v825
  %v827 = vand.u32 %v826, 4294901760
  %828 = vmatmul.f32.gmra.mxu0 %v827
  %v829 = vpop.f32.mrf.mxu0
  %v830 = vadd.f32 %v788, %v829
  %v831 = vand.u32 %v154, 4294901760
  %v832 = vsub.f32 %v154, %v831
  %v833 = vand.u32 %v832, 4294901760
  %834 = vmatmul.f32.gmra.mxu0 %v833
  %v835 = vpop.f32.mrf.mxu0
  %v836 = vadd.f32 %v793, %v835
  %837 = vdwg.mxu0
  %838 = vmatpush.msra.mxu0 0.0
  %839 = vmatpush.msra.mxu0 0.0
  %840 = vmatpush.msra.mxu0 0.0
  %841 = vmatpush.msra.mxu0 0.0
  %842 = vmatpush.msra.mxu0 0.0
  %843 = vmatpush.msra.mxu0 0.0
  %844 = vmatpush.msra.mxu0 0.0
  %845 = vmatpush.msra.mxu0 0.0
  %846 = vmatpush.msra.mxu0 0.0
  %847 = vmatpush.msra.mxu0 0.0
  %848 = vmatpush.msra.mxu0 0.0
  %849 = vmatpush.msra.mxu0 0.0
  %850 = vmatpush.msra.mxu0 0.0
  %851 = vmatpush.msra.mxu0 0.0
  %v852 = vand.u32 %v114, 4294901760
  %v853 = vsub.f32 %v114, %v852
  %v854 = vand.u32 %v853, 4294901760
  %855 = vmatpush.msra.mxu0 %v854
  %v856 = vand.u32 %v111, 4294901760
  %v857 = vsub.f32 %v111, %v856
  %v858 = vand.u32 %v857, 4294901760
  %859 = vmatpush.msra.mxu0 %v858
  %v860 = vand.u32 %v145, 4294901760
  %861 = vmatmul.f32.gmra.mxu0 %v860
  %v862 = vpop.f32.mrf.mxu0
  %v863 = vadd.f32 %v818, %v862
  %v864 = vand.u32 %v148, 4294901760
  %865 = vmatmul.f32.gmra.mxu0 %v864
  %v866 = vpop.f32.mrf.mxu0
  %v867 = vadd.f32 %v824, %v866
  %v868 = vand.u32 %v151, 4294901760
  %869 = vmatmul.f32.gmra.mxu0 %v868
  %v870 = vpop.f32.mrf.mxu0
  %v871 = vadd.f32 %v830, %v870
  %v872 = vand.u32 %v154, 4294901760
  %873 = vmatmul.f32.gmra.mxu0 %v872
  %v874 = vpop.f32.mrf.mxu0
  %v875 = vadd.f32 %v836, %v874
  %876 = vdwg.mxu0
  %877 = vmatpush.msra.mxu0 0.0
  %878 = vmatpush.msra.mxu0 0.0
  %879 = vmatpush.msra.mxu0 0.0
  %880 = vmatpush.msra.mxu0 0.0
  %881 = vmatpush.msra.mxu0 0.0
  %882 = vmatpush.msra.mxu0 0.0
  %883 = vmatpush.msra.mxu0 0.0
  %884 = vmatpush.msra.mxu0 0.0
  %885 = vmatpush.msra.mxu0 0.0
  %886 = vmatpush.msra.mxu0 0.0
  %887 = vmatpush.msra.mxu0 0.0
  %888 = vmatpush.msra.mxu0 0.0
  %889 = vmatpush.msra.mxu0 0.0
  %890 = vmatpush.msra.mxu0 0.0
  %v891 = vand.u32 %v114, 4294901760
  %892 = vmatpush.msra.mxu0 %v891
  %v893 = vand.u32 %v111, 4294901760
  %894 = vmatpush.msra.mxu0 %v893
  %v895 = vand.u32 %v145, 4294901760
  %896 = vmatmul.f32.gmra.mxu0 %v895
  %v897 = vpop.f32.mrf.mxu0
  %v898 = vadd.f32 %v863, %v897
  %v899 = vand.u32 %v148, 4294901760
  %900 = vmatmul.f32.gmra.mxu0 %v899
  %v901 = vpop.f32.mrf.mxu0
  %v902 = vadd.f32 %v867, %v901
  %v903 = vand.u32 %v151, 4294901760
  %904 = vmatmul.f32.gmra.mxu0 %v903
  %v905 = vpop.f32.mrf.mxu0
  %v906 = vadd.f32 %v871, %v905
  %v907 = vand.u32 %v154, 4294901760
  %908 = vmatmul.f32.gmra.mxu0 %v907
  %v909 = vpop.f32.mrf.mxu0
  %v910 = vadd.f32 %v875, %v909
  %911 = vdwg.mxu0
  %v912 = vmax.f32 %v394, 0.0
  %v913 = vmax.f32 %v646, 0.0
  %v914 = vmax.f32 %v898, 0.0
  %v915 = vmax.f32 %v398, 0.0
  %v916 = vmax.f32 %v650, 0.0
  %v917 = vmax.f32 %v902, 0.0
  %v918 = vmax.f32 %v402, 0.0
  %v919 = vmax.f32 %v654, 0.0
  %v920 = vmax.f32 %v906, 0.0
  %v921 = vmax.f32 %v406, 0.0
  %v922 = vmax.f32 %v658, 0.0
  %v923 = vmax.f32 %v910, 0.0
  %v924 = vld [vmem:[%s5] sm:$0xff]
  %v925 = vld [vmem:[%s5 + $0x8] sm:$0xff]
  %v926 = vld [vmem:[%s5 + $0x10] sm:$0xff]
  %v927 = vld [vmem:[%s5 + $0x18] sm:$0xff]
  %v928 = vld [vmem:[%s5 + $0x20] sm:$0xff]
  %v929 = vld [vmem:[%s5 + $0x28] sm:$0xff]
  %v930 = vld [vmem:[%s5 + $0x30] sm:$0xff]
  %v931 = vld [vmem:[%s5 + $0x38] sm:$0xff]
  %v932 = vld [vmem:[%s5 + $0x40] sm:$0xff]
  %v933 = vld [vmem:[%s5 + $0x48] sm:$0xff]
  %v934 = vld [vmem:[%s5 + $0x50] sm:$0xff]
  %v935 = vld [vmem:[%s5 + $0x58] sm:$0xff]
  %v936 = vld [vmem:[%s5 + $0x60] sm:$0xff]
  %v937 = vld [vmem:[%s5 + $0x68] sm:$0xff]
  %v938 = vld [vmem:[%s5 + $0x70] sm:$0xff]
  %v939 = vld [vmem:[%s5 + $0x78] sm:$0xff]
  %v940 = vld [vmem:[%s6] sm:$0xff]
  %v941 = vld [vmem:[%s6 + $0x8] sm:$0xff]
  %v942 = vld [vmem:[%s6 + $0x10] sm:$0xff]
  %v943 = vld [vmem:[%s6 + $0x18] sm:$0xff]
  %v944 = vld [vmem:[%s6 + $0x20] sm:$0xff]
  %v945 = vld [vmem:[%s6 + $0x28] sm:$0xff]
  %v946 = vld [vmem:[%s6 + $0x30] sm:$0xff]
  %v947 = vld [vmem:[%s6 + $0x38] sm:$0xff]
  %v948 = vld [vmem:[%s6 + $0x40] sm:$0xff]
  %v949 = vld [vmem:[%s6 + $0x48] sm:$0xff]
  %v950 = vld [vmem:[%s6 + $0x50] sm:$0xff]
  %v951 = vld [vmem:[%s6 + $0x58] sm:$0xff]
  %v952 = vld [vmem:[%s6 + $0x60] sm:$0xff]
  %v953 = vld [vmem:[%s6 + $0x68] sm:$0xff]
  %v954 = vld [vmem:[%s6 + $0x70] sm:$0xff]
  %v955 = vld [vmem:[%s6 + $0x78] sm:$0xff]
  %957 = vset.pattern.permute.xlu0 0
  %958 = vperm.xlu0 %957, %v940
  %v959 = vpop.permute.xlu0 %958
  %962 = vset.pattern.permute.xlu0 0
  %963 = vperm.xlu0 %962, %v941
  %v964 = vpop.permute.xlu0 %963
  %967 = vset.pattern.permute.xlu0 0
  %968 = vperm.xlu0 %967, %v942
  %v969 = vpop.permute.xlu0 %968
  %972 = vset.pattern.permute.xlu0 0
  %973 = vperm.xlu0 %972, %v943
  %v974 = vpop.permute.xlu0 %973
  %977 = vset.pattern.permute.xlu0 0
  %978 = vperm.xlu0 %977, %v944
  %v979 = vpop.permute.xlu0 %978
  %982 = vset.pattern.permute.xlu0 0
  %983 = vperm.xlu0 %982, %v945
  %v984 = vpop.permute.xlu0 %983
  %987 = vset.pattern.permute.xlu0 0
  %988 = vperm.xlu0 %987, %v946
  %v989 = vpop.permute.xlu0 %988
  %992 = vset.pattern.permute.xlu0 0
  %993 = vperm.xlu0 %992, %v947
  %v994 = vpop.permute.xlu0 %993
  %997 = vset.pattern.permute.xlu0 0
  %998 = vperm.xlu0 %997, %v948
  %v999 = vpop.permute.xlu0 %998
  %1002 = vset.pattern.permute.xlu0 0
  %1003 = vperm.xlu0 %1002, %v949
  %v1004 = vpop.permute.xlu0 %1003
  %1007 = vset.pattern.permute.xlu0 0
  %1008 = vperm.xlu0 %1007, %v950
  %v1009 = vpop.permute.xlu0 %1008
  %1012 = vset.pattern.permute.xlu0 0
  %1013 = vperm.xlu0 %1012, %v951
  %v1014 = vpop.permute.xlu0 %1013
  %1017 = vset.pattern.permute.xlu0 0
  %1018 = vperm.xlu0 %1017, %v952
  %v1019 = vpop.permute.xlu0 %1018
  %1022 = vset.pattern.permute.xlu0 0
  %1023 = vperm.xlu0 %1022, %v953
  %v1024 = vpop.permute.xlu0 %1023
  %1027 = vset.pattern.permute.xlu0 0
  %1028 = vperm.xlu0 %1027, %v954
  %v1029 = vpop.permute.xlu0 %1028
  %1032 = vset.pattern.permute.xlu0 0
  %1033 = vperm.xlu0 %1032, %v955
  %v1034 = vpop.permute.xlu0 %1033
  %vm1036 = vcmask 261120
  %v1038 = vsel %vm1036, %v924, 0
  %v1041 = vsel %vm1036, %v925, 0
  %v1044 = vsel %vm1036, %v926, 0
  %v1047 = vsel %vm1036, %v927, 0
  %v1050 = vsel %vm1036, %v928, 0
  %v1053 = vsel %vm1036, %v929, 0
  %v1056 = vsel %vm1036, %v930, 0
  %v1059 = vsel %vm1036, %v931, 0
  %v1062 = vsel %vm1036, %v932, 0
  %v1065 = vsel %vm1036, %v933, 0
  %v1068 = vsel %vm1036, %v934, 0
  %v1071 = vsel %vm1036, %v935, 0
  %v1074 = vsel %vm1036, %v936, 0
  %v1077 = vsel %vm1036, %v937, 0
  %v1080 = vsel %vm1036, %v938, 0
  %v1083 = vsel %vm1036, %v939, 0
  %1085 = vmatpush.msra.mxu0 0.0
  %1086 = vmatpush.msra.mxu0 0.0
  %1087 = vmatpush.msra.mxu0 0.0
  %1088 = vmatpush.msra.mxu0 0.0
  %1089 = vmatpush.msra.mxu0 0.0
  %1090 = vmatpush.msra.mxu0 0.0
  %1091 = vmatpush.msra.mxu0 0.0
  %1092 = vmatpush.msra.mxu0 0.0
  %1093 = vmatpush.msra.mxu0 0.0
  %1094 = vmatpush.msra.mxu0 0.0
  %1095 = vmatpush.msra.mxu0 0.0
  %1096 = vmatpush.msra.mxu0 0.0
  %v1097 = vand.u32 %v921, 4294901760
  %1098 = vmatpush.msra.mxu0 %v1097
  %v1099 = vand.u32 %v918, 4294901760
  %1100 = vmatpush.msra.mxu0 %v1099
  %v1101 = vand.u32 %v915, 4294901760
  %1102 = vmatpush.msra.mxu0 %v1101
  %v1103 = vand.u32 %v912, 4294901760
  %1104 = vmatpush.msra.mxu0 %v1103
  %v1105 = vand.u32 %v1038, 4294901760
  %v1106 = vsub.f32 %v1038, %v1105
  %v1107 = vand.u32 %v1106, 4294901760
  %v1108 = vsub.f32 %v1106, %v1107
  %v1109 = vand.u32 %v1108, 4294901760
  %1110 = vmatmul.f32.gmra.mxu0 %v1109
  %v1111 = vpop.f32.mrf.mxu0
  %v1112 = vadd.f32 %v959, %v1111
  %v1113 = vand.u32 %v1041, 4294901760
  %v1114 = vsub.f32 %v1041, %v1113
  %v1115 = vand.u32 %v1114, 4294901760
  %v1116 = vsub.f32 %v1114, %v1115
  %v1117 = vand.u32 %v1116, 4294901760
  %1118 = vmatmul.f32.gmra.mxu0 %v1117
  %v1119 = vpop.f32.mrf.mxu0
  %v1120 = vadd.f32 %v964, %v1119
  %v1121 = vand.u32 %v1044, 4294901760
  %v1122 = vsub.f32 %v1044, %v1121
  %v1123 = vand.u32 %v1122, 4294901760
  %v1124 = vsub.f32 %v1122, %v1123
  %v1125 = vand.u32 %v1124, 4294901760
  %1126 = vmatmul.f32.gmra.mxu0 %v1125
  %v1127 = vpop.f32.mrf.mxu0
  %v1128 = vadd.f32 %v969, %v1127
  %v1129 = vand.u32 %v1047, 4294901760
  %v1130 = vsub.f32 %v1047, %v1129
  %v1131 = vand.u32 %v1130, 4294901760
  %v1132 = vsub.f32 %v1130, %v1131
  %v1133 = vand.u32 %v1132, 4294901760
  %1134 = vmatmul.f32.gmra.mxu0 %v1133
  %v1135 = vpop.f32.mrf.mxu0
  %v1136 = vadd.f32 %v974, %v1135
  %v1137 = vand.u32 %v1050, 4294901760
  %v1138 = vsub.f32 %v1050, %v1137
  %v1139 = vand.u32 %v1138, 4294901760
  %v1140 = vsub.f32 %v1138, %v1139
  %v1141 = vand.u32 %v1140, 4294901760
  %1142 = vmatmul.f32.gmra.mxu0 %v1141
  %v1143 = vpop.f32.mrf.mxu0
  %v1144 = vadd.f32 %v979, %v1143
  %v1145 = vand.u32 %v1053, 4294901760
  %v1146 = vsub.f32 %v1053, %v1145
  %v1147 = vand.u32 %v1146, 4294901760
  %v1148 = vsub.f32 %v1146, %v1147
  %v1149 = vand.u32 %v1148, 4294901760
  %1150 = vmatmul.f32.gmra.mxu0 %v1149
  %v1151 = vpop.f32.mrf.mxu0
  %v1152 = vadd.f32 %v984, %v1151
  %v1153 = vand.u32 %v1056, 4294901760
  %v1154 = vsub.f32 %v1056, %v1153
  %v1155 = vand.u32 %v1154, 4294901760
  %v1156 = vsub.f32 %v1154, %v1155
  %v1157 = vand.u32 %v1156, 4294901760
  %1158 = vmatmul.f32.gmra.mxu0 %v1157
  %v1159 = vpop.f32.mrf.mxu0
  %v1160 = vadd.f32 %v989, %v1159
  %v1161 = vand.u32 %v1059, 4294901760
  %v1162 = vsub.f32 %v1059, %v1161
  %v1163 = vand.u32 %v1162, 4294901760
  %v1164 = vsub.f32 %v1162, %v1163
  %v1165 = vand.u32 %v1164, 4294901760
  %1166 = vmatmul.f32.gmra.mxu0 %v1165
  %v1167 = vpop.f32.mrf.mxu0
  %v1168 = vadd.f32 %v994, %v1167
  %v1169 = vand.u32 %v1062, 4294901760
  %v1170 = vsub.f32 %v1062, %v1169
  %v1171 = vand.u32 %v1170, 4294901760
  %v1172 = vsub.f32 %v1170, %v1171
  %v1173 = vand.u32 %v1172, 4294901760
  %1174 = vmatmul.f32.gmra.mxu0 %v1173
  %v1175 = vpop.f32.mrf.mxu0
  %v1176 = vadd.f32 %v999, %v1175
  %v1177 = vand.u32 %v1065, 4294901760
  %v1178 = vsub.f32 %v1065, %v1177
  %v1179 = vand.u32 %v1178, 4294901760
  %v1180 = vsub.f32 %v1178, %v1179
  %v1181 = vand.u32 %v1180, 4294901760
  %1182 = vmatmul.f32.gmra.mxu0 %v1181
  %v1183 = vpop.f32.mrf.mxu0
  %v1184 = vadd.f32 %v1004, %v1183
  %v1185 = vand.u32 %v1068, 4294901760
  %v1186 = vsub.f32 %v1068, %v1185
  %v1187 = vand.u32 %v1186, 4294901760
  %v1188 = vsub.f32 %v1186, %v1187
  %v1189 = vand.u32 %v1188, 4294901760
  %1190 = vmatmul.f32.gmra.mxu0 %v1189
  %v1191 = vpop.f32.mrf.mxu0
  %v1192 = vadd.f32 %v1009, %v1191
  %v1193 = vand.u32 %v1071, 4294901760
  %v1194 = vsub.f32 %v1071, %v1193
  %v1195 = vand.u32 %v1194, 4294901760
  %v1196 = vsub.f32 %v1194, %v1195
  %v1197 = vand.u32 %v1196, 4294901760
  %1198 = vmatmul.f32.gmra.mxu0 %v1197
  %v1199 = vpop.f32.mrf.mxu0
  %v1200 = vadd.f32 %v1014, %v1199
  %v1201 = vand.u32 %v1074, 4294901760
  %v1202 = vsub.f32 %v1074, %v1201
  %v1203 = vand.u32 %v1202, 4294901760
  %v1204 = vsub.f32 %v1202, %v1203
  %v1205 = vand.u32 %v1204, 4294901760
  %1206 = vmatmul.f32.gmra.mxu0 %v1205
  %v1207 = vpop.f32.mrf.mxu0
  %v1208 = vadd.f32 %v1019, %v1207
  %v1209 = vand.u32 %v1077, 4294901760
  %v1210 = vsub.f32 %v1077, %v1209
  %v1211 = vand.u32 %v1210, 4294901760
  %v1212 = vsub.f32 %v1210, %v1211
  %v1213 = vand.u32 %v1212, 4294901760
  %1214 = vmatmul.f32.gmra.mxu0 %v1213
  %v1215 = vpop.f32.mrf.mxu0
  %v1216 = vadd.f32 %v1024, %v1215
  %v1217 = vand.u32 %v1080, 4294901760
  %v1218 = vsub.f32 %v1080, %v1217
  %v1219 = vand.u32 %v1218, 4294901760
  %v1220 = vsub.f32 %v1218, %v1219
  %v1221 = vand.u32 %v1220, 4294901760
  %1222 = vmatmul.f32.gmra.mxu0 %v1221
  %v1223 = vpop.f32.mrf.mxu0
  %v1224 = vadd.f32 %v1029, %v1223
  %v1225 = vand.u32 %v1083, 4294901760
  %v1226 = vsub.f32 %v1083, %v1225
  %v1227 = vand.u32 %v1226, 4294901760
  %v1228 = vsub.f32 %v1226, %v1227
  %v1229 = vand.u32 %v1228, 4294901760
  %1230 = vmatmul.f32.gmra.mxu0 %v1229
  %v1231 = vpop.f32.mrf.mxu0
  %v1232 = vadd.f32 %v1034, %v1231
  %1233 = vdwg.mxu0
  %1234 = vmatpush.msra.mxu0 0.0
  %1235 = vmatpush.msra.mxu0 0.0
  %1236 = vmatpush.msra.mxu0 0.0
  %1237 = vmatpush.msra.mxu0 0.0
  %1238 = vmatpush.msra.mxu0 0.0
  %1239 = vmatpush.msra.mxu0 0.0
  %1240 = vmatpush.msra.mxu0 0.0
  %1241 = vmatpush.msra.mxu0 0.0
  %1242 = vmatpush.msra.mxu0 0.0
  %1243 = vmatpush.msra.mxu0 0.0
  %1244 = vmatpush.msra.mxu0 0.0
  %1245 = vmatpush.msra.mxu0 0.0
  %v1246 = vand.u32 %v921, 4294901760
  %v1247 = vsub.f32 %v921, %v1246
  %v1248 = vand.u32 %v1247, 4294901760
  %v1249 = vsub.f32 %v1247, %v1248
  %v1250 = vand.u32 %v1249, 4294901760
  %1251 = vmatpush.msra.mxu0 %v1250
  %v1252 = vand.u32 %v918, 4294901760
  %v1253 = vsub.f32 %v918, %v1252
  %v1254 = vand.u32 %v1253, 4294901760
  %v1255 = vsub.f32 %v1253, %v1254
  %v1256 = vand.u32 %v1255, 4294901760
  %1257 = vmatpush.msra.mxu0 %v1256
  %v1258 = vand.u32 %v915, 4294901760
  %v1259 = vsub.f32 %v915, %v1258
  %v1260 = vand.u32 %v1259, 4294901760
  %v1261 = vsub.f32 %v1259, %v1260
  %v1262 = vand.u32 %v1261, 4294901760
  %1263 = vmatpush.msra.mxu0 %v1262
  %v1264 = vand.u32 %v912, 4294901760
  %v1265 = vsub.f32 %v912, %v1264
  %v1266 = vand.u32 %v1265, 4294901760
  %v1267 = vsub.f32 %v1265, %v1266
  %v1268 = vand.u32 %v1267, 4294901760
  %1269 = vmatpush.msra.mxu0 %v1268
  %v1270 = vand.u32 %v1038, 4294901760
  %1271 = vmatmul.f32.gmra.mxu0 %v1270
  %v1272 = vpop.f32.mrf.mxu0
  %v1273 = vadd.f32 %v1112, %v1272
  %v1274 = vand.u32 %v1041, 4294901760
  %1275 = vmatmul.f32.gmra.mxu0 %v1274
  %v1276 = vpop.f32.mrf.mxu0
  %v1277 = vadd.f32 %v1120, %v1276
  %v1278 = vand.u32 %v1044, 4294901760
  %1279 = vmatmul.f32.gmra.mxu0 %v1278
  %v1280 = vpop.f32.mrf.mxu0
  %v1281 = vadd.f32 %v1128, %v1280
  %v1282 = vand.u32 %v1047, 4294901760
  %1283 = vmatmul.f32.gmra.mxu0 %v1282
  %v1284 = vpop.f32.mrf.mxu0
  %v1285 = vadd.f32 %v1136, %v1284
  %v1286 = vand.u32 %v1050, 4294901760
  %1287 = vmatmul.f32.gmra.mxu0 %v1286
  %v1288 = vpop.f32.mrf.mxu0
  %v1289 = vadd.f32 %v1144, %v1288
  %v1290 = vand.u32 %v1053, 4294901760
  %1291 = vmatmul.f32.gmra.mxu0 %v1290
  %v1292 = vpop.f32.mrf.mxu0
  %v1293 = vadd.f32 %v1152, %v1292
  %v1294 = vand.u32 %v1056, 4294901760
  %1295 = vmatmul.f32.gmra.mxu0 %v1294
  %v1296 = vpop.f32.mrf.mxu0
  %v1297 = vadd.f32 %v1160, %v1296
  %v1298 = vand.u32 %v1059, 4294901760
  %1299 = vmatmul.f32.gmra.mxu0 %v1298
  %v1300 = vpop.f32.mrf.mxu0
  %v1301 = vadd.f32 %v1168, %v1300
  %v1302 = vand.u32 %v1062, 4294901760
  %1303 = vmatmul.f32.gmra.mxu0 %v1302
  %v1304 = vpop.f32.mrf.mxu0
  %v1305 = vadd.f32 %v1176, %v1304
  %v1306 = vand.u32 %v1065, 4294901760
  %1307 = vmatmul.f32.gmra.mxu0 %v1306
  %v1308 = vpop.f32.mrf.mxu0
  %v1309 = vadd.f32 %v1184, %v1308
  %v1310 = vand.u32 %v1068, 4294901760
  %1311 = vmatmul.f32.gmra.mxu0 %v1310
  %v1312 = vpop.f32.mrf.mxu0
  %v1313 = vadd.f32 %v1192, %v1312
  %v1314 = vand.u32 %v1071, 4294901760
  %1315 = vmatmul.f32.gmra.mxu0 %v1314
  %v1316 = vpop.f32.mrf.mxu0
  %v1317 = vadd.f32 %v1200, %v1316
  %v1318 = vand.u32 %v1074, 4294901760
  %1319 = vmatmul.f32.gmra.mxu0 %v1318
  %v1320 = vpop.f32.mrf.mxu0
  %v1321 = vadd.f32 %v1208, %v1320
  %v1322 = vand.u32 %v1077, 4294901760
  %1323 = vmatmul.f32.gmra.mxu0 %v1322
  %v1324 = vpop.f32.mrf.mxu0
  %v1325 = vadd.f32 %v1216, %v1324
  %v1326 = vand.u32 %v1080, 4294901760
  %1327 = vmatmul.f32.gmra.mxu0 %v1326
  %v1328 = vpop.f32.mrf.mxu0
  %v1329 = vadd.f32 %v1224, %v1328
  %v1330 = vand.u32 %v1083, 4294901760
  %1331 = vmatmul.f32.gmra.mxu0 %v1330
  %v1332 = vpop.f32.mrf.mxu0
  %v1333 = vadd.f32 %v1232, %v1332
  %1334 = vdwg.mxu0
  %1335 = vmatpush.msra.mxu0 0.0
  %1336 = vmatpush.msra.mxu0 0.0
  %1337 = vmatpush.msra.mxu0 0.0
  %1338 = vmatpush.msra.mxu0 0.0
  %1339 = vmatpush.msra.mxu0 0.0
  %1340 = vmatpush.msra.mxu0 0.0
  %1341 = vmatpush.msra.mxu0 0.0
  %1342 = vmatpush.msra.mxu0 0.0
  %1343 = vmatpush.msra.mxu0 0.0
  %1344 = vmatpush.msra.mxu0 0.0
  %1345 = vmatpush.msra.mxu0 0.0
  %1346 = vmatpush.msra.mxu0 0.0
  %v1347 = vand.u32 %v921, 4294901760
  %v1348 = vsub.f32 %v921, %v1347
  %1349 = vmatpush.msra.mxu0 %v1348
  %v1350 = vand.u32 %v918, 4294901760
  %v1351 = vsub.f32 %v918, %v1350
  %1352 = vmatpush.msra.mxu0 %v1351
  %v1353 = vand.u32 %v915, 4294901760
  %v1354 = vsub.f32 %v915, %v1353
  %1355 = vmatpush.msra.mxu0 %v1354
  %v1356 = vand.u32 %v912, 4294901760
  %v1357 = vsub.f32 %v912, %v1356
  %1358 = vmatpush.msra.mxu0 %v1357
  %v1359 = vand.u32 %v1038, 4294901760
  %v1360 = vsub.f32 %v1038, %v1359
  %1361 = vmatmul.f32.gmra.mxu0 %v1360
  %v1362 = vpop.f32.mrf.mxu0
  %v1363 = vadd.f32 %v1273, %v1362
  %v1364 = vand.u32 %v1041, 4294901760
  %v1365 = vsub.f32 %v1041, %v1364
  %1366 = vmatmul.f32.gmra.mxu0 %v1365
  %v1367 = vpop.f32.mrf.mxu0
  %v1368 = vadd.f32 %v1277, %v1367
  %v1369 = vand.u32 %v1044, 4294901760
  %v1370 = vsub.f32 %v1044, %v1369
  %1371 = vmatmul.f32.gmra.mxu0 %v1370
  %v1372 = vpop.f32.mrf.mxu0
  %v1373 = vadd.f32 %v1281, %v1372
  %v1374 = vand.u32 %v1047, 4294901760
  %v1375 = vsub.f32 %v1047, %v1374
  %1376 = vmatmul.f32.gmra.mxu0 %v1375
  %v1377 = vpop.f32.mrf.mxu0
  %v1378 = vadd.f32 %v1285, %v1377
  %v1379 = vand.u32 %v1050, 4294901760
  %v1380 = vsub.f32 %v1050, %v1379
  %1381 = vmatmul.f32.gmra.mxu0 %v1380
  %v1382 = vpop.f32.mrf.mxu0
  %v1383 = vadd.f32 %v1289, %v1382
  %v1384 = vand.u32 %v1053, 4294901760
  %v1385 = vsub.f32 %v1053, %v1384
  %1386 = vmatmul.f32.gmra.mxu0 %v1385
  %v1387 = vpop.f32.mrf.mxu0
  %v1388 = vadd.f32 %v1293, %v1387
  %v1389 = vand.u32 %v1056, 4294901760
  %v1390 = vsub.f32 %v1056, %v1389
  %1391 = vmatmul.f32.gmra.mxu0 %v1390
  %v1392 = vpop.f32.mrf.mxu0
  %v1393 = vadd.f32 %v1297, %v1392
  %v1394 = vand.u32 %v1059, 4294901760
  %v1395 = vsub.f32 %v1059, %v1394
  %1396 = vmatmul.f32.gmra.mxu0 %v1395
  %v1397 = vpop.f32.mrf.mxu0
  %v1398 = vadd.f32 %v1301, %v1397
  %v1399 = vand.u32 %v1062, 4294901760
  %v1400 = vsub.f32 %v1062, %v1399
  %1401 = vmatmul.f32.gmra.mxu0 %v1400
  %v1402 = vpop.f32.mrf.mxu0
  %v1403 = vadd.f32 %v1305, %v1402
  %v1404 = vand.u32 %v1065, 4294901760
  %v1405 = vsub.f32 %v1065, %v1404
  %1406 = vmatmul.f32.gmra.mxu0 %v1405
  %v1407 = vpop.f32.mrf.mxu0
  %v1408 = vadd.f32 %v1309, %v1407
  %v1409 = vand.u32 %v1068, 4294901760
  %v1410 = vsub.f32 %v1068, %v1409
  %1411 = vmatmul.f32.gmra.mxu0 %v1410
  %v1412 = vpop.f32.mrf.mxu0
  %v1413 = vadd.f32 %v1313, %v1412
  %v1414 = vand.u32 %v1071, 4294901760
  %v1415 = vsub.f32 %v1071, %v1414
  %1416 = vmatmul.f32.gmra.mxu0 %v1415
  %v1417 = vpop.f32.mrf.mxu0
  %v1418 = vadd.f32 %v1317, %v1417
  %v1419 = vand.u32 %v1074, 4294901760
  %v1420 = vsub.f32 %v1074, %v1419
  %1421 = vmatmul.f32.gmra.mxu0 %v1420
  %v1422 = vpop.f32.mrf.mxu0
  %v1423 = vadd.f32 %v1321, %v1422
  %v1424 = vand.u32 %v1077, 4294901760
  %v1425 = vsub.f32 %v1077, %v1424
  %1426 = vmatmul.f32.gmra.mxu0 %v1425
  %v1427 = vpop.f32.mrf.mxu0
  %v1428 = vadd.f32 %v1325, %v1427
  %v1429 = vand.u32 %v1080, 4294901760
  %v1430 = vsub.f32 %v1080, %v1429
  %1431 = vmatmul.f32.gmra.mxu0 %v1430
  %v1432 = vpop.f32.mrf.mxu0
  %v1433 = vadd.f32 %v1329, %v1432
  %v1434 = vand.u32 %v1083, 4294901760
  %v1435 = vsub.f32 %v1083, %v1434
  %1436 = vmatmul.f32.gmra.mxu0 %v1435
  %v1437 = vpop.f32.mrf.mxu0
  %v1438 = vadd.f32 %v1333, %v1437
  %1439 = vdwg.mxu0
  %1440 = vmatpush.msra.mxu0 0.0
  %1441 = vmatpush.msra.mxu0 0.0
  %1442 = vmatpush.msra.mxu0 0.0
  %1443 = vmatpush.msra.mxu0 0.0
  %1444 = vmatpush.msra.mxu0 0.0
  %1445 = vmatpush.msra.mxu0 0.0
  %1446 = vmatpush.msra.mxu0 0.0
  %1447 = vmatpush.msra.mxu0 0.0
  %1448 = vmatpush.msra.mxu0 0.0
  %1449 = vmatpush.msra.mxu0 0.0
  %1450 = vmatpush.msra.mxu0 0.0
  %1451 = vmatpush.msra.mxu0 0.0
  %v1452 = vand.u32 %v921, 4294901760
  %1453 = vmatpush.msra.mxu0 %v1452
  %v1454 = vand.u32 %v918, 4294901760
  %1455 = vmatpush.msra.mxu0 %v1454
  %v1456 = vand.u32 %v915, 4294901760
  %1457 = vmatpush.msra.mxu0 %v1456
  %v1458 = vand.u32 %v912, 4294901760
  %1459 = vmatpush.msra.mxu0 %v1458
  %v1460 = vand.u32 %v1038, 4294901760
  %v1461 = vsub.f32 %v1038, %v1460
  %v1462 = vand.u32 %v1461, 4294901760
  %1463 = vmatmul.f32.gmra.mxu0 %v1462
  %v1464 = vpop.f32.mrf.mxu0
  %v1465 = vadd.f32 %v1363, %v1464
  %v1466 = vand.u32 %v1041, 4294901760
  %v1467 = vsub.f32 %v1041, %v1466
  %v1468 = vand.u32 %v1467, 4294901760
  %1469 = vmatmul.f32.gmra.mxu0 %v1468
  %v1470 = vpop.f32.mrf.mxu0
  %v1471 = vadd.f32 %v1368, %v1470
  %v1472 = vand.u32 %v1044, 4294901760
  %v1473 = vsub.f32 %v1044, %v1472
  %v1474 = vand.u32 %v1473, 4294901760
  %1475 = vmatmul.f32.gmra.mxu0 %v1474
  %v1476 = vpop.f32.mrf.mxu0
  %v1477 = vadd.f32 %v1373, %v1476
  %v1478 = vand.u32 %v1047, 4294901760
  %v1479 = vsub.f32 %v1047, %v1478
  %v1480 = vand.u32 %v1479, 4294901760
  %1481 = vmatmul.f32.gmra.mxu0 %v1480
  %v1482 = vpop.f32.mrf.mxu0
  %v1483 = vadd.f32 %v1378, %v1482
  %v1484 = vand.u32 %v1050, 4294901760
  %v1485 = vsub.f32 %v1050, %v1484
  %v1486 = vand.u32 %v1485, 4294901760
  %1487 = vmatmul.f32.gmra.mxu0 %v1486
  %v1488 = vpop.f32.mrf.mxu0
  %v1489 = vadd.f32 %v1383, %v1488
  %v1490 = vand.u32 %v1053, 4294901760
  %v1491 = vsub.f32 %v1053, %v1490
  %v1492 = vand.u32 %v1491, 4294901760
  %1493 = vmatmul.f32.gmra.mxu0 %v1492
  %v1494 = vpop.f32.mrf.mxu0
  %v1495 = vadd.f32 %v1388, %v1494
  %v1496 = vand.u32 %v1056, 4294901760
  %v1497 = vsub.f32 %v1056, %v1496
  %v1498 = vand.u32 %v1497, 4294901760
  %1499 = vmatmul.f32.gmra.mxu0 %v1498
  %v1500 = vpop.f32.mrf.mxu0
  %v1501 = vadd.f32 %v1393, %v1500
  %v1502 = vand.u32 %v1059, 4294901760
  %v1503 = vsub.f32 %v1059, %v1502
  %v1504 = vand.u32 %v1503, 4294901760
  %1505 = vmatmul.f32.gmra.mxu0 %v1504
  %v1506 = vpop.f32.mrf.mxu0
  %v1507 = vadd.f32 %v1398, %v1506
  %v1508 = vand.u32 %v1062, 4294901760
  %v1509 = vsub.f32 %v1062, %v1508
  %v1510 = vand.u32 %v1509, 4294901760
  %1511 = vmatmul.f32.gmra.mxu0 %v1510
  %v1512 = vpop.f32.mrf.mxu0
  %v1513 = vadd.f32 %v1403, %v1512
  %v1514 = vand.u32 %v1065, 4294901760
  %v1515 = vsub.f32 %v1065, %v1514
  %v1516 = vand.u32 %v1515, 4294901760
  %1517 = vmatmul.f32.gmra.mxu0 %v1516
  %v1518 = vpop.f32.mrf.mxu0
  %v1519 = vadd.f32 %v1408, %v1518
  %v1520 = vand.u32 %v1068, 4294901760
  %v1521 = vsub.f32 %v1068, %v1520
  %v1522 = vand.u32 %v1521, 4294901760
  %1523 = vmatmul.f32.gmra.mxu0 %v1522
  %v1524 = vpop.f32.mrf.mxu0
  %v1525 = vadd.f32 %v1413, %v1524
  %v1526 = vand.u32 %v1071, 4294901760
  %v1527 = vsub.f32 %v1071, %v1526
  %v1528 = vand.u32 %v1527, 4294901760
  %1529 = vmatmul.f32.gmra.mxu0 %v1528
  %v1530 = vpop.f32.mrf.mxu0
  %v1531 = vadd.f32 %v1418, %v1530
  %v1532 = vand.u32 %v1074, 4294901760
  %v1533 = vsub.f32 %v1074, %v1532
  %v1534 = vand.u32 %v1533, 4294901760
  %1535 = vmatmul.f32.gmra.mxu0 %v1534
  %v1536 = vpop.f32.mrf.mxu0
  %v1537 = vadd.f32 %v1423, %v1536
  %v1538 = vand.u32 %v1077, 4294901760
  %v1539 = vsub.f32 %v1077, %v1538
  %v1540 = vand.u32 %v1539, 4294901760
  %1541 = vmatmul.f32.gmra.mxu0 %v1540
  %v1542 = vpop.f32.mrf.mxu0
  %v1543 = vadd.f32 %v1428, %v1542
  %v1544 = vand.u32 %v1080, 4294901760
  %v1545 = vsub.f32 %v1080, %v1544
  %v1546 = vand.u32 %v1545, 4294901760
  %1547 = vmatmul.f32.gmra.mxu0 %v1546
  %v1548 = vpop.f32.mrf.mxu0
  %v1549 = vadd.f32 %v1433, %v1548
  %v1550 = vand.u32 %v1083, 4294901760
  %v1551 = vsub.f32 %v1083, %v1550
  %v1552 = vand.u32 %v1551, 4294901760
  %1553 = vmatmul.f32.gmra.mxu0 %v1552
  %v1554 = vpop.f32.mrf.mxu0
  %v1555 = vadd.f32 %v1438, %v1554
  %1556 = vdwg.mxu0
  %1557 = vmatpush.msra.mxu0 0.0
  %1558 = vmatpush.msra.mxu0 0.0
  %1559 = vmatpush.msra.mxu0 0.0
  %1560 = vmatpush.msra.mxu0 0.0
  %1561 = vmatpush.msra.mxu0 0.0
  %1562 = vmatpush.msra.mxu0 0.0
  %1563 = vmatpush.msra.mxu0 0.0
  %1564 = vmatpush.msra.mxu0 0.0
  %1565 = vmatpush.msra.mxu0 0.0
  %1566 = vmatpush.msra.mxu0 0.0
  %1567 = vmatpush.msra.mxu0 0.0
  %1568 = vmatpush.msra.mxu0 0.0
  %v1569 = vand.u32 %v921, 4294901760
  %v1570 = vsub.f32 %v921, %v1569
  %v1571 = vand.u32 %v1570, 4294901760
  %1572 = vmatpush.msra.mxu0 %v1571
  %v1573 = vand.u32 %v918, 4294901760
  %v1574 = vsub.f32 %v918, %v1573
  %v1575 = vand.u32 %v1574, 4294901760
  %1576 = vmatpush.msra.mxu0 %v1575
  %v1577 = vand.u32 %v915, 4294901760
  %v1578 = vsub.f32 %v915, %v1577
  %v1579 = vand.u32 %v1578, 4294901760
  %1580 = vmatpush.msra.mxu0 %v1579
  %v1581 = vand.u32 %v912, 4294901760
  %v1582 = vsub.f32 %v912, %v1581
  %v1583 = vand.u32 %v1582, 4294901760
  %1584 = vmatpush.msra.mxu0 %v1583
  %v1585 = vand.u32 %v1038, 4294901760
  %1586 = vmatmul.f32.gmra.mxu0 %v1585
  %v1587 = vpop.f32.mrf.mxu0
  %v1588 = vadd.f32 %v1465, %v1587
  %v1589 = vand.u32 %v1041, 4294901760
  %1590 = vmatmul.f32.gmra.mxu0 %v1589
  %v1591 = vpop.f32.mrf.mxu0
  %v1592 = vadd.f32 %v1471, %v1591
  %v1593 = vand.u32 %v1044, 4294901760
  %1594 = vmatmul.f32.gmra.mxu0 %v1593
  %v1595 = vpop.f32.mrf.mxu0
  %v1596 = vadd.f32 %v1477, %v1595
  %v1597 = vand.u32 %v1047, 4294901760
  %1598 = vmatmul.f32.gmra.mxu0 %v1597
  %v1599 = vpop.f32.mrf.mxu0
  %v1600 = vadd.f32 %v1483, %v1599
  %v1601 = vand.u32 %v1050, 4294901760
  %1602 = vmatmul.f32.gmra.mxu0 %v1601
  %v1603 = vpop.f32.mrf.mxu0
  %v1604 = vadd.f32 %v1489, %v1603
  %v1605 = vand.u32 %v1053, 4294901760
  %1606 = vmatmul.f32.gmra.mxu0 %v1605
  %v1607 = vpop.f32.mrf.mxu0
  %v1608 = vadd.f32 %v1495, %v1607
  %v1609 = vand.u32 %v1056, 4294901760
  %1610 = vmatmul.f32.gmra.mxu0 %v1609
  %v1611 = vpop.f32.mrf.mxu0
  %v1612 = vadd.f32 %v1501, %v1611
  %v1613 = vand.u32 %v1059, 4294901760
  %1614 = vmatmul.f32.gmra.mxu0 %v1613
  %v1615 = vpop.f32.mrf.mxu0
  %v1616 = vadd.f32 %v1507, %v1615
  %v1617 = vand.u32 %v1062, 4294901760
  %1618 = vmatmul.f32.gmra.mxu0 %v1617
  %v1619 = vpop.f32.mrf.mxu0
  %v1620 = vadd.f32 %v1513, %v1619
  %v1621 = vand.u32 %v1065, 4294901760
  %1622 = vmatmul.f32.gmra.mxu0 %v1621
  %v1623 = vpop.f32.mrf.mxu0
  %v1624 = vadd.f32 %v1519, %v1623
  %v1625 = vand.u32 %v1068, 4294901760
  %1626 = vmatmul.f32.gmra.mxu0 %v1625
  %v1627 = vpop.f32.mrf.mxu0
  %v1628 = vadd.f32 %v1525, %v1627
  %v1629 = vand.u32 %v1071, 4294901760
  %1630 = vmatmul.f32.gmra.mxu0 %v1629
  %v1631 = vpop.f32.mrf.mxu0
  %v1632 = vadd.f32 %v1531, %v1631
  %v1633 = vand.u32 %v1074, 4294901760
  %1634 = vmatmul.f32.gmra.mxu0 %v1633
  %v1635 = vpop.f32.mrf.mxu0
  %v1636 = vadd.f32 %v1537, %v1635
  %v1637 = vand.u32 %v1077, 4294901760
  %1638 = vmatmul.f32.gmra.mxu0 %v1637
  %v1639 = vpop.f32.mrf.mxu0
  %v1640 = vadd.f32 %v1543, %v1639
  %v1641 = vand.u32 %v1080, 4294901760
  %1642 = vmatmul.f32.gmra.mxu0 %v1641
  %v1643 = vpop.f32.mrf.mxu0
  %v1644 = vadd.f32 %v1549, %v1643
  %v1645 = vand.u32 %v1083, 4294901760
  %1646 = vmatmul.f32.gmra.mxu0 %v1645
  %v1647 = vpop.f32.mrf.mxu0
  %v1648 = vadd.f32 %v1555, %v1647
  %1649 = vdwg.mxu0
  %1650 = vmatpush.msra.mxu0 0.0
  %1651 = vmatpush.msra.mxu0 0.0
  %1652 = vmatpush.msra.mxu0 0.0
  %1653 = vmatpush.msra.mxu0 0.0
  %1654 = vmatpush.msra.mxu0 0.0
  %1655 = vmatpush.msra.mxu0 0.0
  %1656 = vmatpush.msra.mxu0 0.0
  %1657 = vmatpush.msra.mxu0 0.0
  %1658 = vmatpush.msra.mxu0 0.0
  %1659 = vmatpush.msra.mxu0 0.0
  %1660 = vmatpush.msra.mxu0 0.0
  %1661 = vmatpush.msra.mxu0 0.0
  %v1662 = vand.u32 %v921, 4294901760
  %1663 = vmatpush.msra.mxu0 %v1662
  %v1664 = vand.u32 %v918, 4294901760
  %1665 = vmatpush.msra.mxu0 %v1664
  %v1666 = vand.u32 %v915, 4294901760
  %1667 = vmatpush.msra.mxu0 %v1666
  %v1668 = vand.u32 %v912, 4294901760
  %1669 = vmatpush.msra.mxu0 %v1668
  %v1670 = vand.u32 %v1038, 4294901760
  %1671 = vmatmul.f32.gmra.mxu0 %v1670
  %v1672 = vpop.f32.mrf.mxu0
  %v1673 = vadd.f32 %v1588, %v1672
  %v1674 = vand.u32 %v1041, 4294901760
  %1675 = vmatmul.f32.gmra.mxu0 %v1674
  %v1676 = vpop.f32.mrf.mxu0
  %v1677 = vadd.f32 %v1592, %v1676
  %v1678 = vand.u32 %v1044, 4294901760
  %1679 = vmatmul.f32.gmra.mxu0 %v1678
  %v1680 = vpop.f32.mrf.mxu0
  %v1681 = vadd.f32 %v1596, %v1680
  %v1682 = vand.u32 %v1047, 4294901760
  %1683 = vmatmul.f32.gmra.mxu0 %v1682
  %v1684 = vpop.f32.mrf.mxu0
  %v1685 = vadd.f32 %v1600, %v1684
  %v1686 = vand.u32 %v1050, 4294901760
  %1687 = vmatmul.f32.gmra.mxu0 %v1686
  %v1688 = vpop.f32.mrf.mxu0
  %v1689 = vadd.f32 %v1604, %v1688
  %v1690 = vand.u32 %v1053, 4294901760
  %1691 = vmatmul.f32.gmra.mxu0 %v1690
  %v1692 = vpop.f32.mrf.mxu0
  %v1693 = vadd.f32 %v1608, %v1692
  %v1694 = vand.u32 %v1056, 4294901760
  %1695 = vmatmul.f32.gmra.mxu0 %v1694
  %v1696 = vpop.f32.mrf.mxu0
  %v1697 = vadd.f32 %v1612, %v1696
  %v1698 = vand.u32 %v1059, 4294901760
  %1699 = vmatmul.f32.gmra.mxu0 %v1698
  %v1700 = vpop.f32.mrf.mxu0
  %v1701 = vadd.f32 %v1616, %v1700
  %v1702 = vand.u32 %v1062, 4294901760
  %1703 = vmatmul.f32.gmra.mxu0 %v1702
  %v1704 = vpop.f32.mrf.mxu0
  %v1705 = vadd.f32 %v1620, %v1704
  %v1706 = vand.u32 %v1065, 4294901760
  %1707 = vmatmul.f32.gmra.mxu0 %v1706
  %v1708 = vpop.f32.mrf.mxu0
  %v1709 = vadd.f32 %v1624, %v1708
  %v1710 = vand.u32 %v1068, 4294901760
  %1711 = vmatmul.f32.gmra.mxu0 %v1710
  %v1712 = vpop.f32.mrf.mxu0
  %v1713 = vadd.f32 %v1628, %v1712
  %v1714 = vand.u32 %v1071, 4294901760
  %1715 = vmatmul.f32.gmra.mxu0 %v1714
  %v1716 = vpop.f32.mrf.mxu0
  %v1717 = vadd.f32 %v1632, %v1716
  %v1718 = vand.u32 %v1074, 4294901760
  %1719 = vmatmul.f32.gmra.mxu0 %v1718
  %v1720 = vpop.f32.mrf.mxu0
  %v1721 = vadd.f32 %v1636, %v1720
  %v1722 = vand.u32 %v1077, 4294901760
  %1723 = vmatmul.f32.gmra.mxu0 %v1722
  %v1724 = vpop.f32.mrf.mxu0
  %v1725 = vadd.f32 %v1640, %v1724
  %v1726 = vand.u32 %v1080, 4294901760
  %1727 = vmatmul.f32.gmra.mxu0 %v1726
  %v1728 = vpop.f32.mrf.mxu0
  %v1729 = vadd.f32 %v1644, %v1728
  %v1730 = vand.u32 %v1083, 4294901760
  %1731 = vmatmul.f32.gmra.mxu0 %v1730
  %v1732 = vpop.f32.mrf.mxu0
  %v1733 = vadd.f32 %v1648, %v1732
  %1734 = vdwg.mxu0
  %1735 = vmatpush.msra.mxu0 0.0
  %1736 = vmatpush.msra.mxu0 0.0
  %1737 = vmatpush.msra.mxu0 0.0
  %1738 = vmatpush.msra.mxu0 0.0
  %1739 = vmatpush.msra.mxu0 0.0
  %1740 = vmatpush.msra.mxu0 0.0
  %1741 = vmatpush.msra.mxu0 0.0
  %1742 = vmatpush.msra.mxu0 0.0
  %1743 = vmatpush.msra.mxu0 0.0
  %1744 = vmatpush.msra.mxu0 0.0
  %1745 = vmatpush.msra.mxu0 0.0
  %1746 = vmatpush.msra.mxu0 0.0
  %v1747 = vand.u32 %v922, 4294901760
  %1748 = vmatpush.msra.mxu0 %v1747
  %v1749 = vand.u32 %v919, 4294901760
  %1750 = vmatpush.msra.mxu0 %v1749
  %v1751 = vand.u32 %v916, 4294901760
  %1752 = vmatpush.msra.mxu0 %v1751
  %v1753 = vand.u32 %v913, 4294901760
  %1754 = vmatpush.msra.mxu0 %v1753
  %v1755 = vand.u32 %v1038, 4294901760
  %v1756 = vsub.f32 %v1038, %v1755
  %v1757 = vand.u32 %v1756, 4294901760
  %v1758 = vsub.f32 %v1756, %v1757
  %v1759 = vand.u32 %v1758, 4294901760
  %1760 = vmatmul.f32.gmra.mxu0 %v1759
  %v1761 = vpop.f32.mrf.mxu0
  %v1762 = vadd.f32 %v959, %v1761
  %v1763 = vand.u32 %v1041, 4294901760
  %v1764 = vsub.f32 %v1041, %v1763
  %v1765 = vand.u32 %v1764, 4294901760
  %v1766 = vsub.f32 %v1764, %v1765
  %v1767 = vand.u32 %v1766, 4294901760
  %1768 = vmatmul.f32.gmra.mxu0 %v1767
  %v1769 = vpop.f32.mrf.mxu0
  %v1770 = vadd.f32 %v964, %v1769
  %v1771 = vand.u32 %v1044, 4294901760
  %v1772 = vsub.f32 %v1044, %v1771
  %v1773 = vand.u32 %v1772, 4294901760
  %v1774 = vsub.f32 %v1772, %v1773
  %v1775 = vand.u32 %v1774, 4294901760
  %1776 = vmatmul.f32.gmra.mxu0 %v1775
  %v1777 = vpop.f32.mrf.mxu0
  %v1778 = vadd.f32 %v969, %v1777
  %v1779 = vand.u32 %v1047, 4294901760
  %v1780 = vsub.f32 %v1047, %v1779
  %v1781 = vand.u32 %v1780, 4294901760
  %v1782 = vsub.f32 %v1780, %v1781
  %v1783 = vand.u32 %v1782, 4294901760
  %1784 = vmatmul.f32.gmra.mxu0 %v1783
  %v1785 = vpop.f32.mrf.mxu0
  %v1786 = vadd.f32 %v974, %v1785
  %v1787 = vand.u32 %v1050, 4294901760
  %v1788 = vsub.f32 %v1050, %v1787
  %v1789 = vand.u32 %v1788, 4294901760
  %v1790 = vsub.f32 %v1788, %v1789
  %v1791 = vand.u32 %v1790, 4294901760
  %1792 = vmatmul.f32.gmra.mxu0 %v1791
  %v1793 = vpop.f32.mrf.mxu0
  %v1794 = vadd.f32 %v979, %v1793
  %v1795 = vand.u32 %v1053, 4294901760
  %v1796 = vsub.f32 %v1053, %v1795
  %v1797 = vand.u32 %v1796, 4294901760
  %v1798 = vsub.f32 %v1796, %v1797
  %v1799 = vand.u32 %v1798, 4294901760
  %1800 = vmatmul.f32.gmra.mxu0 %v1799
  %v1801 = vpop.f32.mrf.mxu0
  %v1802 = vadd.f32 %v984, %v1801
  %v1803 = vand.u32 %v1056, 4294901760
  %v1804 = vsub.f32 %v1056, %v1803
  %v1805 = vand.u32 %v1804, 4294901760
  %v1806 = vsub.f32 %v1804, %v1805
  %v1807 = vand.u32 %v1806, 4294901760
  %1808 = vmatmul.f32.gmra.mxu0 %v1807
  %v1809 = vpop.f32.mrf.mxu0
  %v1810 = vadd.f32 %v989, %v1809
  %v1811 = vand.u32 %v1059, 4294901760
  %v1812 = vsub.f32 %v1059, %v1811
  %v1813 = vand.u32 %v1812, 4294901760
  %v1814 = vsub.f32 %v1812, %v1813
  %v1815 = vand.u32 %v1814, 4294901760
  %1816 = vmatmul.f32.gmra.mxu0 %v1815
  %v1817 = vpop.f32.mrf.mxu0
  %v1818 = vadd.f32 %v994, %v1817
  %v1819 = vand.u32 %v1062, 4294901760
  %v1820 = vsub.f32 %v1062, %v1819
  %v1821 = vand.u32 %v1820, 4294901760
  %v1822 = vsub.f32 %v1820, %v1821
  %v1823 = vand.u32 %v1822, 4294901760
  %1824 = vmatmul.f32.gmra.mxu0 %v1823
  %v1825 = vpop.f32.mrf.mxu0
  %v1826 = vadd.f32 %v999, %v1825
  %v1827 = vand.u32 %v1065, 4294901760
  %v1828 = vsub.f32 %v1065, %v1827
  %v1829 = vand.u32 %v1828, 4294901760
  %v1830 = vsub.f32 %v1828, %v1829
  %v1831 = vand.u32 %v1830, 4294901760
  %1832 = vmatmul.f32.gmra.mxu0 %v1831
  %v1833 = vpop.f32.mrf.mxu0
  %v1834 = vadd.f32 %v1004, %v1833
  %v1835 = vand.u32 %v1068, 4294901760
  %v1836 = vsub.f32 %v1068, %v1835
  %v1837 = vand.u32 %v1836, 4294901760
  %v1838 = vsub.f32 %v1836, %v1837
  %v1839 = vand.u32 %v1838, 4294901760
  %1840 = vmatmul.f32.gmra.mxu0 %v1839
  %v1841 = vpop.f32.mrf.mxu0
  %v1842 = vadd.f32 %v1009, %v1841
  %v1843 = vand.u32 %v1071, 4294901760
  %v1844 = vsub.f32 %v1071, %v1843
  %v1845 = vand.u32 %v1844, 4294901760
  %v1846 = vsub.f32 %v1844, %v1845
  %v1847 = vand.u32 %v1846, 4294901760
  %1848 = vmatmul.f32.gmra.mxu0 %v1847
  %v1849 = vpop.f32.mrf.mxu0
  %v1850 = vadd.f32 %v1014, %v1849
  %v1851 = vand.u32 %v1074, 4294901760
  %v1852 = vsub.f32 %v1074, %v1851
  %v1853 = vand.u32 %v1852, 4294901760
  %v1854 = vsub.f32 %v1852, %v1853
  %v1855 = vand.u32 %v1854, 4294901760
  %1856 = vmatmul.f32.gmra.mxu0 %v1855
  %v1857 = vpop.f32.mrf.mxu0
  %v1858 = vadd.f32 %v1019, %v1857
  %v1859 = vand.u32 %v1077, 4294901760
  %v1860 = vsub.f32 %v1077, %v1859
  %v1861 = vand.u32 %v1860, 4294901760
  %v1862 = vsub.f32 %v1860, %v1861
  %v1863 = vand.u32 %v1862, 4294901760
  %1864 = vmatmul.f32.gmra.mxu0 %v1863
  %v1865 = vpop.f32.mrf.mxu0
  %v1866 = vadd.f32 %v1024, %v1865
  %v1867 = vand.u32 %v1080, 4294901760
  %v1868 = vsub.f32 %v1080, %v1867
  %v1869 = vand.u32 %v1868, 4294901760
  %v1870 = vsub.f32 %v1868, %v1869
  %v1871 = vand.u32 %v1870, 4294901760
  %1872 = vmatmul.f32.gmra.mxu0 %v1871
  %v1873 = vpop.f32.mrf.mxu0
  %v1874 = vadd.f32 %v1029, %v1873
  %v1875 = vand.u32 %v1083, 4294901760
  %v1876 = vsub.f32 %v1083, %v1875
  %v1877 = vand.u32 %v1876, 4294901760
  %v1878 = vsub.f32 %v1876, %v1877
  %v1879 = vand.u32 %v1878, 4294901760
  %1880 = vmatmul.f32.gmra.mxu0 %v1879
  %v1881 = vpop.f32.mrf.mxu0
  %v1882 = vadd.f32 %v1034, %v1881
  %1883 = vdwg.mxu0
  %1884 = vmatpush.msra.mxu0 0.0
  %1885 = vmatpush.msra.mxu0 0.0
  %1886 = vmatpush.msra.mxu0 0.0
  %1887 = vmatpush.msra.mxu0 0.0
  %1888 = vmatpush.msra.mxu0 0.0
  %1889 = vmatpush.msra.mxu0 0.0
  %1890 = vmatpush.msra.mxu0 0.0
  %1891 = vmatpush.msra.mxu0 0.0
  %1892 = vmatpush.msra.mxu0 0.0
  %1893 = vmatpush.msra.mxu0 0.0
  %1894 = vmatpush.msra.mxu0 0.0
  %1895 = vmatpush.msra.mxu0 0.0
  %v1896 = vand.u32 %v922, 4294901760
  %v1897 = vsub.f32 %v922, %v1896
  %v1898 = vand.u32 %v1897, 4294901760
  %v1899 = vsub.f32 %v1897, %v1898
  %v1900 = vand.u32 %v1899, 4294901760
  %1901 = vmatpush.msra.mxu0 %v1900
  %v1902 = vand.u32 %v919, 4294901760
  %v1903 = vsub.f32 %v919, %v1902
  %v1904 = vand.u32 %v1903, 4294901760
  %v1905 = vsub.f32 %v1903, %v1904
  %v1906 = vand.u32 %v1905, 4294901760
  %1907 = vmatpush.msra.mxu0 %v1906
  %v1908 = vand.u32 %v916, 4294901760
  %v1909 = vsub.f32 %v916, %v1908
  %v1910 = vand.u32 %v1909, 4294901760
  %v1911 = vsub.f32 %v1909, %v1910
  %v1912 = vand.u32 %v1911, 4294901760
  %1913 = vmatpush.msra.mxu0 %v1912
  %v1914 = vand.u32 %v913, 4294901760
  %v1915 = vsub.f32 %v913, %v1914
  %v1916 = vand.u32 %v1915, 4294901760
  %v1917 = vsub.f32 %v1915, %v1916
  %v1918 = vand.u32 %v1917, 4294901760
  %1919 = vmatpush.msra.mxu0 %v1918
  %v1920 = vand.u32 %v1038, 4294901760
  %1921 = vmatmul.f32.gmra.mxu0 %v1920
  %v1922 = vpop.f32.mrf.mxu0
  %v1923 = vadd.f32 %v1762, %v1922
  %v1924 = vand.u32 %v1041, 4294901760
  %1925 = vmatmul.f32.gmra.mxu0 %v1924
  %v1926 = vpop.f32.mrf.mxu0
  %v1927 = vadd.f32 %v1770, %v1926
  %v1928 = vand.u32 %v1044, 4294901760
  %1929 = vmatmul.f32.gmra.mxu0 %v1928
  %v1930 = vpop.f32.mrf.mxu0
  %v1931 = vadd.f32 %v1778, %v1930
  %v1932 = vand.u32 %v1047, 4294901760
  %1933 = vmatmul.f32.gmra.mxu0 %v1932
  %v1934 = vpop.f32.mrf.mxu0
  %v1935 = vadd.f32 %v1786, %v1934
  %v1936 = vand.u32 %v1050, 4294901760
  %1937 = vmatmul.f32.gmra.mxu0 %v1936
  %v1938 = vpop.f32.mrf.mxu0
  %v1939 = vadd.f32 %v1794, %v1938
  %v1940 = vand.u32 %v1053, 4294901760
  %1941 = vmatmul.f32.gmra.mxu0 %v1940
  %v1942 = vpop.f32.mrf.mxu0
  %v1943 = vadd.f32 %v1802, %v1942
  %v1944 = vand.u32 %v1056, 4294901760
  %1945 = vmatmul.f32.gmra.mxu0 %v1944
  %v1946 = vpop.f32.mrf.mxu0
  %v1947 = vadd.f32 %v1810, %v1946
  %v1948 = vand.u32 %v1059, 4294901760
  %1949 = vmatmul.f32.gmra.mxu0 %v1948
  %v1950 = vpop.f32.mrf.mxu0
  %v1951 = vadd.f32 %v1818, %v1950
  %v1952 = vand.u32 %v1062, 4294901760
  %1953 = vmatmul.f32.gmra.mxu0 %v1952
  %v1954 = vpop.f32.mrf.mxu0
  %v1955 = vadd.f32 %v1826, %v1954
  %v1956 = vand.u32 %v1065, 4294901760
  %1957 = vmatmul.f32.gmra.mxu0 %v1956
  %v1958 = vpop.f32.mrf.mxu0
  %v1959 = vadd.f32 %v1834, %v1958
  %v1960 = vand.u32 %v1068, 4294901760
  %1961 = vmatmul.f32.gmra.mxu0 %v1960
  %v1962 = vpop.f32.mrf.mxu0
  %v1963 = vadd.f32 %v1842, %v1962
  %v1964 = vand.u32 %v1071, 4294901760
  %1965 = vmatmul.f32.gmra.mxu0 %v1964
  %v1966 = vpop.f32.mrf.mxu0
  %v1967 = vadd.f32 %v1850, %v1966
  %v1968 = vand.u32 %v1074, 4294901760
  %1969 = vmatmul.f32.gmra.mxu0 %v1968
  %v1970 = vpop.f32.mrf.mxu0
  %v1971 = vadd.f32 %v1858, %v1970
  %v1972 = vand.u32 %v1077, 4294901760
  %1973 = vmatmul.f32.gmra.mxu0 %v1972
  %v1974 = vpop.f32.mrf.mxu0
  %v1975 = vadd.f32 %v1866, %v1974
  %v1976 = vand.u32 %v1080, 4294901760
  %1977 = vmatmul.f32.gmra.mxu0 %v1976
  %v1978 = vpop.f32.mrf.mxu0
  %v1979 = vadd.f32 %v1874, %v1978
  %v1980 = vand.u32 %v1083, 4294901760
  %1981 = vmatmul.f32.gmra.mxu0 %v1980
  %v1982 = vpop.f32.mrf.mxu0
  %v1983 = vadd.f32 %v1882, %v1982
  %1984 = vdwg.mxu0
  %1985 = vmatpush.msra.mxu0 0.0
  %1986 = vmatpush.msra.mxu0 0.0
  %1987 = vmatpush.msra.mxu0 0.0
  %1988 = vmatpush.msra.mxu0 0.0
  %1989 = vmatpush.msra.mxu0 0.0
  %1990 = vmatpush.msra.mxu0 0.0
  %1991 = vmatpush.msra.mxu0 0.0
  %1992 = vmatpush.msra.mxu0 0.0
  %1993 = vmatpush.msra.mxu0 0.0
  %1994 = vmatpush.msra.mxu0 0.0
  %1995 = vmatpush.msra.mxu0 0.0
  %1996 = vmatpush.msra.mxu0 0.0
  %v1997 = vand.u32 %v922, 4294901760
  %v1998 = vsub.f32 %v922, %v1997
  %1999 = vmatpush.msra.mxu0 %v1998
  %v2000 = vand.u32 %v919, 4294901760
  %v2001 = vsub.f32 %v919, %v2000
  %2002 = vmatpush.msra.mxu0 %v2001
  %v2003 = vand.u32 %v916, 4294901760
  %v2004 = vsub.f32 %v916, %v2003
  %2005 = vmatpush.msra.mxu0 %v2004
  %v2006 = vand.u32 %v913, 4294901760
  %v2007 = vsub.f32 %v913, %v2006
  %2008 = vmatpush.msra.mxu0 %v2007
  %v2009 = vand.u32 %v1038, 4294901760
  %v2010 = vsub.f32 %v1038, %v2009
  %2011 = vmatmul.f32.gmra.mxu0 %v2010
  %v2012 = vpop.f32.mrf.mxu0
  %v2013 = vadd.f32 %v1923, %v2012
  %v2014 = vand.u32 %v1041, 4294901760
  %v2015 = vsub.f32 %v1041, %v2014
  %2016 = vmatmul.f32.gmra.mxu0 %v2015
  %v2017 = vpop.f32.mrf.mxu0
  %v2018 = vadd.f32 %v1927, %v2017
  %v2019 = vand.u32 %v1044, 4294901760
  %v2020 = vsub.f32 %v1044, %v2019
  %2021 = vmatmul.f32.gmra.mxu0 %v2020
  %v2022 = vpop.f32.mrf.mxu0
  %v2023 = vadd.f32 %v1931, %v2022
  %v2024 = vand.u32 %v1047, 4294901760
  %v2025 = vsub.f32 %v1047, %v2024
  %2026 = vmatmul.f32.gmra.mxu0 %v2025
  %v2027 = vpop.f32.mrf.mxu0
  %v2028 = vadd.f32 %v1935, %v2027
  %v2029 = vand.u32 %v1050, 4294901760
  %v2030 = vsub.f32 %v1050, %v2029
  %2031 = vmatmul.f32.gmra.mxu0 %v2030
  %v2032 = vpop.f32.mrf.mxu0
  %v2033 = vadd.f32 %v1939, %v2032
  %v2034 = vand.u32 %v1053, 4294901760
  %v2035 = vsub.f32 %v1053, %v2034
  %2036 = vmatmul.f32.gmra.mxu0 %v2035
  %v2037 = vpop.f32.mrf.mxu0
  %v2038 = vadd.f32 %v1943, %v2037
  %v2039 = vand.u32 %v1056, 4294901760
  %v2040 = vsub.f32 %v1056, %v2039
  %2041 = vmatmul.f32.gmra.mxu0 %v2040
  %v2042 = vpop.f32.mrf.mxu0
  %v2043 = vadd.f32 %v1947, %v2042
  %v2044 = vand.u32 %v1059, 4294901760
  %v2045 = vsub.f32 %v1059, %v2044
  %2046 = vmatmul.f32.gmra.mxu0 %v2045
  %v2047 = vpop.f32.mrf.mxu0
  %v2048 = vadd.f32 %v1951, %v2047
  %v2049 = vand.u32 %v1062, 4294901760
  %v2050 = vsub.f32 %v1062, %v2049
  %2051 = vmatmul.f32.gmra.mxu0 %v2050
  %v2052 = vpop.f32.mrf.mxu0
  %v2053 = vadd.f32 %v1955, %v2052
  %v2054 = vand.u32 %v1065, 4294901760
  %v2055 = vsub.f32 %v1065, %v2054
  %2056 = vmatmul.f32.gmra.mxu0 %v2055
  %v2057 = vpop.f32.mrf.mxu0
  %v2058 = vadd.f32 %v1959, %v2057
  %v2059 = vand.u32 %v1068, 4294901760
  %v2060 = vsub.f32 %v1068, %v2059
  %2061 = vmatmul.f32.gmra.mxu0 %v2060
  %v2062 = vpop.f32.mrf.mxu0
  %v2063 = vadd.f32 %v1963, %v2062
  %v2064 = vand.u32 %v1071, 4294901760
  %v2065 = vsub.f32 %v1071, %v2064
  %2066 = vmatmul.f32.gmra.mxu0 %v2065
  %v2067 = vpop.f32.mrf.mxu0
  %v2068 = vadd.f32 %v1967, %v2067
  %v2069 = vand.u32 %v1074, 4294901760
  %v2070 = vsub.f32 %v1074, %v2069
  %2071 = vmatmul.f32.gmra.mxu0 %v2070
  %v2072 = vpop.f32.mrf.mxu0
  %v2073 = vadd.f32 %v1971, %v2072
  %v2074 = vand.u32 %v1077, 4294901760
  %v2075 = vsub.f32 %v1077, %v2074
  %2076 = vmatmul.f32.gmra.mxu0 %v2075
  %v2077 = vpop.f32.mrf.mxu0
  %v2078 = vadd.f32 %v1975, %v2077
  %v2079 = vand.u32 %v1080, 4294901760
  %v2080 = vsub.f32 %v1080, %v2079
  %2081 = vmatmul.f32.gmra.mxu0 %v2080
  %v2082 = vpop.f32.mrf.mxu0
  %v2083 = vadd.f32 %v1979, %v2082
  %v2084 = vand.u32 %v1083, 4294901760
  %v2085 = vsub.f32 %v1083, %v2084
  %2086 = vmatmul.f32.gmra.mxu0 %v2085
  %v2087 = vpop.f32.mrf.mxu0
  %v2088 = vadd.f32 %v1983, %v2087
  %2089 = vdwg.mxu0
  %2090 = vmatpush.msra.mxu0 0.0
  %2091 = vmatpush.msra.mxu0 0.0
  %2092 = vmatpush.msra.mxu0 0.0
  %2093 = vmatpush.msra.mxu0 0.0
  %2094 = vmatpush.msra.mxu0 0.0
  %2095 = vmatpush.msra.mxu0 0.0
  %2096 = vmatpush.msra.mxu0 0.0
  %2097 = vmatpush.msra.mxu0 0.0
  %2098 = vmatpush.msra.mxu0 0.0
  %2099 = vmatpush.msra.mxu0 0.0
  %2100 = vmatpush.msra.mxu0 0.0
  %2101 = vmatpush.msra.mxu0 0.0
  %v2102 = vand.u32 %v922, 4294901760
  %2103 = vmatpush.msra.mxu0 %v2102
  %v2104 = vand.u32 %v919, 4294901760
  %2105 = vmatpush.msra.mxu0 %v2104
  %v2106 = vand.u32 %v916, 4294901760
  %2107 = vmatpush.msra.mxu0 %v2106
  %v2108 = vand.u32 %v913, 4294901760
  %2109 = vmatpush.msra.mxu0 %v2108
  %v2110 = vand.u32 %v1038, 4294901760
  %v2111 = vsub.f32 %v1038, %v2110
  %v2112 = vand.u32 %v2111, 4294901760
  %2113 = vmatmul.f32.gmra.mxu0 %v2112
  %v2114 = vpop.f32.mrf.mxu0
  %v2115 = vadd.f32 %v2013, %v2114
  %v2116 = vand.u32 %v1041, 4294901760
  %v2117 = vsub.f32 %v1041, %v2116
  %v2118 = vand.u32 %v2117, 4294901760
  %2119 = vmatmul.f32.gmra.mxu0 %v2118
  %v2120 = vpop.f32.mrf.mxu0
  %v2121 = vadd.f32 %v2018, %v2120
  %v2122 = vand.u32 %v1044, 4294901760
  %v2123 = vsub.f32 %v1044, %v2122
  %v2124 = vand.u32 %v2123, 4294901760
  %2125 = vmatmul.f32.gmra.mxu0 %v2124
  %v2126 = vpop.f32.mrf.mxu0
  %v2127 = vadd.f32 %v2023, %v2126
  %v2128 = vand.u32 %v1047, 4294901760
  %v2129 = vsub.f32 %v1047, %v2128
  %v2130 = vand.u32 %v2129, 4294901760
  %2131 = vmatmul.f32.gmra.mxu0 %v2130
  %v2132 = vpop.f32.mrf.mxu0
  %v2133 = vadd.f32 %v2028, %v2132
  %v2134 = vand.u32 %v1050, 4294901760
  %v2135 = vsub.f32 %v1050, %v2134
  %v2136 = vand.u32 %v2135, 4294901760
  %2137 = vmatmul.f32.gmra.mxu0 %v2136
  %v2138 = vpop.f32.mrf.mxu0
  %v2139 = vadd.f32 %v2033, %v2138
  %v2140 = vand.u32 %v1053, 4294901760
  %v2141 = vsub.f32 %v1053, %v2140
  %v2142 = vand.u32 %v2141, 4294901760
  %2143 = vmatmul.f32.gmra.mxu0 %v2142
  %v2144 = vpop.f32.mrf.mxu0
  %v2145 = vadd.f32 %v2038, %v2144
  %v2146 = vand.u32 %v1056, 4294901760
  %v2147 = vsub.f32 %v1056, %v2146
  %v2148 = vand.u32 %v2147, 4294901760
  %2149 = vmatmul.f32.gmra.mxu0 %v2148
  %v2150 = vpop.f32.mrf.mxu0
  %v2151 = vadd.f32 %v2043, %v2150
  %v2152 = vand.u32 %v1059, 4294901760
  %v2153 = vsub.f32 %v1059, %v2152
  %v2154 = vand.u32 %v2153, 4294901760
  %2155 = vmatmul.f32.gmra.mxu0 %v2154
  %v2156 = vpop.f32.mrf.mxu0
  %v2157 = vadd.f32 %v2048, %v2156
  %v2158 = vand.u32 %v1062, 4294901760
  %v2159 = vsub.f32 %v1062, %v2158
  %v2160 = vand.u32 %v2159, 4294901760
  %2161 = vmatmul.f32.gmra.mxu0 %v2160
  %v2162 = vpop.f32.mrf.mxu0
  %v2163 = vadd.f32 %v2053, %v2162
  %v2164 = vand.u32 %v1065, 4294901760
  %v2165 = vsub.f32 %v1065, %v2164
  %v2166 = vand.u32 %v2165, 4294901760
  %2167 = vmatmul.f32.gmra.mxu0 %v2166
  %v2168 = vpop.f32.mrf.mxu0
  %v2169 = vadd.f32 %v2058, %v2168
  %v2170 = vand.u32 %v1068, 4294901760
  %v2171 = vsub.f32 %v1068, %v2170
  %v2172 = vand.u32 %v2171, 4294901760
  %2173 = vmatmul.f32.gmra.mxu0 %v2172
  %v2174 = vpop.f32.mrf.mxu0
  %v2175 = vadd.f32 %v2063, %v2174
  %v2176 = vand.u32 %v1071, 4294901760
  %v2177 = vsub.f32 %v1071, %v2176
  %v2178 = vand.u32 %v2177, 4294901760
  %2179 = vmatmul.f32.gmra.mxu0 %v2178
  %v2180 = vpop.f32.mrf.mxu0
  %v2181 = vadd.f32 %v2068, %v2180
  %v2182 = vand.u32 %v1074, 4294901760
  %v2183 = vsub.f32 %v1074, %v2182
  %v2184 = vand.u32 %v2183, 4294901760
  %2185 = vmatmul.f32.gmra.mxu0 %v2184
  %v2186 = vpop.f32.mrf.mxu0
  %v2187 = vadd.f32 %v2073, %v2186
  %v2188 = vand.u32 %v1077, 4294901760
  %v2189 = vsub.f32 %v1077, %v2188
  %v2190 = vand.u32 %v2189, 4294901760
  %2191 = vmatmul.f32.gmra.mxu0 %v2190
  %v2192 = vpop.f32.mrf.mxu0
  %v2193 = vadd.f32 %v2078, %v2192
  %v2194 = vand.u32 %v1080, 4294901760
  %v2195 = vsub.f32 %v1080, %v2194
  %v2196 = vand.u32 %v2195, 4294901760
  %2197 = vmatmul.f32.gmra.mxu0 %v2196
  %v2198 = vpop.f32.mrf.mxu0
  %v2199 = vadd.f32 %v2083, %v2198
  %v2200 = vand.u32 %v1083, 4294901760
  %v2201 = vsub.f32 %v1083, %v2200
  %v2202 = vand.u32 %v2201, 4294901760
  %2203 = vmatmul.f32.gmra.mxu0 %v2202
  %v2204 = vpop.f32.mrf.mxu0
  %v2205 = vadd.f32 %v2088, %v2204
  %2206 = vdwg.mxu0
  %2207 = vmatpush.msra.mxu0 0.0
  %2208 = vmatpush.msra.mxu0 0.0
  %2209 = vmatpush.msra.mxu0 0.0
  %2210 = vmatpush.msra.mxu0 0.0
  %2211 = vmatpush.msra.mxu0 0.0
  %2212 = vmatpush.msra.mxu0 0.0
  %2213 = vmatpush.msra.mxu0 0.0
  %2214 = vmatpush.msra.mxu0 0.0
  %2215 = vmatpush.msra.mxu0 0.0
  %2216 = vmatpush.msra.mxu0 0.0
  %2217 = vmatpush.msra.mxu0 0.0
  %2218 = vmatpush.msra.mxu0 0.0
  %v2219 = vand.u32 %v922, 4294901760
  %v2220 = vsub.f32 %v922, %v2219
  %v2221 = vand.u32 %v2220, 4294901760
  %2222 = vmatpush.msra.mxu0 %v2221
  %v2223 = vand.u32 %v919, 4294901760
  %v2224 = vsub.f32 %v919, %v2223
  %v2225 = vand.u32 %v2224, 4294901760
  %2226 = vmatpush.msra.mxu0 %v2225
  %v2227 = vand.u32 %v916, 4294901760
  %v2228 = vsub.f32 %v916, %v2227
  %v2229 = vand.u32 %v2228, 4294901760
  %2230 = vmatpush.msra.mxu0 %v2229
  %v2231 = vand.u32 %v913, 4294901760
  %v2232 = vsub.f32 %v913, %v2231
  %v2233 = vand.u32 %v2232, 4294901760
  %2234 = vmatpush.msra.mxu0 %v2233
  %v2235 = vand.u32 %v1038, 4294901760
  %2236 = vmatmul.f32.gmra.mxu0 %v2235
  %v2237 = vpop.f32.mrf.mxu0
  %v2238 = vadd.f32 %v2115, %v2237
  %v2239 = vand.u32 %v1041, 4294901760
  %2240 = vmatmul.f32.gmra.mxu0 %v2239
  %v2241 = vpop.f32.mrf.mxu0
  %v2242 = vadd.f32 %v2121, %v2241
  %v2243 = vand.u32 %v1044, 4294901760
  %2244 = vmatmul.f32.gmra.mxu0 %v2243
  %v2245 = vpop.f32.mrf.mxu0
  %v2246 = vadd.f32 %v2127, %v2245
  %v2247 = vand.u32 %v1047, 4294901760
  %2248 = vmatmul.f32.gmra.mxu0 %v2247
  %v2249 = vpop.f32.mrf.mxu0
  %v2250 = vadd.f32 %v2133, %v2249
  %v2251 = vand.u32 %v1050, 4294901760
  %2252 = vmatmul.f32.gmra.mxu0 %v2251
  %v2253 = vpop.f32.mrf.mxu0
  %v2254 = vadd.f32 %v2139, %v2253
  %v2255 = vand.u32 %v1053, 4294901760
  %2256 = vmatmul.f32.gmra.mxu0 %v2255
  %v2257 = vpop.f32.mrf.mxu0
  %v2258 = vadd.f32 %v2145, %v2257
  %v2259 = vand.u32 %v1056, 4294901760
  %2260 = vmatmul.f32.gmra.mxu0 %v2259
  %v2261 = vpop.f32.mrf.mxu0
  %v2262 = vadd.f32 %v2151, %v2261
  %v2263 = vand.u32 %v1059, 4294901760
  %2264 = vmatmul.f32.gmra.mxu0 %v2263
  %v2265 = vpop.f32.mrf.mxu0
  %v2266 = vadd.f32 %v2157, %v2265
  %v2267 = vand.u32 %v1062, 4294901760
  %2268 = vmatmul.f32.gmra.mxu0 %v2267
  %v2269 = vpop.f32.mrf.mxu0
  %v2270 = vadd.f32 %v2163, %v2269
  %v2271 = vand.u32 %v1065, 4294901760
  %2272 = vmatmul.f32.gmra.mxu0 %v2271
  %v2273 = vpop.f32.mrf.mxu0
  %v2274 = vadd.f32 %v2169, %v2273
  %v2275 = vand.u32 %v1068, 4294901760
  %2276 = vmatmul.f32.gmra.mxu0 %v2275
  %v2277 = vpop.f32.mrf.mxu0
  %v2278 = vadd.f32 %v2175, %v2277
  %v2279 = vand.u32 %v1071, 4294901760
  %2280 = vmatmul.f32.gmra.mxu0 %v2279
  %v2281 = vpop.f32.mrf.mxu0
  %v2282 = vadd.f32 %v2181, %v2281
  %v2283 = vand.u32 %v1074, 4294901760
  %2284 = vmatmul.f32.gmra.mxu0 %v2283
  %v2285 = vpop.f32.mrf.mxu0
  %v2286 = vadd.f32 %v2187, %v2285
  %v2287 = vand.u32 %v1077, 4294901760
  %2288 = vmatmul.f32.gmra.mxu0 %v2287
  %v2289 = vpop.f32.mrf.mxu0
  %v2290 = vadd.f32 %v2193, %v2289
  %v2291 = vand.u32 %v1080, 4294901760
  %2292 = vmatmul.f32.gmra.mxu0 %v2291
  %v2293 = vpop.f32.mrf.mxu0
  %v2294 = vadd.f32 %v2199, %v2293
  %v2295 = vand.u32 %v1083, 4294901760
  %2296 = vmatmul.f32.gmra.mxu0 %v2295
  %v2297 = vpop.f32.mrf.mxu0
  %v2298 = vadd.f32 %v2205, %v2297
  %2299 = vdwg.mxu0
  %2300 = vmatpush.msra.mxu0 0.0
  %2301 = vmatpush.msra.mxu0 0.0
  %2302 = vmatpush.msra.mxu0 0.0
  %2303 = vmatpush.msra.mxu0 0.0
  %2304 = vmatpush.msra.mxu0 0.0
  %2305 = vmatpush.msra.mxu0 0.0
  %2306 = vmatpush.msra.mxu0 0.0
  %2307 = vmatpush.msra.mxu0 0.0
  %2308 = vmatpush.msra.mxu0 0.0
  %2309 = vmatpush.msra.mxu0 0.0
  %2310 = vmatpush.msra.mxu0 0.0
  %2311 = vmatpush.msra.mxu0 0.0
  %v2312 = vand.u32 %v922, 4294901760
  %2313 = vmatpush.msra.mxu0 %v2312
  %v2314 = vand.u32 %v919, 4294901760
  %2315 = vmatpush.msra.mxu0 %v2314
  %v2316 = vand.u32 %v916, 4294901760
  %2317 = vmatpush.msra.mxu0 %v2316
  %v2318 = vand.u32 %v913, 4294901760
  %2319 = vmatpush.msra.mxu0 %v2318
  %v2320 = vand.u32 %v1038, 4294901760
  %2321 = vmatmul.f32.gmra.mxu0 %v2320
  %v2322 = vpop.f32.mrf.mxu0
  %v2323 = vadd.f32 %v2238, %v2322
  %v2324 = vand.u32 %v1041, 4294901760
  %2325 = vmatmul.f32.gmra.mxu0 %v2324
  %v2326 = vpop.f32.mrf.mxu0
  %v2327 = vadd.f32 %v2242, %v2326
  %v2328 = vand.u32 %v1044, 4294901760
  %2329 = vmatmul.f32.gmra.mxu0 %v2328
  %v2330 = vpop.f32.mrf.mxu0
  %v2331 = vadd.f32 %v2246, %v2330
  %v2332 = vand.u32 %v1047, 4294901760
  %2333 = vmatmul.f32.gmra.mxu0 %v2332
  %v2334 = vpop.f32.mrf.mxu0
  %v2335 = vadd.f32 %v2250, %v2334
  %v2336 = vand.u32 %v1050, 4294901760
  %2337 = vmatmul.f32.gmra.mxu0 %v2336
  %v2338 = vpop.f32.mrf.mxu0
  %v2339 = vadd.f32 %v2254, %v2338
  %v2340 = vand.u32 %v1053, 4294901760
  %2341 = vmatmul.f32.gmra.mxu0 %v2340
  %v2342 = vpop.f32.mrf.mxu0
  %v2343 = vadd.f32 %v2258, %v2342
  %v2344 = vand.u32 %v1056, 4294901760
  %2345 = vmatmul.f32.gmra.mxu0 %v2344
  %v2346 = vpop.f32.mrf.mxu0
  %v2347 = vadd.f32 %v2262, %v2346
  %v2348 = vand.u32 %v1059, 4294901760
  %2349 = vmatmul.f32.gmra.mxu0 %v2348
  %v2350 = vpop.f32.mrf.mxu0
  %v2351 = vadd.f32 %v2266, %v2350
  %v2352 = vand.u32 %v1062, 4294901760
  %2353 = vmatmul.f32.gmra.mxu0 %v2352
  %v2354 = vpop.f32.mrf.mxu0
  %v2355 = vadd.f32 %v2270, %v2354
  %v2356 = vand.u32 %v1065, 4294901760
  %2357 = vmatmul.f32.gmra.mxu0 %v2356
  %v2358 = vpop.f32.mrf.mxu0
  %v2359 = vadd.f32 %v2274, %v2358
  %v2360 = vand.u32 %v1068, 4294901760
  %2361 = vmatmul.f32.gmra.mxu0 %v2360
  %v2362 = vpop.f32.mrf.mxu0
  %v2363 = vadd.f32 %v2278, %v2362
  %v2364 = vand.u32 %v1071, 4294901760
  %2365 = vmatmul.f32.gmra.mxu0 %v2364
  %v2366 = vpop.f32.mrf.mxu0
  %v2367 = vadd.f32 %v2282, %v2366
  %v2368 = vand.u32 %v1074, 4294901760
  %2369 = vmatmul.f32.gmra.mxu0 %v2368
  %v2370 = vpop.f32.mrf.mxu0
  %v2371 = vadd.f32 %v2286, %v2370
  %v2372 = vand.u32 %v1077, 4294901760
  %2373 = vmatmul.f32.gmra.mxu0 %v2372
  %v2374 = vpop.f32.mrf.mxu0
  %v2375 = vadd.f32 %v2290, %v2374
  %v2376 = vand.u32 %v1080, 4294901760
  %2377 = vmatmul.f32.gmra.mxu0 %v2376
  %v2378 = vpop.f32.mrf.mxu0
  %v2379 = vadd.f32 %v2294, %v2378
  %v2380 = vand.u32 %v1083, 4294901760
  %2381 = vmatmul.f32.gmra.mxu0 %v2380
  %v2382 = vpop.f32.mrf.mxu0
  %v2383 = vadd.f32 %v2298, %v2382
  %2384 = vdwg.mxu0
  %2385 = vmatpush.msra.mxu0 0.0
  %2386 = vmatpush.msra.mxu0 0.0
  %2387 = vmatpush.msra.mxu0 0.0
  %2388 = vmatpush.msra.mxu0 0.0
  %2389 = vmatpush.msra.mxu0 0.0
  %2390 = vmatpush.msra.mxu0 0.0
  %2391 = vmatpush.msra.mxu0 0.0
  %2392 = vmatpush.msra.mxu0 0.0
  %2393 = vmatpush.msra.mxu0 0.0
  %2394 = vmatpush.msra.mxu0 0.0
  %2395 = vmatpush.msra.mxu0 0.0
  %2396 = vmatpush.msra.mxu0 0.0
  %v2397 = vand.u32 %v923, 4294901760
  %2398 = vmatpush.msra.mxu0 %v2397
  %v2399 = vand.u32 %v920, 4294901760
  %2400 = vmatpush.msra.mxu0 %v2399
  %v2401 = vand.u32 %v917, 4294901760
  %2402 = vmatpush.msra.mxu0 %v2401
  %v2403 = vand.u32 %v914, 4294901760
  %2404 = vmatpush.msra.mxu0 %v2403
  %v2405 = vand.u32 %v1038, 4294901760
  %v2406 = vsub.f32 %v1038, %v2405
  %v2407 = vand.u32 %v2406, 4294901760
  %v2408 = vsub.f32 %v2406, %v2407
  %v2409 = vand.u32 %v2408, 4294901760
  %2410 = vmatmul.f32.gmra.mxu0 %v2409
  %v2411 = vpop.f32.mrf.mxu0
  %v2412 = vadd.f32 %v959, %v2411
  %v2413 = vand.u32 %v1041, 4294901760
  %v2414 = vsub.f32 %v1041, %v2413
  %v2415 = vand.u32 %v2414, 4294901760
  %v2416 = vsub.f32 %v2414, %v2415
  %v2417 = vand.u32 %v2416, 4294901760
  %2418 = vmatmul.f32.gmra.mxu0 %v2417
  %v2419 = vpop.f32.mrf.mxu0
  %v2420 = vadd.f32 %v964, %v2419
  %v2421 = vand.u32 %v1044, 4294901760
  %v2422 = vsub.f32 %v1044, %v2421
  %v2423 = vand.u32 %v2422, 4294901760
  %v2424 = vsub.f32 %v2422, %v2423
  %v2425 = vand.u32 %v2424, 4294901760
  %2426 = vmatmul.f32.gmra.mxu0 %v2425
  %v2427 = vpop.f32.mrf.mxu0
  %v2428 = vadd.f32 %v969, %v2427
  %v2429 = vand.u32 %v1047, 4294901760
  %v2430 = vsub.f32 %v1047, %v2429
  %v2431 = vand.u32 %v2430, 4294901760
  %v2432 = vsub.f32 %v2430, %v2431
  %v2433 = vand.u32 %v2432, 4294901760
  %2434 = vmatmul.f32.gmra.mxu0 %v2433
  %v2435 = vpop.f32.mrf.mxu0
  %v2436 = vadd.f32 %v974, %v2435
  %v2437 = vand.u32 %v1050, 4294901760
  %v2438 = vsub.f32 %v1050, %v2437
  %v2439 = vand.u32 %v2438, 4294901760
  %v2440 = vsub.f32 %v2438, %v2439
  %v2441 = vand.u32 %v2440, 4294901760
  %2442 = vmatmul.f32.gmra.mxu0 %v2441
  %v2443 = vpop.f32.mrf.mxu0
  %v2444 = vadd.f32 %v979, %v2443
  %v2445 = vand.u32 %v1053, 4294901760
  %v2446 = vsub.f32 %v1053, %v2445
  %v2447 = vand.u32 %v2446, 4294901760
  %v2448 = vsub.f32 %v2446, %v2447
  %v2449 = vand.u32 %v2448, 4294901760
  %2450 = vmatmul.f32.gmra.mxu0 %v2449
  %v2451 = vpop.f32.mrf.mxu0
  %v2452 = vadd.f32 %v984, %v2451
  %v2453 = vand.u32 %v1056, 4294901760
  %v2454 = vsub.f32 %v1056, %v2453
  %v2455 = vand.u32 %v2454, 4294901760
  %v2456 = vsub.f32 %v2454, %v2455
  %v2457 = vand.u32 %v2456, 4294901760
  %2458 = vmatmul.f32.gmra.mxu0 %v2457
  %v2459 = vpop.f32.mrf.mxu0
  %v2460 = vadd.f32 %v989, %v2459
  %v2461 = vand.u32 %v1059, 4294901760
  %v2462 = vsub.f32 %v1059, %v2461
  %v2463 = vand.u32 %v2462, 4294901760
  %v2464 = vsub.f32 %v2462, %v2463
  %v2465 = vand.u32 %v2464, 4294901760
  %2466 = vmatmul.f32.gmra.mxu0 %v2465
  %v2467 = vpop.f32.mrf.mxu0
  %v2468 = vadd.f32 %v994, %v2467
  %v2469 = vand.u32 %v1062, 4294901760
  %v2470 = vsub.f32 %v1062, %v2469
  %v2471 = vand.u32 %v2470, 4294901760
  %v2472 = vsub.f32 %v2470, %v2471
  %v2473 = vand.u32 %v2472, 4294901760
  %2474 = vmatmul.f32.gmra.mxu0 %v2473
  %v2475 = vpop.f32.mrf.mxu0
  %v2476 = vadd.f32 %v999, %v2475
  %v2477 = vand.u32 %v1065, 4294901760
  %v2478 = vsub.f32 %v1065, %v2477
  %v2479 = vand.u32 %v2478, 4294901760
  %v2480 = vsub.f32 %v2478, %v2479
  %v2481 = vand.u32 %v2480, 4294901760
  %2482 = vmatmul.f32.gmra.mxu0 %v2481
  %v2483 = vpop.f32.mrf.mxu0
  %v2484 = vadd.f32 %v1004, %v2483
  %v2485 = vand.u32 %v1068, 4294901760
  %v2486 = vsub.f32 %v1068, %v2485
  %v2487 = vand.u32 %v2486, 4294901760
  %v2488 = vsub.f32 %v2486, %v2487
  %v2489 = vand.u32 %v2488, 4294901760
  %2490 = vmatmul.f32.gmra.mxu0 %v2489
  %v2491 = vpop.f32.mrf.mxu0
  %v2492 = vadd.f32 %v1009, %v2491
  %v2493 = vand.u32 %v1071, 4294901760
  %v2494 = vsub.f32 %v1071, %v2493
  %v2495 = vand.u32 %v2494, 4294901760
  %v2496 = vsub.f32 %v2494, %v2495
  %v2497 = vand.u32 %v2496, 4294901760
  %2498 = vmatmul.f32.gmra.mxu0 %v2497
  %v2499 = vpop.f32.mrf.mxu0
  %v2500 = vadd.f32 %v1014, %v2499
  %v2501 = vand.u32 %v1074, 4294901760
  %v2502 = vsub.f32 %v1074, %v2501
  %v2503 = vand.u32 %v2502, 4294901760
  %v2504 = vsub.f32 %v2502, %v2503
  %v2505 = vand.u32 %v2504, 4294901760
  %2506 = vmatmul.f32.gmra.mxu0 %v2505
  %v2507 = vpop.f32.mrf.mxu0
  %v2508 = vadd.f32 %v1019, %v2507
  %v2509 = vand.u32 %v1077, 4294901760
  %v2510 = vsub.f32 %v1077, %v2509
  %v2511 = vand.u32 %v2510, 4294901760
  %v2512 = vsub.f32 %v2510, %v2511
  %v2513 = vand.u32 %v2512, 4294901760
  %2514 = vmatmul.f32.gmra.mxu0 %v2513
  %v2515 = vpop.f32.mrf.mxu0
  %v2516 = vadd.f32 %v1024, %v2515
  %v2517 = vand.u32 %v1080, 4294901760
  %v2518 = vsub.f32 %v1080, %v2517
  %v2519 = vand.u32 %v2518, 4294901760
  %v2520 = vsub.f32 %v2518, %v2519
  %v2521 = vand.u32 %v2520, 4294901760
  %2522 = vmatmul.f32.gmra.mxu0 %v2521
  %v2523 = vpop.f32.mrf.mxu0
  %v2524 = vadd.f32 %v1029, %v2523
  %v2525 = vand.u32 %v1083, 4294901760
  %v2526 = vsub.f32 %v1083, %v2525
  %v2527 = vand.u32 %v2526, 4294901760
  %v2528 = vsub.f32 %v2526, %v2527
  %v2529 = vand.u32 %v2528, 4294901760
  %2530 = vmatmul.f32.gmra.mxu0 %v2529
  %v2531 = vpop.f32.mrf.mxu0
  %v2532 = vadd.f32 %v1034, %v2531
  %2533 = vdwg.mxu0
  %2534 = vmatpush.msra.mxu0 0.0
  %2535 = vmatpush.msra.mxu0 0.0
  %2536 = vmatpush.msra.mxu0 0.0
  %2537 = vmatpush.msra.mxu0 0.0
  %2538 = vmatpush.msra.mxu0 0.0
  %2539 = vmatpush.msra.mxu0 0.0
  %2540 = vmatpush.msra.mxu0 0.0
  %2541 = vmatpush.msra.mxu0 0.0
  %2542 = vmatpush.msra.mxu0 0.0
  %2543 = vmatpush.msra.mxu0 0.0
  %2544 = vmatpush.msra.mxu0 0.0
  %2545 = vmatpush.msra.mxu0 0.0
  %v2546 = vand.u32 %v923, 4294901760
  %v2547 = vsub.f32 %v923, %v2546
  %v2548 = vand.u32 %v2547, 4294901760
  %v2549 = vsub.f32 %v2547, %v2548
  %v2550 = vand.u32 %v2549, 4294901760
  %2551 = vmatpush.msra.mxu0 %v2550
  %v2552 = vand.u32 %v920, 4294901760
  %v2553 = vsub.f32 %v920, %v2552
  %v2554 = vand.u32 %v2553, 4294901760
  %v2555 = vsub.f32 %v2553, %v2554
  %v2556 = vand.u32 %v2555, 4294901760
  %2557 = vmatpush.msra.mxu0 %v2556
  %v2558 = vand.u32 %v917, 4294901760
  %v2559 = vsub.f32 %v917, %v2558
  %v2560 = vand.u32 %v2559, 4294901760
  %v2561 = vsub.f32 %v2559, %v2560
  %v2562 = vand.u32 %v2561, 4294901760
  %2563 = vmatpush.msra.mxu0 %v2562
  %v2564 = vand.u32 %v914, 4294901760
  %v2565 = vsub.f32 %v914, %v2564
  %v2566 = vand.u32 %v2565, 4294901760
  %v2567 = vsub.f32 %v2565, %v2566
  %v2568 = vand.u32 %v2567, 4294901760
  %2569 = vmatpush.msra.mxu0 %v2568
  %v2570 = vand.u32 %v1038, 4294901760
  %2571 = vmatmul.f32.gmra.mxu0 %v2570
  %v2572 = vpop.f32.mrf.mxu0
  %v2573 = vadd.f32 %v2412, %v2572
  %v2574 = vand.u32 %v1041, 4294901760
  %2575 = vmatmul.f32.gmra.mxu0 %v2574
  %v2576 = vpop.f32.mrf.mxu0
  %v2577 = vadd.f32 %v2420, %v2576
  %v2578 = vand.u32 %v1044, 4294901760
  %2579 = vmatmul.f32.gmra.mxu0 %v2578
  %v2580 = vpop.f32.mrf.mxu0
  %v2581 = vadd.f32 %v2428, %v2580
  %v2582 = vand.u32 %v1047, 4294901760
  %2583 = vmatmul.f32.gmra.mxu0 %v2582
  %v2584 = vpop.f32.mrf.mxu0
  %v2585 = vadd.f32 %v2436, %v2584
  %v2586 = vand.u32 %v1050, 4294901760
  %2587 = vmatmul.f32.gmra.mxu0 %v2586
  %v2588 = vpop.f32.mrf.mxu0
  %v2589 = vadd.f32 %v2444, %v2588
  %v2590 = vand.u32 %v1053, 4294901760
  %2591 = vmatmul.f32.gmra.mxu0 %v2590
  %v2592 = vpop.f32.mrf.mxu0
  %v2593 = vadd.f32 %v2452, %v2592
  %v2594 = vand.u32 %v1056, 4294901760
  %2595 = vmatmul.f32.gmra.mxu0 %v2594
  %v2596 = vpop.f32.mrf.mxu0
  %v2597 = vadd.f32 %v2460, %v2596
  %v2598 = vand.u32 %v1059, 4294901760
  %2599 = vmatmul.f32.gmra.mxu0 %v2598
  %v2600 = vpop.f32.mrf.mxu0
  %v2601 = vadd.f32 %v2468, %v2600
  %v2602 = vand.u32 %v1062, 4294901760
  %2603 = vmatmul.f32.gmra.mxu0 %v2602
  %v2604 = vpop.f32.mrf.mxu0
  %v2605 = vadd.f32 %v2476, %v2604
  %v2606 = vand.u32 %v1065, 4294901760
  %2607 = vmatmul.f32.gmra.mxu0 %v2606
  %v2608 = vpop.f32.mrf.mxu0
  %v2609 = vadd.f32 %v2484, %v2608
  %v2610 = vand.u32 %v1068, 4294901760
  %2611 = vmatmul.f32.gmra.mxu0 %v2610
  %v2612 = vpop.f32.mrf.mxu0
  %v2613 = vadd.f32 %v2492, %v2612
  %v2614 = vand.u32 %v1071, 4294901760
  %2615 = vmatmul.f32.gmra.mxu0 %v2614
  %v2616 = vpop.f32.mrf.mxu0
  %v2617 = vadd.f32 %v2500, %v2616
  %v2618 = vand.u32 %v1074, 4294901760
  %2619 = vmatmul.f32.gmra.mxu0 %v2618
  %v2620 = vpop.f32.mrf.mxu0
  %v2621 = vadd.f32 %v2508, %v2620
  %v2622 = vand.u32 %v1077, 4294901760
  %2623 = vmatmul.f32.gmra.mxu0 %v2622
  %v2624 = vpop.f32.mrf.mxu0
  %v2625 = vadd.f32 %v2516, %v2624
  %v2626 = vand.u32 %v1080, 4294901760
  %2627 = vmatmul.f32.gmra.mxu0 %v2626
  %v2628 = vpop.f32.mrf.mxu0
  %v2629 = vadd.f32 %v2524, %v2628
  %v2630 = vand.u32 %v1083, 4294901760
  %2631 = vmatmul.f32.gmra.mxu0 %v2630
  %v2632 = vpop.f32.mrf.mxu0
  %v2633 = vadd.f32 %v2532, %v2632
  %2634 = vdwg.mxu0
  %2635 = vmatpush.msra.mxu0 0.0
  %2636 = vmatpush.msra.mxu0 0.0
  %2637 = vmatpush.msra.mxu0 0.0
  %2638 = vmatpush.msra.mxu0 0.0
  %2639 = vmatpush.msra.mxu0 0.0
  %2640 = vmatpush.msra.mxu0 0.0
  %2641 = vmatpush.msra.mxu0 0.0
  %2642 = vmatpush.msra.mxu0 0.0
  %2643 = vmatpush.msra.mxu0 0.0
  %2644 = vmatpush.msra.mxu0 0.0
  %2645 = vmatpush.msra.mxu0 0.0
  %2646 = vmatpush.msra.mxu0 0.0
  %v2647 = vand.u32 %v923, 4294901760
  %v2648 = vsub.f32 %v923, %v2647
  %2649 = vmatpush.msra.mxu0 %v2648
  %v2650 = vand.u32 %v920, 4294901760
  %v2651 = vsub.f32 %v920, %v2650
  %2652 = vmatpush.msra.mxu0 %v2651
  %v2653 = vand.u32 %v917, 4294901760
  %v2654 = vsub.f32 %v917, %v2653
  %2655 = vmatpush.msra.mxu0 %v2654
  %v2656 = vand.u32 %v914, 4294901760
  %v2657 = vsub.f32 %v914, %v2656
  %2658 = vmatpush.msra.mxu0 %v2657
  %v2659 = vand.u32 %v1038, 4294901760
  %v2660 = vsub.f32 %v1038, %v2659
  %2661 = vmatmul.f32.gmra.mxu0 %v2660
  %v2662 = vpop.f32.mrf.mxu0
  %v2663 = vadd.f32 %v2573, %v2662
  %v2664 = vand.u32 %v1041, 4294901760
  %v2665 = vsub.f32 %v1041, %v2664
  %2666 = vmatmul.f32.gmra.mxu0 %v2665
  %v2667 = vpop.f32.mrf.mxu0
  %v2668 = vadd.f32 %v2577, %v2667
  %v2669 = vand.u32 %v1044, 4294901760
  %v2670 = vsub.f32 %v1044, %v2669
  %2671 = vmatmul.f32.gmra.mxu0 %v2670
  %v2672 = vpop.f32.mrf.mxu0
  %v2673 = vadd.f32 %v2581, %v2672
  %v2674 = vand.u32 %v1047, 4294901760
  %v2675 = vsub.f32 %v1047, %v2674
  %2676 = vmatmul.f32.gmra.mxu0 %v2675
  %v2677 = vpop.f32.mrf.mxu0
  %v2678 = vadd.f32 %v2585, %v2677
  %v2679 = vand.u32 %v1050, 4294901760
  %v2680 = vsub.f32 %v1050, %v2679
  %2681 = vmatmul.f32.gmra.mxu0 %v2680
  %v2682 = vpop.f32.mrf.mxu0
  %v2683 = vadd.f32 %v2589, %v2682
  %v2684 = vand.u32 %v1053, 4294901760
  %v2685 = vsub.f32 %v1053, %v2684
  %2686 = vmatmul.f32.gmra.mxu0 %v2685
  %v2687 = vpop.f32.mrf.mxu0
  %v2688 = vadd.f32 %v2593, %v2687
  %v2689 = vand.u32 %v1056, 4294901760
  %v2690 = vsub.f32 %v1056, %v2689
  %2691 = vmatmul.f32.gmra.mxu0 %v2690
  %v2692 = vpop.f32.mrf.mxu0
  %v2693 = vadd.f32 %v2597, %v2692
  %v2694 = vand.u32 %v1059, 4294901760
  %v2695 = vsub.f32 %v1059, %v2694
  %2696 = vmatmul.f32.gmra.mxu0 %v2695
  %v2697 = vpop.f32.mrf.mxu0
  %v2698 = vadd.f32 %v2601, %v2697
  %v2699 = vand.u32 %v1062, 4294901760
  %v2700 = vsub.f32 %v1062, %v2699
  %2701 = vmatmul.f32.gmra.mxu0 %v2700
  %v2702 = vpop.f32.mrf.mxu0
  %v2703 = vadd.f32 %v2605, %v2702
  %v2704 = vand.u32 %v1065, 4294901760
  %v2705 = vsub.f32 %v1065, %v2704
  %2706 = vmatmul.f32.gmra.mxu0 %v2705
  %v2707 = vpop.f32.mrf.mxu0
  %v2708 = vadd.f32 %v2609, %v2707
  %v2709 = vand.u32 %v1068, 4294901760
  %v2710 = vsub.f32 %v1068, %v2709
  %2711 = vmatmul.f32.gmra.mxu0 %v2710
  %v2712 = vpop.f32.mrf.mxu0
  %v2713 = vadd.f32 %v2613, %v2712
  %v2714 = vand.u32 %v1071, 4294901760
  %v2715 = vsub.f32 %v1071, %v2714
  %2716 = vmatmul.f32.gmra.mxu0 %v2715
  %v2717 = vpop.f32.mrf.mxu0
  %v2718 = vadd.f32 %v2617, %v2717
  %v2719 = vand.u32 %v1074, 4294901760
  %v2720 = vsub.f32 %v1074, %v2719
  %2721 = vmatmul.f32.gmra.mxu0 %v2720
  %v2722 = vpop.f32.mrf.mxu0
  %v2723 = vadd.f32 %v2621, %v2722
  %v2724 = vand.u32 %v1077, 4294901760
  %v2725 = vsub.f32 %v1077, %v2724
  %2726 = vmatmul.f32.gmra.mxu0 %v2725
  %v2727 = vpop.f32.mrf.mxu0
  %v2728 = vadd.f32 %v2625, %v2727
  %v2729 = vand.u32 %v1080, 4294901760
  %v2730 = vsub.f32 %v1080, %v2729
  %2731 = vmatmul.f32.gmra.mxu0 %v2730
  %v2732 = vpop.f32.mrf.mxu0
  %v2733 = vadd.f32 %v2629, %v2732
  %v2734 = vand.u32 %v1083, 4294901760
  %v2735 = vsub.f32 %v1083, %v2734
  %2736 = vmatmul.f32.gmra.mxu0 %v2735
  %v2737 = vpop.f32.mrf.mxu0
  %v2738 = vadd.f32 %v2633, %v2737
  %2739 = vdwg.mxu0
  %2740 = vmatpush.msra.mxu0 0.0
  %2741 = vmatpush.msra.mxu0 0.0
  %2742 = vmatpush.msra.mxu0 0.0
  %2743 = vmatpush.msra.mxu0 0.0
  %2744 = vmatpush.msra.mxu0 0.0
  %2745 = vmatpush.msra.mxu0 0.0
  %2746 = vmatpush.msra.mxu0 0.0
  %2747 = vmatpush.msra.mxu0 0.0
  %2748 = vmatpush.msra.mxu0 0.0
  %2749 = vmatpush.msra.mxu0 0.0
  %2750 = vmatpush.msra.mxu0 0.0
  %2751 = vmatpush.msra.mxu0 0.0
  %v2752 = vand.u32 %v923, 4294901760
  %2753 = vmatpush.msra.mxu0 %v2752
  %v2754 = vand.u32 %v920, 4294901760
  %2755 = vmatpush.msra.mxu0 %v2754
  %v2756 = vand.u32 %v917, 4294901760
  %2757 = vmatpush.msra.mxu0 %v2756
  %v2758 = vand.u32 %v914, 4294901760
  %2759 = vmatpush.msra.mxu0 %v2758
  %v2760 = vand.u32 %v1038, 4294901760
  %v2761 = vsub.f32 %v1038, %v2760
  %v2762 = vand.u32 %v2761, 4294901760
  %2763 = vmatmul.f32.gmra.mxu0 %v2762
  %v2764 = vpop.f32.mrf.mxu0
  %v2765 = vadd.f32 %v2663, %v2764
  %v2766 = vand.u32 %v1041, 4294901760
  %v2767 = vsub.f32 %v1041, %v2766
  %v2768 = vand.u32 %v2767, 4294901760
  %2769 = vmatmul.f32.gmra.mxu0 %v2768
  %v2770 = vpop.f32.mrf.mxu0
  %v2771 = vadd.f32 %v2668, %v2770
  %v2772 = vand.u32 %v1044, 4294901760
  %v2773 = vsub.f32 %v1044, %v2772
  %v2774 = vand.u32 %v2773, 4294901760
  %2775 = vmatmul.f32.gmra.mxu0 %v2774
  %v2776 = vpop.f32.mrf.mxu0
  %v2777 = vadd.f32 %v2673, %v2776
  %v2778 = vand.u32 %v1047, 4294901760
  %v2779 = vsub.f32 %v1047, %v2778
  %v2780 = vand.u32 %v2779, 4294901760
  %2781 = vmatmul.f32.gmra.mxu0 %v2780
  %v2782 = vpop.f32.mrf.mxu0
  %v2783 = vadd.f32 %v2678, %v2782
  %v2784 = vand.u32 %v1050, 4294901760
  %v2785 = vsub.f32 %v1050, %v2784
  %v2786 = vand.u32 %v2785, 4294901760
  %2787 = vmatmul.f32.gmra.mxu0 %v2786
  %v2788 = vpop.f32.mrf.mxu0
  %v2789 = vadd.f32 %v2683, %v2788
  %v2790 = vand.u32 %v1053, 4294901760
  %v2791 = vsub.f32 %v1053, %v2790
  %v2792 = vand.u32 %v2791, 4294901760
  %2793 = vmatmul.f32.gmra.mxu0 %v2792
  %v2794 = vpop.f32.mrf.mxu0
  %v2795 = vadd.f32 %v2688, %v2794
  %v2796 = vand.u32 %v1056, 4294901760
  %v2797 = vsub.f32 %v1056, %v2796
  %v2798 = vand.u32 %v2797, 4294901760
  %2799 = vmatmul.f32.gmra.mxu0 %v2798
  %v2800 = vpop.f32.mrf.mxu0
  %v2801 = vadd.f32 %v2693, %v2800
  %v2802 = vand.u32 %v1059, 4294901760
  %v2803 = vsub.f32 %v1059, %v2802
  %v2804 = vand.u32 %v2803, 4294901760
  %2805 = vmatmul.f32.gmra.mxu0 %v2804
  %v2806 = vpop.f32.mrf.mxu0
  %v2807 = vadd.f32 %v2698, %v2806
  %v2808 = vand.u32 %v1062, 4294901760
  %v2809 = vsub.f32 %v1062, %v2808
  %v2810 = vand.u32 %v2809, 4294901760
  %2811 = vmatmul.f32.gmra.mxu0 %v2810
  %v2812 = vpop.f32.mrf.mxu0
  %v2813 = vadd.f32 %v2703, %v2812
  %v2814 = vand.u32 %v1065, 4294901760
  %v2815 = vsub.f32 %v1065, %v2814
  %v2816 = vand.u32 %v2815, 4294901760
  %2817 = vmatmul.f32.gmra.mxu0 %v2816
  %v2818 = vpop.f32.mrf.mxu0
  %v2819 = vadd.f32 %v2708, %v2818
  %v2820 = vand.u32 %v1068, 4294901760
  %v2821 = vsub.f32 %v1068, %v2820
  %v2822 = vand.u32 %v2821, 4294901760
  %2823 = vmatmul.f32.gmra.mxu0 %v2822
  %v2824 = vpop.f32.mrf.mxu0
  %v2825 = vadd.f32 %v2713, %v2824
  %v2826 = vand.u32 %v1071, 4294901760
  %v2827 = vsub.f32 %v1071, %v2826
  %v2828 = vand.u32 %v2827, 4294901760
  %2829 = vmatmul.f32.gmra.mxu0 %v2828
  %v2830 = vpop.f32.mrf.mxu0
  %v2831 = vadd.f32 %v2718, %v2830
  %v2832 = vand.u32 %v1074, 4294901760
  %v2833 = vsub.f32 %v1074, %v2832
  %v2834 = vand.u32 %v2833, 4294901760
  %2835 = vmatmul.f32.gmra.mxu0 %v2834
  %v2836 = vpop.f32.mrf.mxu0
  %v2837 = vadd.f32 %v2723, %v2836
  %v2838 = vand.u32 %v1077, 4294901760
  %v2839 = vsub.f32 %v1077, %v2838
  %v2840 = vand.u32 %v2839, 4294901760
  %2841 = vmatmul.f32.gmra.mxu0 %v2840
  %v2842 = vpop.f32.mrf.mxu0
  %v2843 = vadd.f32 %v2728, %v2842
  %v2844 = vand.u32 %v1080, 4294901760
  %v2845 = vsub.f32 %v1080, %v2844
  %v2846 = vand.u32 %v2845, 4294901760
  %2847 = vmatmul.f32.gmra.mxu0 %v2846
  %v2848 = vpop.f32.mrf.mxu0
  %v2849 = vadd.f32 %v2733, %v2848
  %v2850 = vand.u32 %v1083, 4294901760
  %v2851 = vsub.f32 %v1083, %v2850
  %v2852 = vand.u32 %v2851, 4294901760
  %2853 = vmatmul.f32.gmra.mxu0 %v2852
  %v2854 = vpop.f32.mrf.mxu0
  %v2855 = vadd.f32 %v2738, %v2854
  %2856 = vdwg.mxu0
  %2857 = vmatpush.msra.mxu0 0.0
  %2858 = vmatpush.msra.mxu0 0.0
  %2859 = vmatpush.msra.mxu0 0.0
  %2860 = vmatpush.msra.mxu0 0.0
  %2861 = vmatpush.msra.mxu0 0.0
  %2862 = vmatpush.msra.mxu0 0.0
  %2863 = vmatpush.msra.mxu0 0.0
  %2864 = vmatpush.msra.mxu0 0.0
  %2865 = vmatpush.msra.mxu0 0.0
  %2866 = vmatpush.msra.mxu0 0.0
  %2867 = vmatpush.msra.mxu0 0.0
  %2868 = vmatpush.msra.mxu0 0.0
  %v2869 = vand.u32 %v923, 4294901760
  %v2870 = vsub.f32 %v923, %v2869
  %v2871 = vand.u32 %v2870, 4294901760
  %2872 = vmatpush.msra.mxu0 %v2871
  %v2873 = vand.u32 %v920, 4294901760
  %v2874 = vsub.f32 %v920, %v2873
  %v2875 = vand.u32 %v2874, 4294901760
  %2876 = vmatpush.msra.mxu0 %v2875
  %v2877 = vand.u32 %v917, 4294901760
  %v2878 = vsub.f32 %v917, %v2877
  %v2879 = vand.u32 %v2878, 4294901760
  %2880 = vmatpush.msra.mxu0 %v2879
  %v2881 = vand.u32 %v914, 4294901760
  %v2882 = vsub.f32 %v914, %v2881
  %v2883 = vand.u32 %v2882, 4294901760
  %2884 = vmatpush.msra.mxu0 %v2883
  %v2885 = vand.u32 %v1038, 4294901760
  %2886 = vmatmul.f32.gmra.mxu0 %v2885
  %v2887 = vpop.f32.mrf.mxu0
  %v2888 = vadd.f32 %v2765, %v2887
  %v2889 = vand.u32 %v1041, 4294901760
  %2890 = vmatmul.f32.gmra.mxu0 %v2889
  %v2891 = vpop.f32.mrf.mxu0
  %v2892 = vadd.f32 %v2771, %v2891
  %v2893 = vand.u32 %v1044, 4294901760
  %2894 = vmatmul.f32.gmra.mxu0 %v2893
  %v2895 = vpop.f32.mrf.mxu0
  %v2896 = vadd.f32 %v2777, %v2895
  %v2897 = vand.u32 %v1047, 4294901760
  %2898 = vmatmul.f32.gmra.mxu0 %v2897
  %v2899 = vpop.f32.mrf.mxu0
  %v2900 = vadd.f32 %v2783, %v2899
  %v2901 = vand.u32 %v1050, 4294901760
  %2902 = vmatmul.f32.gmra.mxu0 %v2901
  %v2903 = vpop.f32.mrf.mxu0
  %v2904 = vadd.f32 %v2789, %v2903
  %v2905 = vand.u32 %v1053, 4294901760
  %2906 = vmatmul.f32.gmra.mxu0 %v2905
  %v2907 = vpop.f32.mrf.mxu0
  %v2908 = vadd.f32 %v2795, %v2907
  %v2909 = vand.u32 %v1056, 4294901760
  %2910 = vmatmul.f32.gmra.mxu0 %v2909
  %v2911 = vpop.f32.mrf.mxu0
  %v2912 = vadd.f32 %v2801, %v2911
  %v2913 = vand.u32 %v1059, 4294901760
  %2914 = vmatmul.f32.gmra.mxu0 %v2913
  %v2915 = vpop.f32.mrf.mxu0
  %v2916 = vadd.f32 %v2807, %v2915
  %v2917 = vand.u32 %v1062, 4294901760
  %2918 = vmatmul.f32.gmra.mxu0 %v2917
  %v2919 = vpop.f32.mrf.mxu0
  %v2920 = vadd.f32 %v2813, %v2919
  %v2921 = vand.u32 %v1065, 4294901760
  %2922 = vmatmul.f32.gmra.mxu0 %v2921
  %v2923 = vpop.f32.mrf.mxu0
  %v2924 = vadd.f32 %v2819, %v2923
  %v2925 = vand.u32 %v1068, 4294901760
  %2926 = vmatmul.f32.gmra.mxu0 %v2925
  %v2927 = vpop.f32.mrf.mxu0
  %v2928 = vadd.f32 %v2825, %v2927
  %v2929 = vand.u32 %v1071, 4294901760
  %2930 = vmatmul.f32.gmra.mxu0 %v2929
  %v2931 = vpop.f32.mrf.mxu0
  %v2932 = vadd.f32 %v2831, %v2931
  %v2933 = vand.u32 %v1074, 4294901760
  %2934 = vmatmul.f32.gmra.mxu0 %v2933
  %v2935 = vpop.f32.mrf.mxu0
  %v2936 = vadd.f32 %v2837, %v2935
  %v2937 = vand.u32 %v1077, 4294901760
  %2938 = vmatmul.f32.gmra.mxu0 %v2937
  %v2939 = vpop.f32.mrf.mxu0
  %v2940 = vadd.f32 %v2843, %v2939
  %v2941 = vand.u32 %v1080, 4294901760
  %2942 = vmatmul.f32.gmra.mxu0 %v2941
  %v2943 = vpop.f32.mrf.mxu0
  %v2944 = vadd.f32 %v2849, %v2943
  %v2945 = vand.u32 %v1083, 4294901760
  %2946 = vmatmul.f32.gmra.mxu0 %v2945
  %v2947 = vpop.f32.mrf.mxu0
  %v2948 = vadd.f32 %v2855, %v2947
  %2949 = vdwg.mxu0
  %2950 = vmatpush.msra.mxu0 0.0
  %2951 = vmatpush.msra.mxu0 0.0
  %2952 = vmatpush.msra.mxu0 0.0
  %2953 = vmatpush.msra.mxu0 0.0
  %2954 = vmatpush.msra.mxu0 0.0
  %2955 = vmatpush.msra.mxu0 0.0
  %2956 = vmatpush.msra.mxu0 0.0
  %2957 = vmatpush.msra.mxu0 0.0
  %2958 = vmatpush.msra.mxu0 0.0
  %2959 = vmatpush.msra.mxu0 0.0
  %2960 = vmatpush.msra.mxu0 0.0
  %2961 = vmatpush.msra.mxu0 0.0
  %v2962 = vand.u32 %v923, 4294901760
  %2963 = vmatpush.msra.mxu0 %v2962
  %v2964 = vand.u32 %v920, 4294901760
  %2965 = vmatpush.msra.mxu0 %v2964
  %v2966 = vand.u32 %v917, 4294901760
  %2967 = vmatpush.msra.mxu0 %v2966
  %v2968 = vand.u32 %v914, 4294901760
  %2969 = vmatpush.msra.mxu0 %v2968
  %v2970 = vand.u32 %v1038, 4294901760
  %2971 = vmatmul.f32.gmra.mxu0 %v2970
  %v2972 = vpop.f32.mrf.mxu0
  %v2973 = vadd.f32 %v2888, %v2972
  %v2974 = vand.u32 %v1041, 4294901760
  %2975 = vmatmul.f32.gmra.mxu0 %v2974
  %v2976 = vpop.f32.mrf.mxu0
  %v2977 = vadd.f32 %v2892, %v2976
  %v2978 = vand.u32 %v1044, 4294901760
  %2979 = vmatmul.f32.gmra.mxu0 %v2978
  %v2980 = vpop.f32.mrf.mxu0
  %v2981 = vadd.f32 %v2896, %v2980
  %v2982 = vand.u32 %v1047, 4294901760
  %2983 = vmatmul.f32.gmra.mxu0 %v2982
  %v2984 = vpop.f32.mrf.mxu0
  %v2985 = vadd.f32 %v2900, %v2984
  %v2986 = vand.u32 %v1050, 4294901760
  %2987 = vmatmul.f32.gmra.mxu0 %v2986
  %v2988 = vpop.f32.mrf.mxu0
  %v2989 = vadd.f32 %v2904, %v2988
  %v2990 = vand.u32 %v1053, 4294901760
  %2991 = vmatmul.f32.gmra.mxu0 %v2990
  %v2992 = vpop.f32.mrf.mxu0
  %v2993 = vadd.f32 %v2908, %v2992
  %v2994 = vand.u32 %v1056, 4294901760
  %2995 = vmatmul.f32.gmra.mxu0 %v2994
  %v2996 = vpop.f32.mrf.mxu0
  %v2997 = vadd.f32 %v2912, %v2996
  %v2998 = vand.u32 %v1059, 4294901760
  %2999 = vmatmul.f32.gmra.mxu0 %v2998
  %v3000 = vpop.f32.mrf.mxu0
  %v3001 = vadd.f32 %v2916, %v3000
  %v3002 = vand.u32 %v1062, 4294901760
  %3003 = vmatmul.f32.gmra.mxu0 %v3002
  %v3004 = vpop.f32.mrf.mxu0
  %v3005 = vadd.f32 %v2920, %v3004
  %v3006 = vand.u32 %v1065, 4294901760
  %3007 = vmatmul.f32.gmra.mxu0 %v3006
  %v3008 = vpop.f32.mrf.mxu0
  %v3009 = vadd.f32 %v2924, %v3008
  %v3010 = vand.u32 %v1068, 4294901760
  %3011 = vmatmul.f32.gmra.mxu0 %v3010
  %v3012 = vpop.f32.mrf.mxu0
  %v3013 = vadd.f32 %v2928, %v3012
  %v3014 = vand.u32 %v1071, 4294901760
  %3015 = vmatmul.f32.gmra.mxu0 %v3014
  %v3016 = vpop.f32.mrf.mxu0
  %v3017 = vadd.f32 %v2932, %v3016
  %v3018 = vand.u32 %v1074, 4294901760
  %3019 = vmatmul.f32.gmra.mxu0 %v3018
  %v3020 = vpop.f32.mrf.mxu0
  %v3021 = vadd.f32 %v2936, %v3020
  %v3022 = vand.u32 %v1077, 4294901760
  %3023 = vmatmul.f32.gmra.mxu0 %v3022
  %v3024 = vpop.f32.mrf.mxu0
  %v3025 = vadd.f32 %v2940, %v3024
  %v3026 = vand.u32 %v1080, 4294901760
  %3027 = vmatmul.f32.gmra.mxu0 %v3026
  %v3028 = vpop.f32.mrf.mxu0
  %v3029 = vadd.f32 %v2944, %v3028
  %v3030 = vand.u32 %v1083, 4294901760
  %3031 = vmatmul.f32.gmra.mxu0 %v3030
  %v3032 = vpop.f32.mrf.mxu0
  %v3033 = vadd.f32 %v2948, %v3032
  %3034 = vdwg.mxu0
  %v3035 = vmax.f32 %v1673, 0.0
  %v3036 = vmax.f32 %v2323, 0.0
  %v3037 = vmax.f32 %v2973, 0.0
  %v3038 = vmax.f32 %v1677, 0.0
  %v3039 = vmax.f32 %v2327, 0.0
  %v3040 = vmax.f32 %v2977, 0.0
  %v3041 = vmax.f32 %v1681, 0.0
  %v3042 = vmax.f32 %v2331, 0.0
  %v3043 = vmax.f32 %v2981, 0.0
  %v3044 = vmax.f32 %v1685, 0.0
  %v3045 = vmax.f32 %v2335, 0.0
  %v3046 = vmax.f32 %v2985, 0.0
  %v3047 = vmax.f32 %v1689, 0.0
  %v3048 = vmax.f32 %v2339, 0.0
  %v3049 = vmax.f32 %v2989, 0.0
  %v3050 = vmax.f32 %v1693, 0.0
  %v3051 = vmax.f32 %v2343, 0.0
  %v3052 = vmax.f32 %v2993, 0.0
  %v3053 = vmax.f32 %v1697, 0.0
  %v3054 = vmax.f32 %v2347, 0.0
  %v3055 = vmax.f32 %v2997, 0.0
  %v3056 = vmax.f32 %v1701, 0.0
  %v3057 = vmax.f32 %v2351, 0.0
  %v3058 = vmax.f32 %v3001, 0.0
  %v3059 = vmax.f32 %v1705, 0.0
  %v3060 = vmax.f32 %v2355, 0.0
  %v3061 = vmax.f32 %v3005, 0.0
  %v3062 = vmax.f32 %v1709, 0.0
  %v3063 = vmax.f32 %v2359, 0.0
  %v3064 = vmax.f32 %v3009, 0.0
  %v3065 = vmax.f32 %v1713, 0.0
  %v3066 = vmax.f32 %v2363, 0.0
  %v3067 = vmax.f32 %v3013, 0.0
  %v3068 = vmax.f32 %v1717, 0.0
  %v3069 = vmax.f32 %v2367, 0.0
  %v3070 = vmax.f32 %v3017, 0.0
  %v3071 = vmax.f32 %v1721, 0.0
  %v3072 = vmax.f32 %v2371, 0.0
  %v3073 = vmax.f32 %v3021, 0.0
  %v3074 = vmax.f32 %v1725, 0.0
  %v3075 = vmax.f32 %v2375, 0.0
  %v3076 = vmax.f32 %v3025, 0.0
  %v3077 = vmax.f32 %v1729, 0.0
  %v3078 = vmax.f32 %v2379, 0.0
  %v3079 = vmax.f32 %v3029, 0.0
  %v3080 = vmax.f32 %v1733, 0.0
  %v3081 = vmax.f32 %v2383, 0.0
  %v3082 = vmax.f32 %v3033, 0.0
  %v3083 = vld [vmem:[%s7] sm:$0x1]
  %s3084 = sld [smem:[#allocation2]]
  %v3085 = vstv %s3084
  %v3086 = vand.u32 %v3080, 4294901760
  %3087 = vmatpush.msra.mxu0 %v3086
  %v3088 = vand.u32 %v3077, 4294901760
  %3089 = vmatpush.msra.mxu0 %v3088
  %v3090 = vand.u32 %v3074, 4294901760
  %3091 = vmatpush.msra.mxu0 %v3090
  %v3092 = vand.u32 %v3071, 4294901760
  %3093 = vmatpush.msra.mxu0 %v3092
  %v3094 = vand.u32 %v3068, 4294901760
  %3095 = vmatpush.msra.mxu0 %v3094
  %v3096 = vand.u32 %v3065, 4294901760
  %3097 = vmatpush.msra.mxu0 %v3096
  %v3098 = vand.u32 %v3062, 4294901760
  %3099 = vmatpush.msra.mxu0 %v3098
  %v3100 = vand.u32 %v3059, 4294901760
  %3101 = vmatpush.msra.mxu0 %v3100
  %v3102 = vand.u32 %v3056, 4294901760
  %3103 = vmatpush.msra.mxu0 %v3102
  %v3104 = vand.u32 %v3053, 4294901760
  %3105 = vmatpush.msra.mxu0 %v3104
  %v3106 = vand.u32 %v3050, 4294901760
  %3107 = vmatpush.msra.mxu0 %v3106
  %v3108 = vand.u32 %v3047, 4294901760
  %3109 = vmatpush.msra.mxu0 %v3108
  %v3110 = vand.u32 %v3044, 4294901760
  %3111 = vmatpush.msra.mxu0 %v3110
  %v3112 = vand.u32 %v3041, 4294901760
  %3113 = vmatpush.msra.mxu0 %v3112
  %v3114 = vand.u32 %v3038, 4294901760
  %3115 = vmatpush.msra.mxu0 %v3114
  %v3116 = vand.u32 %v3035, 4294901760
  %3117 = vmatpush.msra.mxu0 %v3116
  %v3118 = vand.u32 %v3083, 4294901760
  %v3119 = vsub.f32 %v3083, %v3118
  %v3120 = vand.u32 %v3119, 4294901760
  %v3121 = vsub.f32 %v3119, %v3120
  %v3122 = vand.u32 %v3121, 4294901760
  %3123 = vmatmul.f32.gmra.mxu0 %v3122
  %v3124 = vpop.f32.mrf.mxu0
  %v3125 = vadd.f32 %v3085, %v3124
  %3126 = vdwg.mxu0
  %v3127 = vand.u32 %v3080, 4294901760
  %v3128 = vsub.f32 %v3080, %v3127
  %v3129 = vand.u32 %v3128, 4294901760
  %v3130 = vsub.f32 %v3128, %v3129
  %v3131 = vand.u32 %v3130, 4294901760
  %3132 = vmatpush.msra.mxu0 %v3131
  %v3133 = vand.u32 %v3077, 4294901760
  %v3134 = vsub.f32 %v3077, %v3133
  %v3135 = vand.u32 %v3134, 4294901760
  %v3136 = vsub.f32 %v3134, %v3135
  %v3137 = vand.u32 %v3136, 4294901760
  %3138 = vmatpush.msra.mxu0 %v3137
  %v3139 = vand.u32 %v3074, 4294901760
  %v3140 = vsub.f32 %v3074, %v3139
  %v3141 = vand.u32 %v3140, 4294901760
  %v3142 = vsub.f32 %v3140, %v3141
  %v3143 = vand.u32 %v3142, 4294901760
  %3144 = vmatpush.msra.mxu0 %v3143
  %v3145 = vand.u32 %v3071, 4294901760
  %v3146 = vsub.f32 %v3071, %v3145
  %v3147 = vand.u32 %v3146, 4294901760
  %v3148 = vsub.f32 %v3146, %v3147
  %v3149 = vand.u32 %v3148, 4294901760
  %3150 = vmatpush.msra.mxu0 %v3149
  %v3151 = vand.u32 %v3068, 4294901760
  %v3152 = vsub.f32 %v3068, %v3151
  %v3153 = vand.u32 %v3152, 4294901760
  %v3154 = vsub.f32 %v3152, %v3153
  %v3155 = vand.u32 %v3154, 4294901760
  %3156 = vmatpush.msra.mxu0 %v3155
  %v3157 = vand.u32 %v3065, 4294901760
  %v3158 = vsub.f32 %v3065, %v3157
  %v3159 = vand.u32 %v3158, 4294901760
  %v3160 = vsub.f32 %v3158, %v3159
  %v3161 = vand.u32 %v3160, 4294901760
  %3162 = vmatpush.msra.mxu0 %v3161
  %v3163 = vand.u32 %v3062, 4294901760
  %v3164 = vsub.f32 %v3062, %v3163
  %v3165 = vand.u32 %v3164, 4294901760
  %v3166 = vsub.f32 %v3164, %v3165
  %v3167 = vand.u32 %v3166, 4294901760
  %3168 = vmatpush.msra.mxu0 %v3167
  %v3169 = vand.u32 %v3059, 4294901760
  %v3170 = vsub.f32 %v3059, %v3169
  %v3171 = vand.u32 %v3170, 4294901760
  %v3172 = vsub.f32 %v3170, %v3171
  %v3173 = vand.u32 %v3172, 4294901760
  %3174 = vmatpush.msra.mxu0 %v3173
  %v3175 = vand.u32 %v3056, 4294901760
  %v3176 = vsub.f32 %v3056, %v3175
  %v3177 = vand.u32 %v3176, 4294901760
  %v3178 = vsub.f32 %v3176, %v3177
  %v3179 = vand.u32 %v3178, 4294901760
  %3180 = vmatpush.msra.mxu0 %v3179
  %v3181 = vand.u32 %v3053, 4294901760
  %v3182 = vsub.f32 %v3053, %v3181
  %v3183 = vand.u32 %v3182, 4294901760
  %v3184 = vsub.f32 %v3182, %v3183
  %v3185 = vand.u32 %v3184, 4294901760
  %3186 = vmatpush.msra.mxu0 %v3185
  %v3187 = vand.u32 %v3050, 4294901760
  %v3188 = vsub.f32 %v3050, %v3187
  %v3189 = vand.u32 %v3188, 4294901760
  %v3190 = vsub.f32 %v3188, %v3189
  %v3191 = vand.u32 %v3190, 4294901760
  %3192 = vmatpush.msra.mxu0 %v3191
  %v3193 = vand.u32 %v3047, 4294901760
  %v3194 = vsub.f32 %v3047, %v3193
  %v3195 = vand.u32 %v3194, 4294901760
  %v3196 = vsub.f32 %v3194, %v3195
  %v3197 = vand.u32 %v3196, 4294901760
  %3198 = vmatpush.msra.mxu0 %v3197
  %v3199 = vand.u32 %v3044, 4294901760
  %v3200 = vsub.f32 %v3044, %v3199
  %v3201 = vand.u32 %v3200, 4294901760
  %v3202 = vsub.f32 %v3200, %v3201
  %v3203 = vand.u32 %v3202, 4294901760
  %3204 = vmatpush.msra.mxu0 %v3203
  %v3205 = vand.u32 %v3041, 4294901760
  %v3206 = vsub.f32 %v3041, %v3205
  %v3207 = vand.u32 %v3206, 4294901760
  %v3208 = vsub.f32 %v3206, %v3207
  %v3209 = vand.u32 %v3208, 4294901760
  %3210 = vmatpush.msra.mxu0 %v3209
  %v3211 = vand.u32 %v3038, 4294901760
  %v3212 = vsub.f32 %v3038, %v3211
  %v3213 = vand.u32 %v3212, 4294901760
  %v3214 = vsub.f32 %v3212, %v3213
  %v3215 = vand.u32 %v3214, 4294901760
  %3216 = vmatpush.msra.mxu0 %v3215
  %v3217 = vand.u32 %v3035, 4294901760
  %v3218 = vsub.f32 %v3035, %v3217
  %v3219 = vand.u32 %v3218, 4294901760
  %v3220 = vsub.f32 %v3218, %v3219
  %v3221 = vand.u32 %v3220, 4294901760
  %3222 = vmatpush.msra.mxu0 %v3221
  %v3223 = vand.u32 %v3083, 4294901760
  %3224 = vmatmul.f32.gmra.mxu0 %v3223
  %v3225 = vpop.f32.mrf.mxu0
  %v3226 = vadd.f32 %v3125, %v3225
  %3227 = vdwg.mxu0
  %v3228 = vand.u32 %v3080, 4294901760
  %v3229 = vsub.f32 %v3080, %v3228
  %3230 = vmatpush.msra.mxu0 %v3229
  %v3231 = vand.u32 %v3077, 4294901760
  %v3232 = vsub.f32 %v3077, %v3231
  %3233 = vmatpush.msra.mxu0 %v3232
  %v3234 = vand.u32 %v3074, 4294901760
  %v3235 = vsub.f32 %v3074, %v3234
  %3236 = vmatpush.msra.mxu0 %v3235
  %v3237 = vand.u32 %v3071, 4294901760
  %v3238 = vsub.f32 %v3071, %v3237
  %3239 = vmatpush.msra.mxu0 %v3238
  %v3240 = vand.u32 %v3068, 4294901760
  %v3241 = vsub.f32 %v3068, %v3240
  %3242 = vmatpush.msra.mxu0 %v3241
  %v3243 = vand.u32 %v3065, 4294901760
  %v3244 = vsub.f32 %v3065, %v3243
  %3245 = vmatpush.msra.mxu0 %v3244
  %v3246 = vand.u32 %v3062, 4294901760
  %v3247 = vsub.f32 %v3062, %v3246
  %3248 = vmatpush.msra.mxu0 %v3247
  %v3249 = vand.u32 %v3059, 4294901760
  %v3250 = vsub.f32 %v3059, %v3249
  %3251 = vmatpush.msra.mxu0 %v3250
  %v3252 = vand.u32 %v3056, 4294901760
  %v3253 = vsub.f32 %v3056, %v3252
  %3254 = vmatpush.msra.mxu0 %v3253
  %v3255 = vand.u32 %v3053, 4294901760
  %v3256 = vsub.f32 %v3053, %v3255
  %3257 = vmatpush.msra.mxu0 %v3256
  %v3258 = vand.u32 %v3050, 4294901760
  %v3259 = vsub.f32 %v3050, %v3258
  %3260 = vmatpush.msra.mxu0 %v3259
  %v3261 = vand.u32 %v3047, 4294901760
  %v3262 = vsub.f32 %v3047, %v3261
  %3263 = vmatpush.msra.mxu0 %v3262
  %v3264 = vand.u32 %v3044, 4294901760
  %v3265 = vsub.f32 %v3044, %v3264
  %3266 = vmatpush.msra.mxu0 %v3265
  %v3267 = vand.u32 %v3041, 4294901760
  %v3268 = vsub.f32 %v3041, %v3267
  %3269 = vmatpush.msra.mxu0 %v3268
  %v3270 = vand.u32 %v3038, 4294901760
  %v3271 = vsub.f32 %v3038, %v3270
  %3272 = vmatpush.msra.mxu0 %v3271
  %v3273 = vand.u32 %v3035, 4294901760
  %v3274 = vsub.f32 %v3035, %v3273
  %3275 = vmatpush.msra.mxu0 %v3274
  %v3276 = vand.u32 %v3083, 4294901760
  %v3277 = vsub.f32 %v3083, %v3276
  %3278 = vmatmul.f32.gmra.mxu0 %v3277
  %v3279 = vpop.f32.mrf.mxu0
  %v3280 = vadd.f32 %v3226, %v3279
  %3281 = vdwg.mxu0
  %v3282 = vand.u32 %v3080, 4294901760
  %3283 = vmatpush.msra.mxu0 %v3282
  %v3284 = vand.u32 %v3077, 4294901760
  %3285 = vmatpush.msra.mxu0 %v3284
  %v3286 = vand.u32 %v3074, 4294901760
  %3287 = vmatpush.msra.mxu0 %v3286
  %v3288 = vand.u32 %v3071, 4294901760
  %3289 = vmatpush.msra.mxu0 %v3288
  %v3290 = vand.u32 %v3068, 4294901760
  %3291 = vmatpush.msra.mxu0 %v3290
  %v3292 = vand.u32 %v3065, 4294901760
  %3293 = vmatpush.msra.mxu0 %v3292
  %v3294 = vand.u32 %v3062, 4294901760
  %3295 = vmatpush.msra.mxu0 %v3294
  %v3296 = vand.u32 %v3059, 4294901760
  %3297 = vmatpush.msra.mxu0 %v3296
  %v3298 = vand.u32 %v3056, 4294901760
  %3299 = vmatpush.msra.mxu0 %v3298
  %v3300 = vand.u32 %v3053, 4294901760
  %3301 = vmatpush.msra.mxu0 %v3300
  %v3302 = vand.u32 %v3050, 4294901760
  %3303 = vmatpush.msra.mxu0 %v3302
  %v3304 = vand.u32 %v3047, 4294901760
  %3305 = vmatpush.msra.mxu0 %v3304
  %v3306 = vand.u32 %v3044, 4294901760
  %3307 = vmatpush.msra.mxu0 %v3306
  %v3308 = vand.u32 %v3041, 4294901760
  %3309 = vmatpush.msra.mxu0 %v3308
  %v3310 = vand.u32 %v3038, 4294901760
  %3311 = vmatpush.msra.mxu0 %v3310
  %v3312 = vand.u32 %v3035, 4294901760
  %3313 = vmatpush.msra.mxu0 %v3312
  %v3314 = vand.u32 %v3083, 4294901760
  %v3315 = vsub.f32 %v3083, %v3314
  %v3316 = vand.u32 %v3315, 4294901760
  %3317 = vmatmul.f32.gmra.mxu0 %v3316
  %v3318 = vpop.f32.mrf.mxu0
  %v3319 = vadd.f32 %v3280, %v3318
  %3320 = vdwg.mxu0
  %v3321 = vand.u32 %v3080, 4294901760
  %v3322 = vsub.f32 %v3080, %v3321
  %v3323 = vand.u32 %v3322, 4294901760
  %3324 = vmatpush.msra.mxu0 %v3323
  %v3325 = vand.u32 %v3077, 4294901760
  %v3326 = vsub.f32 %v3077, %v3325
  %v3327 = vand.u32 %v3326, 4294901760
  %3328 = vmatpush.msra.mxu0 %v3327
  %v3329 = vand.u32 %v3074, 4294901760
  %v3330 = vsub.f32 %v3074, %v3329
  %v3331 = vand.u32 %v3330, 4294901760
  %3332 = vmatpush.msra.mxu0 %v3331
  %v3333 = vand.u32 %v3071, 4294901760
  %v3334 = vsub.f32 %v3071, %v3333
  %v3335 = vand.u32 %v3334, 4294901760
  %3336 = vmatpush.msra.mxu0 %v3335
  %v3337 = vand.u32 %v3068, 4294901760
  %v3338 = vsub.f32 %v3068, %v3337
  %v3339 = vand.u32 %v3338, 4294901760
  %3340 = vmatpush.msra.mxu0 %v3339
  %v3341 = vand.u32 %v3065, 4294901760
  %v3342 = vsub.f32 %v3065, %v3341
  %v3343 = vand.u32 %v3342, 4294901760
  %3344 = vmatpush.msra.mxu0 %v3343
  %v3345 = vand.u32 %v3062, 4294901760
  %v3346 = vsub.f32 %v3062, %v3345
  %v3347 = vand.u32 %v3346, 4294901760
  %3348 = vmatpush.msra.mxu0 %v3347
  %v3349 = vand.u32 %v3059, 4294901760
  %v3350 = vsub.f32 %v3059, %v3349
  %v3351 = vand.u32 %v3350, 4294901760
  %3352 = vmatpush.msra.mxu0 %v3351
  %v3353 = vand.u32 %v3056, 4294901760
  %v3354 = vsub.f32 %v3056, %v3353
  %v3355 = vand.u32 %v3354, 4294901760
  %3356 = vmatpush.msra.mxu0 %v3355
  %v3357 = vand.u32 %v3053, 4294901760
  %v3358 = vsub.f32 %v3053, %v3357
  %v3359 = vand.u32 %v3358, 4294901760
  %3360 = vmatpush.msra.mxu0 %v3359
  %v3361 = vand.u32 %v3050, 4294901760
  %v3362 = vsub.f32 %v3050, %v3361
  %v3363 = vand.u32 %v3362, 4294901760
  %3364 = vmatpush.msra.mxu0 %v3363
  %v3365 = vand.u32 %v3047, 4294901760
  %v3366 = vsub.f32 %v3047, %v3365
  %v3367 = vand.u32 %v3366, 4294901760
  %3368 = vmatpush.msra.mxu0 %v3367
  %v3369 = vand.u32 %v3044, 4294901760
  %v3370 = vsub.f32 %v3044, %v3369
  %v3371 = vand.u32 %v3370, 4294901760
  %3372 = vmatpush.msra.mxu0 %v3371
  %v3373 = vand.u32 %v3041, 4294901760
  %v3374 = vsub.f32 %v3041, %v3373
  %v3375 = vand.u32 %v3374, 4294901760
  %3376 = vmatpush.msra.mxu0 %v3375
  %v3377 = vand.u32 %v3038, 4294901760
  %v3378 = vsub.f32 %v3038, %v3377
  %v3379 = vand.u32 %v3378, 4294901760
  %3380 = vmatpush.msra.mxu0 %v3379
  %v3381 = vand.u32 %v3035, 4294901760
  %v3382 = vsub.f32 %v3035, %v3381
  %v3383 = vand.u32 %v3382, 4294901760
  %3384 = vmatpush.msra.mxu0 %v3383
  %v3385 = vand.u32 %v3083, 4294901760
  %3386 = vmatmul.f32.gmra.mxu0 %v3385
  %v3387 = vpop.f32.mrf.mxu0
  %v3388 = vadd.f32 %v3319, %v3387
  %3389 = vdwg.mxu0
  %v3390 = vand.u32 %v3080, 4294901760
  %3391 = vmatpush.msra.mxu0 %v3390
  %v3392 = vand.u32 %v3077, 4294901760
  %3393 = vmatpush.msra.mxu0 %v3392
  %v3394 = vand.u32 %v3074, 4294901760
  %3395 = vmatpush.msra.mxu0 %v3394
  %v3396 = vand.u32 %v3071, 4294901760
  %3397 = vmatpush.msra.mxu0 %v3396
  %v3398 = vand.u32 %v3068, 4294901760
  %3399 = vmatpush.msra.mxu0 %v3398
  %v3400 = vand.u32 %v3065, 4294901760
  %3401 = vmatpush.msra.mxu0 %v3400
  %v3402 = vand.u32 %v3062, 4294901760
  %3403 = vmatpush.msra.mxu0 %v3402
  %v3404 = vand.u32 %v3059, 4294901760
  %3405 = vmatpush.msra.mxu0 %v3404
  %v3406 = vand.u32 %v3056, 4294901760
  %3407 = vmatpush.msra.mxu0 %v3406
  %v3408 = vand.u32 %v3053, 4294901760
  %3409 = vmatpush.msra.mxu0 %v3408
  %v3410 = vand.u32 %v3050, 4294901760
  %3411 = vmatpush.msra.mxu0 %v3410
  %v3412 = vand.u32 %v3047, 4294901760
  %3413 = vmatpush.msra.mxu0 %v3412
  %v3414 = vand.u32 %v3044, 4294901760
  %3415 = vmatpush.msra.mxu0 %v3414
  %v3416 = vand.u32 %v3041, 4294901760
  %3417 = vmatpush.msra.mxu0 %v3416
  %v3418 = vand.u32 %v3038, 4294901760
  %3419 = vmatpush.msra.mxu0 %v3418
  %v3420 = vand.u32 %v3035, 4294901760
  %3421 = vmatpush.msra.mxu0 %v3420
  %v3422 = vand.u32 %v3083, 4294901760
  %3423 = vmatmul.f32.gmra.mxu0 %v3422
  %v3424 = vpop.f32.mrf.mxu0
  %v3425 = vadd.f32 %v3388, %v3424
  %3426 = vdwg.mxu0
  %v3427 = vand.u32 %v3081, 4294901760
  %3428 = vmatpush.msra.mxu0 %v3427
  %v3429 = vand.u32 %v3078, 4294901760
  %3430 = vmatpush.msra.mxu0 %v3429
  %v3431 = vand.u32 %v3075, 4294901760
  %3432 = vmatpush.msra.mxu0 %v3431
  %v3433 = vand.u32 %v3072, 4294901760
  %3434 = vmatpush.msra.mxu0 %v3433
  %v3435 = vand.u32 %v3069, 4294901760
  %3436 = vmatpush.msra.mxu0 %v3435
  %v3437 = vand.u32 %v3066, 4294901760
  %3438 = vmatpush.msra.mxu0 %v3437
  %v3439 = vand.u32 %v3063, 4294901760
  %3440 = vmatpush.msra.mxu0 %v3439
  %v3441 = vand.u32 %v3060, 4294901760
  %3442 = vmatpush.msra.mxu0 %v3441
  %v3443 = vand.u32 %v3057, 4294901760
  %3444 = vmatpush.msra.mxu0 %v3443
  %v3445 = vand.u32 %v3054, 4294901760
  %3446 = vmatpush.msra.mxu0 %v3445
  %v3447 = vand.u32 %v3051, 4294901760
  %3448 = vmatpush.msra.mxu0 %v3447
  %v3449 = vand.u32 %v3048, 4294901760
  %3450 = vmatpush.msra.mxu0 %v3449
  %v3451 = vand.u32 %v3045, 4294901760
  %3452 = vmatpush.msra.mxu0 %v3451
  %v3453 = vand.u32 %v3042, 4294901760
  %3454 = vmatpush.msra.mxu0 %v3453
  %v3455 = vand.u32 %v3039, 4294901760
  %3456 = vmatpush.msra.mxu0 %v3455
  %v3457 = vand.u32 %v3036, 4294901760
  %3458 = vmatpush.msra.mxu0 %v3457
  %v3459 = vand.u32 %v3083, 4294901760
  %v3460 = vsub.f32 %v3083, %v3459
  %v3461 = vand.u32 %v3460, 4294901760
  %v3462 = vsub.f32 %v3460, %v3461
  %v3463 = vand.u32 %v3462, 4294901760
  %3464 = vmatmul.f32.gmra.mxu0 %v3463
  %v3465 = vpop.f32.mrf.mxu0
  %v3466 = vadd.f32 %v3085, %v3465
  %3467 = vdwg.mxu0
  %v3468 = vand.u32 %v3081, 4294901760
  %v3469 = vsub.f32 %v3081, %v3468
  %v3470 = vand.u32 %v3469, 4294901760
  %v3471 = vsub.f32 %v3469, %v3470
  %v3472 = vand.u32 %v3471, 4294901760
  %3473 = vmatpush.msra.mxu0 %v3472
  %v3474 = vand.u32 %v3078, 4294901760
  %v3475 = vsub.f32 %v3078, %v3474
  %v3476 = vand.u32 %v3475, 4294901760
  %v3477 = vsub.f32 %v3475, %v3476
  %v3478 = vand.u32 %v3477, 4294901760
  %3479 = vmatpush.msra.mxu0 %v3478
  %v3480 = vand.u32 %v3075, 4294901760
  %v3481 = vsub.f32 %v3075, %v3480
  %v3482 = vand.u32 %v3481, 4294901760
  %v3483 = vsub.f32 %v3481, %v3482
  %v3484 = vand.u32 %v3483, 4294901760
  %3485 = vmatpush.msra.mxu0 %v3484
  %v3486 = vand.u32 %v3072, 4294901760
  %v3487 = vsub.f32 %v3072, %v3486
  %v3488 = vand.u32 %v3487, 4294901760
  %v3489 = vsub.f32 %v3487, %v3488
  %v3490 = vand.u32 %v3489, 4294901760
  %3491 = vmatpush.msra.mxu0 %v3490
  %v3492 = vand.u32 %v3069, 4294901760
  %v3493 = vsub.f32 %v3069, %v3492
  %v3494 = vand.u32 %v3493, 4294901760
  %v3495 = vsub.f32 %v3493, %v3494
  %v3496 = vand.u32 %v3495, 4294901760
  %3497 = vmatpush.msra.mxu0 %v3496
  %v3498 = vand.u32 %v3066, 4294901760
  %v3499 = vsub.f32 %v3066, %v3498
  %v3500 = vand.u32 %v3499, 4294901760
  %v3501 = vsub.f32 %v3499, %v3500
  %v3502 = vand.u32 %v3501, 4294901760
  %3503 = vmatpush.msra.mxu0 %v3502
  %v3504 = vand.u32 %v3063, 4294901760
  %v3505 = vsub.f32 %v3063, %v3504
  %v3506 = vand.u32 %v3505, 4294901760
  %v3507 = vsub.f32 %v3505, %v3506
  %v3508 = vand.u32 %v3507, 4294901760
  %3509 = vmatpush.msra.mxu0 %v3508
  %v3510 = vand.u32 %v3060, 4294901760
  %v3511 = vsub.f32 %v3060, %v3510
  %v3512 = vand.u32 %v3511, 4294901760
  %v3513 = vsub.f32 %v3511, %v3512
  %v3514 = vand.u32 %v3513, 4294901760
  %3515 = vmatpush.msra.mxu0 %v3514
  %v3516 = vand.u32 %v3057, 4294901760
  %v3517 = vsub.f32 %v3057, %v3516
  %v3518 = vand.u32 %v3517, 4294901760
  %v3519 = vsub.f32 %v3517, %v3518
  %v3520 = vand.u32 %v3519, 4294901760
  %3521 = vmatpush.msra.mxu0 %v3520
  %v3522 = vand.u32 %v3054, 4294901760
  %v3523 = vsub.f32 %v3054, %v3522
  %v3524 = vand.u32 %v3523, 4294901760
  %v3525 = vsub.f32 %v3523, %v3524
  %v3526 = vand.u32 %v3525, 4294901760
  %3527 = vmatpush.msra.mxu0 %v3526
  %v3528 = vand.u32 %v3051, 4294901760
  %v3529 = vsub.f32 %v3051, %v3528
  %v3530 = vand.u32 %v3529, 4294901760
  %v3531 = vsub.f32 %v3529, %v3530
  %v3532 = vand.u32 %v3531, 4294901760
  %3533 = vmatpush.msra.mxu0 %v3532
  %v3534 = vand.u32 %v3048, 4294901760
  %v3535 = vsub.f32 %v3048, %v3534
  %v3536 = vand.u32 %v3535, 4294901760
  %v3537 = vsub.f32 %v3535, %v3536
  %v3538 = vand.u32 %v3537, 4294901760
  %3539 = vmatpush.msra.mxu0 %v3538
  %v3540 = vand.u32 %v3045, 4294901760
  %v3541 = vsub.f32 %v3045, %v3540
  %v3542 = vand.u32 %v3541, 4294901760
  %v3543 = vsub.f32 %v3541, %v3542
  %v3544 = vand.u32 %v3543, 4294901760
  %3545 = vmatpush.msra.mxu0 %v3544
  %v3546 = vand.u32 %v3042, 4294901760
  %v3547 = vsub.f32 %v3042, %v3546
  %v3548 = vand.u32 %v3547, 4294901760
  %v3549 = vsub.f32 %v3547, %v3548
  %v3550 = vand.u32 %v3549, 4294901760
  %3551 = vmatpush.msra.mxu0 %v3550
  %v3552 = vand.u32 %v3039, 4294901760
  %v3553 = vsub.f32 %v3039, %v3552
  %v3554 = vand.u32 %v3553, 4294901760
  %v3555 = vsub.f32 %v3553, %v3554
  %v3556 = vand.u32 %v3555, 4294901760
  %3557 = vmatpush.msra.mxu0 %v3556
  %v3558 = vand.u32 %v3036, 4294901760
  %v3559 = vsub.f32 %v3036, %v3558
  %v3560 = vand.u32 %v3559, 4294901760
  %v3561 = vsub.f32 %v3559, %v3560
  %v3562 = vand.u32 %v3561, 4294901760
  %3563 = vmatpush.msra.mxu0 %v3562
  %v3564 = vand.u32 %v3083, 4294901760
  %3565 = vmatmul.f32.gmra.mxu0 %v3564
  %v3566 = vpop.f32.mrf.mxu0
  %v3567 = vadd.f32 %v3466, %v3566
  %3568 = vdwg.mxu0
  %v3569 = vand.u32 %v3081, 4294901760
  %v3570 = vsub.f32 %v3081, %v3569
  %3571 = vmatpush.msra.mxu0 %v3570
  %v3572 = vand.u32 %v3078, 4294901760
  %v3573 = vsub.f32 %v3078, %v3572
  %3574 = vmatpush.msra.mxu0 %v3573
  %v3575 = vand.u32 %v3075, 4294901760
  %v3576 = vsub.f32 %v3075, %v3575
  %3577 = vmatpush.msra.mxu0 %v3576
  %v3578 = vand.u32 %v3072, 4294901760
  %v3579 = vsub.f32 %v3072, %v3578
  %3580 = vmatpush.msra.mxu0 %v3579
  %v3581 = vand.u32 %v3069, 4294901760
  %v3582 = vsub.f32 %v3069, %v3581
  %3583 = vmatpush.msra.mxu0 %v3582
  %v3584 = vand.u32 %v3066, 4294901760
  %v3585 = vsub.f32 %v3066, %v3584
  %3586 = vmatpush.msra.mxu0 %v3585
  %v3587 = vand.u32 %v3063, 4294901760
  %v3588 = vsub.f32 %v3063, %v3587
  %3589 = vmatpush.msra.mxu0 %v3588
  %v3590 = vand.u32 %v3060, 4294901760
  %v3591 = vsub.f32 %v3060, %v3590
  %3592 = vmatpush.msra.mxu0 %v3591
  %v3593 = vand.u32 %v3057, 4294901760
  %v3594 = vsub.f32 %v3057, %v3593
  %3595 = vmatpush.msra.mxu0 %v3594
  %v3596 = vand.u32 %v3054, 4294901760
  %v3597 = vsub.f32 %v3054, %v3596
  %3598 = vmatpush.msra.mxu0 %v3597
  %v3599 = vand.u32 %v3051, 4294901760
  %v3600 = vsub.f32 %v3051, %v3599
  %3601 = vmatpush.msra.mxu0 %v3600
  %v3602 = vand.u32 %v3048, 4294901760
  %v3603 = vsub.f32 %v3048, %v3602
  %3604 = vmatpush.msra.mxu0 %v3603
  %v3605 = vand.u32 %v3045, 4294901760
  %v3606 = vsub.f32 %v3045, %v3605
  %3607 = vmatpush.msra.mxu0 %v3606
  %v3608 = vand.u32 %v3042, 4294901760
  %v3609 = vsub.f32 %v3042, %v3608
  %3610 = vmatpush.msra.mxu0 %v3609
  %v3611 = vand.u32 %v3039, 4294901760
  %v3612 = vsub.f32 %v3039, %v3611
  %3613 = vmatpush.msra.mxu0 %v3612
  %v3614 = vand.u32 %v3036, 4294901760
  %v3615 = vsub.f32 %v3036, %v3614
  %3616 = vmatpush.msra.mxu0 %v3615
  %v3617 = vand.u32 %v3083, 4294901760
  %v3618 = vsub.f32 %v3083, %v3617
  %3619 = vmatmul.f32.gmra.mxu0 %v3618
  %v3620 = vpop.f32.mrf.mxu0
  %v3621 = vadd.f32 %v3567, %v3620
  %3622 = vdwg.mxu0
  %v3623 = vand.u32 %v3081, 4294901760
  %3624 = vmatpush.msra.mxu0 %v3623
  %v3625 = vand.u32 %v3078, 4294901760
  %3626 = vmatpush.msra.mxu0 %v3625
  %v3627 = vand.u32 %v3075, 4294901760
  %3628 = vmatpush.msra.mxu0 %v3627
  %v3629 = vand.u32 %v3072, 4294901760
  %3630 = vmatpush.msra.mxu0 %v3629
  %v3631 = vand.u32 %v3069, 4294901760
  %3632 = vmatpush.msra.mxu0 %v3631
  %v3633 = vand.u32 %v3066, 4294901760
  %3634 = vmatpush.msra.mxu0 %v3633
  %v3635 = vand.u32 %v3063, 4294901760
  %3636 = vmatpush.msra.mxu0 %v3635
  %v3637 = vand.u32 %v3060, 4294901760
  %3638 = vmatpush.msra.mxu0 %v3637
  %v3639 = vand.u32 %v3057, 4294901760
  %3640 = vmatpush.msra.mxu0 %v3639
  %v3641 = vand.u32 %v3054, 4294901760
  %3642 = vmatpush.msra.mxu0 %v3641
  %v3643 = vand.u32 %v3051, 4294901760
  %3644 = vmatpush.msra.mxu0 %v3643
  %v3645 = vand.u32 %v3048, 4294901760
  %3646 = vmatpush.msra.mxu0 %v3645
  %v3647 = vand.u32 %v3045, 4294901760
  %3648 = vmatpush.msra.mxu0 %v3647
  %v3649 = vand.u32 %v3042, 4294901760
  %3650 = vmatpush.msra.mxu0 %v3649
  %v3651 = vand.u32 %v3039, 4294901760
  %3652 = vmatpush.msra.mxu0 %v3651
  %v3653 = vand.u32 %v3036, 4294901760
  %3654 = vmatpush.msra.mxu0 %v3653
  %v3655 = vand.u32 %v3083, 4294901760
  %v3656 = vsub.f32 %v3083, %v3655
  %v3657 = vand.u32 %v3656, 4294901760
  %3658 = vmatmul.f32.gmra.mxu0 %v3657
  %v3659 = vpop.f32.mrf.mxu0
  %v3660 = vadd.f32 %v3621, %v3659
  %3661 = vdwg.mxu0
  %v3662 = vand.u32 %v3081, 4294901760
  %v3663 = vsub.f32 %v3081, %v3662
  %v3664 = vand.u32 %v3663, 4294901760
  %3665 = vmatpush.msra.mxu0 %v3664
  %v3666 = vand.u32 %v3078, 4294901760
  %v3667 = vsub.f32 %v3078, %v3666
  %v3668 = vand.u32 %v3667, 4294901760
  %3669 = vmatpush.msra.mxu0 %v3668
  %v3670 = vand.u32 %v3075, 4294901760
  %v3671 = vsub.f32 %v3075, %v3670
  %v3672 = vand.u32 %v3671, 4294901760
  %3673 = vmatpush.msra.mxu0 %v3672
  %v3674 = vand.u32 %v3072, 4294901760
  %v3675 = vsub.f32 %v3072, %v3674
  %v3676 = vand.u32 %v3675, 4294901760
  %3677 = vmatpush.msra.mxu0 %v3676
  %v3678 = vand.u32 %v3069, 4294901760
  %v3679 = vsub.f32 %v3069, %v3678
  %v3680 = vand.u32 %v3679, 4294901760
  %3681 = vmatpush.msra.mxu0 %v3680
  %v3682 = vand.u32 %v3066, 4294901760
  %v3683 = vsub.f32 %v3066, %v3682
  %v3684 = vand.u32 %v3683, 4294901760
  %3685 = vmatpush.msra.mxu0 %v3684
  %v3686 = vand.u32 %v3063, 4294901760
  %v3687 = vsub.f32 %v3063, %v3686
  %v3688 = vand.u32 %v3687, 4294901760
  %3689 = vmatpush.msra.mxu0 %v3688
  %v3690 = vand.u32 %v3060, 4294901760
  %v3691 = vsub.f32 %v3060, %v3690
  %v3692 = vand.u32 %v3691, 4294901760
  %3693 = vmatpush.msra.mxu0 %v3692
  %v3694 = vand.u32 %v3057, 4294901760
  %v3695 = vsub.f32 %v3057, %v3694
  %v3696 = vand.u32 %v3695, 4294901760
  %3697 = vmatpush.msra.mxu0 %v3696
  %v3698 = vand.u32 %v3054, 4294901760
  %v3699 = vsub.f32 %v3054, %v3698
  %v3700 = vand.u32 %v3699, 4294901760
  %3701 = vmatpush.msra.mxu0 %v3700
  %v3702 = vand.u32 %v3051, 4294901760
  %v3703 = vsub.f32 %v3051, %v3702
  %v3704 = vand.u32 %v3703, 4294901760
  %3705 = vmatpush.msra.mxu0 %v3704
  %v3706 = vand.u32 %v3048, 4294901760
  %v3707 = vsub.f32 %v3048, %v3706
  %v3708 = vand.u32 %v3707, 4294901760
  %3709 = vmatpush.msra.mxu0 %v3708
  %v3710 = vand.u32 %v3045, 4294901760
  %v3711 = vsub.f32 %v3045, %v3710
  %v3712 = vand.u32 %v3711, 4294901760
  %3713 = vmatpush.msra.mxu0 %v3712
  %v3714 = vand.u32 %v3042, 4294901760
  %v3715 = vsub.f32 %v3042, %v3714
  %v3716 = vand.u32 %v3715, 4294901760
  %3717 = vmatpush.msra.mxu0 %v3716
  %v3718 = vand.u32 %v3039, 4294901760
  %v3719 = vsub.f32 %v3039, %v3718
  %v3720 = vand.u32 %v3719, 4294901760
  %3721 = vmatpush.msra.mxu0 %v3720
  %v3722 = vand.u32 %v3036, 4294901760
  %v3723 = vsub.f32 %v3036, %v3722
  %v3724 = vand.u32 %v3723, 4294901760
  %3725 = vmatpush.msra.mxu0 %v3724
  %v3726 = vand.u32 %v3083, 4294901760
  %3727 = vmatmul.f32.gmra.mxu0 %v3726
  %v3728 = vpop.f32.mrf.mxu0
  %v3729 = vadd.f32 %v3660, %v3728
  %3730 = vdwg.mxu0
  %v3731 = vand.u32 %v3081, 4294901760
  %3732 = vmatpush.msra.mxu0 %v3731
  %v3733 = vand.u32 %v3078, 4294901760
  %3734 = vmatpush.msra.mxu0 %v3733
  %v3735 = vand.u32 %v3075, 4294901760
  %3736 = vmatpush.msra.mxu0 %v3735
  %v3737 = vand.u32 %v3072, 4294901760
  %3738 = vmatpush.msra.mxu0 %v3737
  %v3739 = vand.u32 %v3069, 4294901760
  %3740 = vmatpush.msra.mxu0 %v3739
  %v3741 = vand.u32 %v3066, 4294901760
  %3742 = vmatpush.msra.mxu0 %v3741
  %v3743 = vand.u32 %v3063, 4294901760
  %3744 = vmatpush.msra.mxu0 %v3743
  %v3745 = vand.u32 %v3060, 4294901760
  %3746 = vmatpush.msra.mxu0 %v3745
  %v3747 = vand.u32 %v3057, 4294901760
  %3748 = vmatpush.msra.mxu0 %v3747
  %v3749 = vand.u32 %v3054, 4294901760
  %3750 = vmatpush.msra.mxu0 %v3749
  %v3751 = vand.u32 %v3051, 4294901760
  %3752 = vmatpush.msra.mxu0 %v3751
  %v3753 = vand.u32 %v3048, 4294901760
  %3754 = vmatpush.msra.mxu0 %v3753
  %v3755 = vand.u32 %v3045, 4294901760
  %3756 = vmatpush.msra.mxu0 %v3755
  %v3757 = vand.u32 %v3042, 4294901760
  %3758 = vmatpush.msra.mxu0 %v3757
  %v3759 = vand.u32 %v3039, 4294901760
  %3760 = vmatpush.msra.mxu0 %v3759
  %v3761 = vand.u32 %v3036, 4294901760
  %3762 = vmatpush.msra.mxu0 %v3761
  %v3763 = vand.u32 %v3083, 4294901760
  %3764 = vmatmul.f32.gmra.mxu0 %v3763
  %v3765 = vpop.f32.mrf.mxu0
  %v3766 = vadd.f32 %v3729, %v3765
  %3767 = vdwg.mxu0
  %v3768 = vand.u32 %v3082, 4294901760
  %3769 = vmatpush.msra.mxu0 %v3768
  %v3770 = vand.u32 %v3079, 4294901760
  %3771 = vmatpush.msra.mxu0 %v3770
  %v3772 = vand.u32 %v3076, 4294901760
  %3773 = vmatpush.msra.mxu0 %v3772
  %v3774 = vand.u32 %v3073, 4294901760
  %3775 = vmatpush.msra.mxu0 %v3774
  %v3776 = vand.u32 %v3070, 4294901760
  %3777 = vmatpush.msra.mxu0 %v3776
  %v3778 = vand.u32 %v3067, 4294901760
  %3779 = vmatpush.msra.mxu0 %v3778
  %v3780 = vand.u32 %v3064, 4294901760
  %3781 = vmatpush.msra.mxu0 %v3780
  %v3782 = vand.u32 %v3061, 4294901760
  %3783 = vmatpush.msra.mxu0 %v3782
  %v3784 = vand.u32 %v3058, 4294901760
  %3785 = vmatpush.msra.mxu0 %v3784
  %v3786 = vand.u32 %v3055, 4294901760
  %3787 = vmatpush.msra.mxu0 %v3786
  %v3788 = vand.u32 %v3052, 4294901760
  %3789 = vmatpush.msra.mxu0 %v3788
  %v3790 = vand.u32 %v3049, 4294901760
  %3791 = vmatpush.msra.mxu0 %v3790
  %v3792 = vand.u32 %v3046, 4294901760
  %3793 = vmatpush.msra.mxu0 %v3792
  %v3794 = vand.u32 %v3043, 4294901760
  %3795 = vmatpush.msra.mxu0 %v3794
  %v3796 = vand.u32 %v3040, 4294901760
  %3797 = vmatpush.msra.mxu0 %v3796
  %v3798 = vand.u32 %v3037, 4294901760
  %3799 = vmatpush.msra.mxu0 %v3798
  %v3800 = vand.u32 %v3083, 4294901760
  %v3801 = vsub.f32 %v3083, %v3800
  %v3802 = vand.u32 %v3801, 4294901760
  %v3803 = vsub.f32 %v3801, %v3802
  %v3804 = vand.u32 %v3803, 4294901760
  %3805 = vmatmul.f32.gmra.mxu0 %v3804
  %v3806 = vpop.f32.mrf.mxu0
  %v3807 = vadd.f32 %v3085, %v3806
  %3808 = vdwg.mxu0
  %v3809 = vand.u32 %v3082, 4294901760
  %v3810 = vsub.f32 %v3082, %v3809
  %v3811 = vand.u32 %v3810, 4294901760
  %v3812 = vsub.f32 %v3810, %v3811
  %v3813 = vand.u32 %v3812, 4294901760
  %3814 = vmatpush.msra.mxu0 %v3813
  %v3815 = vand.u32 %v3079, 4294901760
  %v3816 = vsub.f32 %v3079, %v3815
  %v3817 = vand.u32 %v3816, 4294901760
  %v3818 = vsub.f32 %v3816, %v3817
  %v3819 = vand.u32 %v3818, 4294901760
  %3820 = vmatpush.msra.mxu0 %v3819
  %v3821 = vand.u32 %v3076, 4294901760
  %v3822 = vsub.f32 %v3076, %v3821
  %v3823 = vand.u32 %v3822, 4294901760
  %v3824 = vsub.f32 %v3822, %v3823
  %v3825 = vand.u32 %v3824, 4294901760
  %3826 = vmatpush.msra.mxu0 %v3825
  %v3827 = vand.u32 %v3073, 4294901760
  %v3828 = vsub.f32 %v3073, %v3827
  %v3829 = vand.u32 %v3828, 4294901760
  %v3830 = vsub.f32 %v3828, %v3829
  %v3831 = vand.u32 %v3830, 4294901760
  %3832 = vmatpush.msra.mxu0 %v3831
  %v3833 = vand.u32 %v3070, 4294901760
  %v3834 = vsub.f32 %v3070, %v3833
  %v3835 = vand.u32 %v3834, 4294901760
  %v3836 = vsub.f32 %v3834, %v3835
  %v3837 = vand.u32 %v3836, 4294901760
  %3838 = vmatpush.msra.mxu0 %v3837
  %v3839 = vand.u32 %v3067, 4294901760
  %v3840 = vsub.f32 %v3067, %v3839
  %v3841 = vand.u32 %v3840, 4294901760
  %v3842 = vsub.f32 %v3840, %v3841
  %v3843 = vand.u32 %v3842, 4294901760
  %3844 = vmatpush.msra.mxu0 %v3843
  %v3845 = vand.u32 %v3064, 4294901760
  %v3846 = vsub.f32 %v3064, %v3845
  %v3847 = vand.u32 %v3846, 4294901760
  %v3848 = vsub.f32 %v3846, %v3847
  %v3849 = vand.u32 %v3848, 4294901760
  %3850 = vmatpush.msra.mxu0 %v3849
  %v3851 = vand.u32 %v3061, 4294901760
  %v3852 = vsub.f32 %v3061, %v3851
  %v3853 = vand.u32 %v3852, 4294901760
  %v3854 = vsub.f32 %v3852, %v3853
  %v3855 = vand.u32 %v3854, 4294901760
  %3856 = vmatpush.msra.mxu0 %v3855
  %v3857 = vand.u32 %v3058, 4294901760
  %v3858 = vsub.f32 %v3058, %v3857
  %v3859 = vand.u32 %v3858, 4294901760
  %v3860 = vsub.f32 %v3858, %v3859
  %v3861 = vand.u32 %v3860, 4294901760
  %3862 = vmatpush.msra.mxu0 %v3861
  %v3863 = vand.u32 %v3055, 4294901760
  %v3864 = vsub.f32 %v3055, %v3863
  %v3865 = vand.u32 %v3864, 4294901760
  %v3866 = vsub.f32 %v3864, %v3865
  %v3867 = vand.u32 %v3866, 4294901760
  %3868 = vmatpush.msra.mxu0 %v3867
  %v3869 = vand.u32 %v3052, 4294901760
  %v3870 = vsub.f32 %v3052, %v3869
  %v3871 = vand.u32 %v3870, 4294901760
  %v3872 = vsub.f32 %v3870, %v3871
  %v3873 = vand.u32 %v3872, 4294901760
  %3874 = vmatpush.msra.mxu0 %v3873
  %v3875 = vand.u32 %v3049, 4294901760
  %v3876 = vsub.f32 %v3049, %v3875
  %v3877 = vand.u32 %v3876, 4294901760
  %v3878 = vsub.f32 %v3876, %v3877
  %v3879 = vand.u32 %v3878, 4294901760
  %3880 = vmatpush.msra.mxu0 %v3879
  %v3881 = vand.u32 %v3046, 4294901760
  %v3882 = vsub.f32 %v3046, %v3881
  %v3883 = vand.u32 %v3882, 4294901760
  %v3884 = vsub.f32 %v3882, %v3883
  %v3885 = vand.u32 %v3884, 4294901760
  %3886 = vmatpush.msra.mxu0 %v3885
  %v3887 = vand.u32 %v3043, 4294901760
  %v3888 = vsub.f32 %v3043, %v3887
  %v3889 = vand.u32 %v3888, 4294901760
  %v3890 = vsub.f32 %v3888, %v3889
  %v3891 = vand.u32 %v3890, 4294901760
  %3892 = vmatpush.msra.mxu0 %v3891
  %v3893 = vand.u32 %v3040, 4294901760
  %v3894 = vsub.f32 %v3040, %v3893
  %v3895 = vand.u32 %v3894, 4294901760
  %v3896 = vsub.f32 %v3894, %v3895
  %v3897 = vand.u32 %v3896, 4294901760
  %3898 = vmatpush.msra.mxu0 %v3897
  %v3899 = vand.u32 %v3037, 4294901760
  %v3900 = vsub.f32 %v3037, %v3899
  %v3901 = vand.u32 %v3900, 4294901760
  %v3902 = vsub.f32 %v3900, %v3901
  %v3903 = vand.u32 %v3902, 4294901760
  %3904 = vmatpush.msra.mxu0 %v3903
  %v3905 = vand.u32 %v3083, 4294901760
  %3906 = vmatmul.f32.gmra.mxu0 %v3905
  %v3907 = vpop.f32.mrf.mxu0
  %v3908 = vadd.f32 %v3807, %v3907
  %3909 = vdwg.mxu0
  %v3910 = vand.u32 %v3082, 4294901760
  %v3911 = vsub.f32 %v3082, %v3910
  %3912 = vmatpush.msra.mxu0 %v3911
  %v3913 = vand.u32 %v3079, 4294901760
  %v3914 = vsub.f32 %v3079, %v3913
  %3915 = vmatpush.msra.mxu0 %v3914
  %v3916 = vand.u32 %v3076, 4294901760
  %v3917 = vsub.f32 %v3076, %v3916
  %3918 = vmatpush.msra.mxu0 %v3917
  %v3919 = vand.u32 %v3073, 4294901760
  %v3920 = vsub.f32 %v3073, %v3919
  %3921 = vmatpush.msra.mxu0 %v3920
  %v3922 = vand.u32 %v3070, 4294901760
  %v3923 = vsub.f32 %v3070, %v3922
  %3924 = vmatpush.msra.mxu0 %v3923
  %v3925 = vand.u32 %v3067, 4294901760
  %v3926 = vsub.f32 %v3067, %v3925
  %3927 = vmatpush.msra.mxu0 %v3926
  %v3928 = vand.u32 %v3064, 4294901760
  %v3929 = vsub.f32 %v3064, %v3928
  %3930 = vmatpush.msra.mxu0 %v3929
  %v3931 = vand.u32 %v3061, 4294901760
  %v3932 = vsub.f32 %v3061, %v3931
  %3933 = vmatpush.msra.mxu0 %v3932
  %v3934 = vand.u32 %v3058, 4294901760
  %v3935 = vsub.f32 %v3058, %v3934
  %3936 = vmatpush.msra.mxu0 %v3935
  %v3937 = vand.u32 %v3055, 4294901760
  %v3938 = vsub.f32 %v3055, %v3937
  %3939 = vmatpush.msra.mxu0 %v3938
  %v3940 = vand.u32 %v3052, 4294901760
  %v3941 = vsub.f32 %v3052, %v3940
  %3942 = vmatpush.msra.mxu0 %v3941
  %v3943 = vand.u32 %v3049, 4294901760
  %v3944 = vsub.f32 %v3049, %v3943
  %3945 = vmatpush.msra.mxu0 %v3944
  %v3946 = vand.u32 %v3046, 4294901760
  %v3947 = vsub.f32 %v3046, %v3946
  %3948 = vmatpush.msra.mxu0 %v3947
  %v3949 = vand.u32 %v3043, 4294901760
  %v3950 = vsub.f32 %v3043, %v3949
  %3951 = vmatpush.msra.mxu0 %v3950
  %v3952 = vand.u32 %v3040, 4294901760
  %v3953 = vsub.f32 %v3040, %v3952
  %3954 = vmatpush.msra.mxu0 %v3953
  %v3955 = vand.u32 %v3037, 4294901760
  %v3956 = vsub.f32 %v3037, %v3955
  %3957 = vmatpush.msra.mxu0 %v3956
  %v3958 = vand.u32 %v3083, 4294901760
  %v3959 = vsub.f32 %v3083, %v3958
  %3960 = vmatmul.f32.gmra.mxu0 %v3959
  %v3961 = vpop.f32.mrf.mxu0
  %v3962 = vadd.f32 %v3908, %v3961
  %3963 = vdwg.mxu0
  %v3964 = vand.u32 %v3082, 4294901760
  %3965 = vmatpush.msra.mxu0 %v3964
  %v3966 = vand.u32 %v3079, 4294901760
  %3967 = vmatpush.msra.mxu0 %v3966
  %v3968 = vand.u32 %v3076, 4294901760
  %3969 = vmatpush.msra.mxu0 %v3968
  %v3970 = vand.u32 %v3073, 4294901760
  %3971 = vmatpush.msra.mxu0 %v3970
  %v3972 = vand.u32 %v3070, 4294901760
  %3973 = vmatpush.msra.mxu0 %v3972
  %v3974 = vand.u32 %v3067, 4294901760
  %3975 = vmatpush.msra.mxu0 %v3974
  %v3976 = vand.u32 %v3064, 4294901760
  %3977 = vmatpush.msra.mxu0 %v3976
  %v3978 = vand.u32 %v3061, 4294901760
  %3979 = vmatpush.msra.mxu0 %v3978
  %v3980 = vand.u32 %v3058, 4294901760
  %3981 = vmatpush.msra.mxu0 %v3980
  %v3982 = vand.u32 %v3055, 4294901760
  %3983 = vmatpush.msra.mxu0 %v3982
  %v3984 = vand.u32 %v3052, 4294901760
  %3985 = vmatpush.msra.mxu0 %v3984
  %v3986 = vand.u32 %v3049, 4294901760
  %3987 = vmatpush.msra.mxu0 %v3986
  %v3988 = vand.u32 %v3046, 4294901760
  %3989 = vmatpush.msra.mxu0 %v3988
  %v3990 = vand.u32 %v3043, 4294901760
  %3991 = vmatpush.msra.mxu0 %v3990
  %v3992 = vand.u32 %v3040, 4294901760
  %3993 = vmatpush.msra.mxu0 %v3992
  %v3994 = vand.u32 %v3037, 4294901760
  %3995 = vmatpush.msra.mxu0 %v3994
  %v3996 = vand.u32 %v3083, 4294901760
  %v3997 = vsub.f32 %v3083, %v3996
  %v3998 = vand.u32 %v3997, 4294901760
  %3999 = vmatmul.f32.gmra.mxu0 %v3998
  %v4000 = vpop.f32.mrf.mxu0
  %v4001 = vadd.f32 %v3962, %v4000
  %4002 = vdwg.mxu0
  %v4003 = vand.u32 %v3082, 4294901760
  %v4004 = vsub.f32 %v3082, %v4003
  %v4005 = vand.u32 %v4004, 4294901760
  %4006 = vmatpush.msra.mxu0 %v4005
  %v4007 = vand.u32 %v3079, 4294901760
  %v4008 = vsub.f32 %v3079, %v4007
  %v4009 = vand.u32 %v4008, 4294901760
  %4010 = vmatpush.msra.mxu0 %v4009
  %v4011 = vand.u32 %v3076, 4294901760
  %v4012 = vsub.f32 %v3076, %v4011
  %v4013 = vand.u32 %v4012, 4294901760
  %4014 = vmatpush.msra.mxu0 %v4013
  %v4015 = vand.u32 %v3073, 4294901760
  %v4016 = vsub.f32 %v3073, %v4015
  %v4017 = vand.u32 %v4016, 4294901760
  %4018 = vmatpush.msra.mxu0 %v4017
  %v4019 = vand.u32 %v3070, 4294901760
  %v4020 = vsub.f32 %v3070, %v4019
  %v4021 = vand.u32 %v4020, 4294901760
  %4022 = vmatpush.msra.mxu0 %v4021
  %v4023 = vand.u32 %v3067, 4294901760
  %v4024 = vsub.f32 %v3067, %v4023
  %v4025 = vand.u32 %v4024, 4294901760
  %4026 = vmatpush.msra.mxu0 %v4025
  %v4027 = vand.u32 %v3064, 4294901760
  %v4028 = vsub.f32 %v3064, %v4027
  %v4029 = vand.u32 %v4028, 4294901760
  %4030 = vmatpush.msra.mxu0 %v4029
  %v4031 = vand.u32 %v3061, 4294901760
  %v4032 = vsub.f32 %v3061, %v4031
  %v4033 = vand.u32 %v4032, 4294901760
  %4034 = vmatpush.msra.mxu0 %v4033
  %v4035 = vand.u32 %v3058, 4294901760
  %v4036 = vsub.f32 %v3058, %v4035
  %v4037 = vand.u32 %v4036, 4294901760
  %4038 = vmatpush.msra.mxu0 %v4037
  %v4039 = vand.u32 %v3055, 4294901760
  %v4040 = vsub.f32 %v3055, %v4039
  %v4041 = vand.u32 %v4040, 4294901760
  %4042 = vmatpush.msra.mxu0 %v4041
  %v4043 = vand.u32 %v3052, 4294901760
  %v4044 = vsub.f32 %v3052, %v4043
  %v4045 = vand.u32 %v4044, 4294901760
  %4046 = vmatpush.msra.mxu0 %v4045
  %v4047 = vand.u32 %v3049, 4294901760
  %v4048 = vsub.f32 %v3049, %v4047
  %v4049 = vand.u32 %v4048, 4294901760
  %4050 = vmatpush.msra.mxu0 %v4049
  %v4051 = vand.u32 %v3046, 4294901760
  %v4052 = vsub.f32 %v3046, %v4051
  %v4053 = vand.u32 %v4052, 4294901760
  %4054 = vmatpush.msra.mxu0 %v4053
  %v4055 = vand.u32 %v3043, 4294901760
  %v4056 = vsub.f32 %v3043, %v4055
  %v4057 = vand.u32 %v4056, 4294901760
  %4058 = vmatpush.msra.mxu0 %v4057
  %v4059 = vand.u32 %v3040, 4294901760
  %v4060 = vsub.f32 %v3040, %v4059
  %v4061 = vand.u32 %v4060, 4294901760
  %4062 = vmatpush.msra.mxu0 %v4061
  %v4063 = vand.u32 %v3037, 4294901760
  %v4064 = vsub.f32 %v3037, %v4063
  %v4065 = vand.u32 %v4064, 4294901760
  %4066 = vmatpush.msra.mxu0 %v4065
  %v4067 = vand.u32 %v3083, 4294901760
  %4068 = vmatmul.f32.gmra.mxu0 %v4067
  %v4069 = vpop.f32.mrf.mxu0
  %v4070 = vadd.f32 %v4001, %v4069
  %4071 = vdwg.mxu0
  %v4072 = vand.u32 %v3082, 4294901760
  %4073 = vmatpush.msra.mxu0 %v4072
  %v4074 = vand.u32 %v3079, 4294901760
  %4075 = vmatpush.msra.mxu0 %v4074
  %v4076 = vand.u32 %v3076, 4294901760
  %4077 = vmatpush.msra.mxu0 %v4076
  %v4078 = vand.u32 %v3073, 4294901760
  %4079 = vmatpush.msra.mxu0 %v4078
  %v4080 = vand.u32 %v3070, 4294901760
  %4081 = vmatpush.msra.mxu0 %v4080
  %v4082 = vand.u32 %v3067, 4294901760
  %4083 = vmatpush.msra.mxu0 %v4082
  %v4084 = vand.u32 %v3064, 4294901760
  %4085 = vmatpush.msra.mxu0 %v4084
  %v4086 = vand.u32 %v3061, 4294901760
  %4087 = vmatpush.msra.mxu0 %v4086
  %v4088 = vand.u32 %v3058, 4294901760
  %4089 = vmatpush.msra.mxu0 %v4088
  %v4090 = vand.u32 %v3055, 4294901760
  %4091 = vmatpush.msra.mxu0 %v4090
  %v4092 = vand.u32 %v3052, 4294901760
  %4093 = vmatpush.msra.mxu0 %v4092
  %v4094 = vand.u32 %v3049, 4294901760
  %4095 = vmatpush.msra.mxu0 %v4094
  %v4096 = vand.u32 %v3046, 4294901760
  %4097 = vmatpush.msra.mxu0 %v4096
  %v4098 = vand.u32 %v3043, 4294901760
  %4099 = vmatpush.msra.mxu0 %v4098
  %v4100 = vand.u32 %v3040, 4294901760
  %4101 = vmatpush.msra.mxu0 %v4100
  %v4102 = vand.u32 %v3037, 4294901760
  %4103 = vmatpush.msra.mxu0 %v4102
  %v4104 = vand.u32 %v3083, 4294901760
  %4105 = vmatmul.f32.gmra.mxu0 %v4104
  %v4106 = vpop.f32.mrf.mxu0
  %v4107 = vadd.f32 %v4070, %v4106
  %4108 = vdwg.mxu0
  %v4112 = vrot.slane %v3766, 7
  %v4113 = vrot.slane %v4107, 6
  %vm4114 = vcmask 1040384
  %v4115 = vsel %vm4114, %v3425, %v4112
  %vm4116 = vcmask 1041408
  %v4117 = vsel %vm4116, %v4115, %v4113
  %v4119 = vlaneseq
  %vm4120 = vcmp.ge.s32.totalorder %v4119, 0
  %vm4121 = vcmp.lt.s32.totalorder %v4119, 384
  %vm4122 = vmand %vm4120, %vm4121
  %4123 = vst.msk [vmem:[%s9] sm:$0x7] %vm4122, %v4117
  // Predicated region
  $region38: #{mynetwork_forward.1} parent=0 // pred_check
    _
  $region39: #{mynetwork_forward.1} parent=0 // pred_check_branch
    %4125 = sbr.rel (0) target = $region41
  $region40: #{mynetwork_forward.1} parent=0 // pred_region
    _
  $region41: #{mynetwork_forward.1} parent=0 // pred_fallthru
    _
  // Predicated region
  $region42: #{mynetwork_forward.1} parent=0 // pred_check
    _
  $region43: #{mynetwork_forward.1} parent=0 // pred_check_branch
    %4127 = sbr.rel (0) target = $region45
  $region44: #{mynetwork_forward.1} parent=0 // pred_region
    _
  $region45: #{mynetwork_forward.1} parent=0 // pred_fallthru
    _

</llo_original>
